<compile_context>
chip_gen: v7x
topology: tpu7x:2x2x1
jax: 0.10.0
libtpu: 0.0.40
codegen_flags: <defaults>
</compile_context>

<pallas_src>
import functools

import jax
import jax.numpy as jnp
from jax.experimental import pallas as pl
from jax.experimental.pallas import tpu as pltpu


# ---------------------------------------------------------------------------
# Kernel A: 2x2 / stride-2 convolution as a single space-to-depth GEMM.
# ---------------------------------------------------------------------------
def _s2d_conv2x2_kernel(x_ref, w_ref, b_ref, o_ref):
    # x_ref: (tm, 4*Cin) bf16   w_ref: (4*Cin, Cout) bf16   b_ref: (1, Cout) f32
    acc = jnp.dot(x_ref[...], w_ref[...], preferred_element_type=jnp.float32)
    o_ref[...] = (acc + b_ref[...]).astype(o_ref.dtype)


def downsample_conv2x2(x_nchw, w, b, *, out_dtype=jnp.bfloat16):
    """2x2 conv, stride 2.  x: (N, Cin, H, W) NCHW, w: (2, 2, Cin, Cout) HWIO.

    Returns (N, Ho, Wo, Cout) NHWC in `out_dtype`.
    """
    N, Cin, H, W = x_nchw.shape
    Cout = w.shape[-1]
    Ho, Wo = H // 2, W // 2
    M = N * Ho * Wo

    # Fold NCHW->NHWC and the 2x2/s2 space-to-depth into ONE wrapper transpose,
    # K ordered (kh, kw, cin) to match the HWIO weight reshape below.
    x6 = x_nchw.reshape(N, Cin, Ho, 2, Wo, 2)
    xs2d = jnp.transpose(x6, (0, 2, 4, 3, 5, 1)).reshape(M, 4 * Cin)
    xs2d = xs2d.astype(jnp.bfloat16)
    w2 = w.reshape(4 * Cin, Cout).astype(jnp.bfloat16)
    b2 = b.reshape(1, Cout).astype(jnp.float32)

    # One grid step at small M; tile M (multiple of 8) once it gets large.
    if M <= 1024:
        tm = M
    else:
        tm = next((t for t in (1024, 512, 256, 128, 64, 32, 16, 8)
                   if M % t == 0), M)

    out = pl.pallas_call(
        _s2d_conv2x2_kernel,
        grid=(M // tm,),
        out_shape=jax.ShapeDtypeStruct((M, Cout), out_dtype),
        in_specs=[
            pl.BlockSpec((tm, 4 * Cin), lambda i: (i, 0)),
            pl.BlockSpec((4 * Cin, Cout), lambda i: (0, 0)),
            pl.BlockSpec((1, Cout), lambda i: (0, 0)),
        ],
        out_specs=pl.BlockSpec((tm, Cout), lambda i: (i, 0)),
        compiler_params=pltpu.CompilerParams(dimension_semantics=("parallel",)),
    )(xs2d, w2, b2)
    return out.reshape(N, Ho, Wo, Cout)


# ---------------------------------------------------------------------------
# Kernel B: fused GroupNorm -> SiLU -> 3x3 conv (pad=1) [+ residual], bias fused.
# ---------------------------------------------------------------------------
def _gn_silu_conv3x3_kernel(*refs, inv_cnt, eps, has_residual):
    if has_residual:
        (x_ref, gamma_ref, beta_ref, bmat_ref, w_ref, b_ref, res_ref,
         o_ref, win_ref) = refs
    else:
        (x_ref, gamma_ref, beta_ref, bmat_ref, w_ref, b_ref,
         o_ref, win_ref) = refs
        res_ref = None

    _, H, W, C = x_ref.shape
    Cout = o_ref.shape[-1]
    HW = H * W

    # ---- GroupNorm statistics: numerically-safe two-pass, f32 accumulation --
    x = x_ref[0].astype(jnp.float32).reshape(HW, C)
    s1 = jnp.sum(x, axis=0, keepdims=True)                           # (1, C)
    # bmat[c, c'] = 1 iff c and c' share a group: one matmul both sums within
    # a group and broadcasts the per-group value back to every channel.
    mean_c = jnp.dot(s1.astype(jnp.bfloat16), bmat_ref[...],
                     preferred_element_type=jnp.float32) * inv_cnt
    xc = x - mean_c
    css = jnp.sum(xc * xc, axis=0, keepdims=True)                    # (1, C)
    var_c = jnp.dot(css.astype(jnp.bfloat16), bmat_ref[...],
                    preferred_element_type=jnp.float32) * inv_cnt
    rstd_c = jax.lax.rsqrt(var_c + eps)

    y = xc * (rstd_c * gamma_ref[...]) + beta_ref[...]
    y = (y * jax.nn.sigmoid(y)).astype(jnp.bfloat16).reshape(H, W, C)  # SiLU

    # ---- bf16 width-window scratch: win[h, w, dw*C:(dw+1)*C] = y[h, w+dw-1] --
    # The two zero H-halo rows are rewritten every step (cheap: 2 rows) so the
    # kernel stays correct under "parallel" megacore sharding of the grid axis.
    zrow = jnp.zeros((1, W, 3 * C), jnp.bfloat16)
    win_ref[0:1, :, :] = zrow
    win_ref[H + 1:H + 2, :, :] = zrow
    zcol = jnp.zeros((H, 1, C), jnp.bfloat16)
    win_ref[1:H + 1, :, C:2 * C] = y                        # dw = 1 (center)
    win_ref[1:H + 1, 0:1, 0:C] = zcol                       # dw = 0 (left W-pad)
    win_ref[1:H + 1, 1:W, 0:C] = y[:, :W - 1, :]
    win_ref[1:H + 1, W - 1:W, 2 * C:3 * C] = zcol           # dw = 2 (right W-pad)
    win_ref[1:H + 1, 0:W - 1, 2 * C:3 * C] = y[:, 1:, :]

    # ---- 3x3 conv = 3 GEMMs with K = 3*C over tile-aligned leading slices ----
    if res_ref is not None:                                 # fused skip add
        acc = res_ref[0].astype(jnp.float32).reshape(HW, Cout) + b_ref[...]
    else:
        acc = jnp.zeros((HW, Cout), jnp.float32) + b_ref[...]
    for dh in range(3):                                     # statically unrolled
        tap = win_ref[dh:dh + H, :, :].reshape(HW, 3 * C)   # bf16, aligned rows
        acc = acc + jnp.dot(tap, w_ref[dh], preferred_element_type=jnp.float32)
    o_ref[0] = acc.reshape(H, W, Cout).astype(o_ref.dtype)


def gn_silu_conv3x3(x, gamma, beta, w, b, *, groups, eps=1e-5, residual=None,
                    out_dtype=jnp.bfloat16):
    """Fused GroupNorm + SiLU + 3x3 conv (padding=1), optional fused residual.

    GroupNorm needs full-spatial statistics, so each grid step processes one
    full (H, W, C) sample; at these sizes that is well under VMEM.
    """
    N, H, W, C = x.shape
    Cout = w.shape[-1]
    Cg = C // groups
    ch_group = jnp.arange(C, dtype=jnp.int32) // Cg
    bmat = (ch_group[:, None] == ch_group[None, :]).astype(jnp.bfloat16)  # (C, C)
    w3 = w.reshape(3, 3 * C, Cout).astype(jnp.bfloat16)    # K ordered (kw, cin)

    kern = functools.partial(
        _gn_silu_conv3x3_kernel,
        inv_cnt=1.0 / float(H * W * Cg), eps=float(eps),
        has_residual=residual is not None)

    in_specs = [
        pl.BlockSpec((1, H, W, C), lambda n: (n, 0, 0, 0)),
        pl.BlockSpec((1, C), lambda n: (0, 0)),
        pl.BlockSpec((1, C), lambda n: (0, 0)),
        pl.BlockSpec((C, C), lambda n: (0, 0)),
        pl.BlockSpec((3, 3 * C, Cout), lambda n: (0, 0, 0)),
        pl.BlockSpec((1, Cout), lambda n: (0, 0)),
    ]
    args = [x.astype(jnp.bfloat16),
            gamma.reshape(1, C).astype(jnp.float32),
            beta.reshape(1, C).astype(jnp.float32),
            bmat, w3, b.reshape(1, Cout).astype(jnp.float32)]
    if residual is not None:
        in_specs.append(pl.BlockSpec((1, H, W, Cout), lambda n: (n, 0, 0, 0)))
        args.append(residual.astype(jnp.bfloat16))

    return pl.pallas_call(
        kern,
        grid=(N,),
        out_shape=jax.ShapeDtypeStruct((N, H, W, Cout), out_dtype),
        in_specs=in_specs,
        out_specs=pl.BlockSpec((1, H, W, Cout), lambda n: (n, 0, 0, 0)),
        scratch_shapes=[pltpu.VMEM((H + 2, W, 3 * C), jnp.bfloat16)],
        compiler_params=pltpu.CompilerParams(dimension_semantics=("parallel",)),
    )(*args)


# ---------------------------------------------------------------------------
# Module forward functions
# ---------------------------------------------------------------------------
def residual_block(p, x, *, groups, eps=1e-5):
    # TODO(synk): the time-embedding branch of the UNet ResidualBlock is not
    # exercised by DownSample.forward (it calls self.resnet(x) with no emb),
    # so it is omitted here.  Skip connection is identity (in == out channels).
    h = gn_silu_conv3x3(x, p["norm1_g"], p["norm1_b"], p["conv1_w"], p["conv1_b"],
                        groups=groups, eps=eps, residual=None,
                        out_dtype=jnp.bfloat16)
    return gn_silu_conv3x3(h, p["norm2_g"], p["norm2_b"], p["conv2_w"], p["conv2_b"],
                           groups=groups, eps=eps, residual=x,
                           out_dtype=jnp.float32)


def downsample_forward(params, x_nchw, *, sample_resnet, groups, eps=1e-5):
    """DownSample.forward: strided 2x2 conv, then (optionally) a ResidualBlock."""
    inter_dtype = jnp.bfloat16 if sample_resnet else jnp.float32
    x = downsample_conv2x2(x_nchw, params["down_w"], params["down_b"],
                           out_dtype=inter_dtype)
    if sample_resnet:
        x = residual_block(params["res"], x, groups=groups, eps=eps)
    return jnp.transpose(x, (0, 3, 1, 2)).astype(jnp.float32)


# ---------------------------------------------------------------------------
# Pure-JAX reference (used only to validate the Pallas kernels)
# ---------------------------------------------------------------------------
def _reference_forward(params, x_nchw, *, sample_resnet, groups, eps=1e-5):
    dn = ("NHWC", "HWIO", "NHWC")
    x = jnp.transpose(x_nchw, (0, 2, 3, 1)).astype(jnp.float32)
    y = jax.lax.conv_general_dilated(x, params["down_w"], (2, 2), "VALID",
                                     dimension_numbers=dn) + params["down_b"]
    if sample_resnet:
        p = params["res"]

        def gn_silu(h, g, b):
            n, hh, ww, c = h.shape
            hg = h.reshape(n, hh, ww, groups, c // groups)
            m = jnp.mean(hg, axis=(1, 2, 4), keepdims=True)
            v = jnp.mean((hg - m) ** 2, axis=(1, 2, 4), keepdims=True)
            hn = ((hg - m) / jnp.sqrt(v + eps)).reshape(n, hh, ww, c) * g + b
            return hn * jax.nn.sigmoid(hn)

        def conv3(h, w, b):
            return jax.lax.conv_general_dilated(h, w, (1, 1), "SAME",
                                                dimension_numbers=dn) + b

        h = conv3(gn_silu(y, p["norm1_g"], p["norm1_b"]), p["conv1_w"], p["conv1_b"])
        h = conv3(gn_silu(h, p["norm2_g"], p["norm2_b"]), p["conv2_w"], p["conv2_b"])
        y = y + h
    return jnp.transpose(y, (0, 3, 1, 2))


# ---------------------------------------------------------------------------
if __name__ == "__main__":
    N, IN_C, H, W = 2, 4, 16, 16
    OUT_C = 128           # lane-dense: every GEMM output keeps 128 channels on lanes
    GROUPS = 8

    key = jax.random.PRNGKey(0)
    k1, k2, k3, kx = jax.random.split(key, 4)
    params = {
        "down_w": 0.05 * jax.random.normal(k1, (2, 2, IN_C, OUT_C), jnp.float32),
        "down_b": 0.01 * jnp.ones((OUT_C,), jnp.float32),
        "res": {
            "norm1_g": jnp.ones((OUT_C,), jnp.float32),
            "norm1_b": jnp.zeros((OUT_C,), jnp.float32),
            "conv1_w": 0.05 * jax.random.normal(k2, (3, 3, OUT_C, OUT_C), jnp.float32),
            "conv1_b": 0.01 * jnp.ones((OUT_C,), jnp.float32),
            "norm2_g": jnp.ones((OUT_C,), jnp.float32),
            "norm2_b": jnp.zeros((OUT_C,), jnp.float32),
            "conv2_w": 0.05 * jax.random.normal(k3, (3, 3, OUT_C, OUT_C), jnp.float32),
            "conv2_b": 0.01 * jnp.ones((OUT_C,), jnp.float32),
        },
    }
    x = jax.random.normal(kx, (N, IN_C, H, W), jnp.float32)   # NCHW like PyTorch

    # DownSample(in=4, out=128, sample_resnet=True)
    fwd = jax.jit(functools.partial(downsample_forward,
                                    sample_resnet=True, groups=GROUPS))
    out = jax.block_until_ready(fwd(params, x))
    assert out.shape == (N, OUT_C, H // 2, W // 2) and out.dtype == jnp.float32
    assert bool(jnp.all(jnp.isfinite(out)))

    # DownSample(in=4, out=128)  (sample_resnet=False path)
    fwd0 = jax.jit(functools.partial(downsample_forward,
                                     sample_resnet=False, groups=GROUPS))
    out0 = jax.block_until_ready(fwd0(params, x))
    assert out0.shape == (N, OUT_C, H // 2, W // 2)

    # Validate against the pure-JAX f32 reference (kernels use bf16 MXU inputs
    # and bf16 inter-kernel activations, so tolerances are bf16-scale).
    ref = _reference_forward(params, x, sample_resnet=True, groups=GROUPS)
    assert float(jnp.max(jnp.abs(out - ref))) < 0.2
    ref0 = _reference_forward(params, x, sample_resnet=False, groups=GROUPS)
    assert float(jnp.max(jnp.abs(out0 - ref0))) < 0.05

    print("KERNEL_OK")
</pallas_src>

<mosaic_0001>
module attributes {stable_mosaic.version = 11 : i64} {
  func.func @_s2d_conv2x2_kernel(%arg0: i32, %arg1: memref<128x16xbf16, #tpu.memory_space<vmem>>, %arg2: memref<16x128xbf16, #tpu.memory_space<vmem>>, %arg3: memref<1x128xf32, #tpu.memory_space<vmem>>, %arg4: memref<128x128xbf16, #tpu.memory_space<vmem>>) attributes {dimension_semantics = [#tpu.dimension_semantics<parallel>], iteration_bounds = array<i64: 1>, scalar_prefetch = 0 : i64, scratch_operands = 0 : i64, tpu.core_type = #tpu.core_type<tc>, window_params = [{transform_indices = @transform_0, window_bounds = array<i64: 128, 16>}, {pipeline_mode = #tpu.pipeline_mode<synchronous>, transform_indices = @transform_1, window_bounds = array<i64: 16, 128>}, {pipeline_mode = #tpu.pipeline_mode<synchronous>, transform_indices = @transform_2, window_bounds = array<i64: 1, 128>}, {transform_indices = @transform_3, window_bounds = array<i64: 128, 128>}]} {
    %c0 = arith.constant 0 : index
    %c0_0 = arith.constant 0 : index
    %0 = vector.load %arg1[%c0, %c0_0] : memref<128x16xbf16, #tpu.memory_space<vmem>>, vector<128x16xbf16>
    %c0_1 = arith.constant 0 : index
    %c0_2 = arith.constant 0 : index
    %1 = vector.load %arg2[%c0_1, %c0_2] : memref<16x128xbf16, #tpu.memory_space<vmem>>, vector<16x128xbf16>
    %cst = arith.constant dense<0.000000e+00> : vector<128x128xf32>
    %2 = tpu.matmul %0, %1, %cst {dimension_numbers = #tpu.dot_dimension_numbers<[1], [0], [0], [1], [0, 0, 1, 1], [], []>} : vector<128x16xbf16>, vector<16x128xbf16>, vector<128x128xf32> -> vector<128x128xf32>
    %c0_3 = arith.constant 0 : index
    %c0_4 = arith.constant 0 : index
    %3 = vector.load %arg3[%c0_3, %c0_4] : memref<1x128xf32, #tpu.memory_space<vmem>>, vector<1x128xf32>
    %4 = vector.broadcast %3 : vector<1x128xf32> to vector<128x128xf32>
    %5 = arith.addf %2, %4 : vector<128x128xf32>
    %6 = arith.truncf %5 : vector<128x128xf32> to vector<128x128xbf16>
    %c0_5 = arith.constant 0 : index
    %c0_6 = arith.constant 0 : index
    %7 = vector.load %arg4[%c0_5, %c0_6] : memref<128x128xbf16, #tpu.memory_space<vmem>>, vector<128x128xbf16>
    tpu.vector_store %arg4[%c0_5, %c0_6], %6 {strides = array<i32>} : memref<128x128xbf16, #tpu.memory_space<vmem>>, vector<128x128xbf16>,
    return
  }
  func.func @transform_0(%arg0: i32) -> (i32, i32) {
    %c0_i32 = arith.constant 0 : i32
    %c0_i32_0 = arith.constant 0 : i32
    return %arg0, %c0_i32 : i32, i32
  }
  func.func @transform_1(%arg0: i32) -> (i32, i32) {
    %c0_i32 = arith.constant 0 : i32
    %c0_i32_0 = arith.constant 0 : i32
    %c0_i32_1 = arith.constant 0 : i32
    return %c0_i32, %c0_i32_0 : i32, i32
  }
  func.func @transform_2(%arg0: i32) -> (i32, i32) {
    %c0_i32 = arith.constant 0 : i32
    %c0_i32_0 = arith.constant 0 : i32
    %c0_i32_1 = arith.constant 0 : i32
    return %c0_i32, %c0_i32_0 : i32, i32
  }
  func.func @transform_3(%arg0: i32) -> (i32, i32) {
    %c0_i32 = arith.constant 0 : i32
    %c0_i32_0 = arith.constant 0 : i32
    return %arg0, %c0_i32 : i32, i32
  }
}

module attributes {stable_mosaic.version = 11 : i64} {
  func.func @_gn_silu_conv3x3_kernel(%arg0: i32, %arg1: memref<1x8x8x128xbf16, #tpu.memory_space<vmem>>, %arg2: memref<1x128xf32, #tpu.memory_space<vmem>>, %arg3: memref<1x128xf32, #tpu.memory_space<vmem>>, %arg4: memref<128x128xbf16, #tpu.memory_space<vmem>>, %arg5: memref<3x384x128xbf16, #tpu.memory_space<vmem>>, %arg6: memref<1x128xf32, #tpu.memory_space<vmem>>, %arg7: memref<1x8x8x128xbf16, #tpu.memory_space<vmem>>, %arg8: memref<10x8x384xbf16, #tpu.memory_space<vmem>>) attributes {dimension_semantics = [#tpu.dimension_semantics<parallel>], iteration_bounds = array<i64: 2>, scalar_prefetch = 0 : i64, scratch_operands = 1 : i64, tpu.core_type = #tpu.core_type<tc>, window_params = [{transform_indices = @transform_0, window_bounds = array<i64: 1, 8, 8, 128>}, {pipeline_mode = #tpu.pipeline_mode<synchronous>, transform_indices = @transform_1, window_bounds = array<i64: 1, 128>}, {pipeline_mode = #tpu.pipeline_mode<synchronous>, transform_indices = @transform_2, window_bounds = array<i64: 1, 128>}, {pipeline_mode = #tpu.pipeline_mode<synchronous>, transform_indices = @transform_3, window_bounds = array<i64: 128, 128>}, {pipeline_mode = #tpu.pipeline_mode<synchronous>, transform_indices = @transform_4, window_bounds = array<i64: 3, 384, 128>}, {pipeline_mode = #tpu.pipeline_mode<synchronous>, transform_indices = @transform_5, window_bounds = array<i64: 1, 128>}, {transform_indices = @transform_6, window_bounds = array<i64: 1, 8, 8, 128>}]} {
    %c0 = arith.constant 0 : index
    %c0_0 = arith.constant 0 : index
    %c0_1 = arith.constant 0 : index
    %c0_2 = arith.constant 0 : index
    %0 = vector.load %arg1[%c0, %c0_0, %c0_1, %c0_2] : memref<1x8x8x128xbf16, #tpu.memory_space<vmem>>, vector<1x8x8x128xbf16>
    %1 = vector.shape_cast %0 : vector<1x8x8x128xbf16> to vector<8x8x128xbf16>
    %2 = arith.extf %1 : vector<8x8x128xbf16> to vector<8x8x128xf32>
    %3 = vector.shape_cast %2 : vector<8x8x128xf32> to vector<64x128xf32>
    %cst = arith.constant dense<0.000000e+00> : vector<128xf32>
    %4 = vector.multi_reduction <add>, %3, %cst [0] : vector<64x128xf32> to vector<128xf32>
    %5 = vector.shape_cast %4 : vector<128xf32> to vector<1x128xf32>
    %6 = arith.truncf %5 : vector<1x128xf32> to vector<1x128xbf16>
    %c0_3 = arith.constant 0 : index
    %c0_4 = arith.constant 0 : index
    %7 = vector.load %arg4[%c0_3, %c0_4] : memref<128x128xbf16, #tpu.memory_space<vmem>>, vector<128x128xbf16>
    %cst_5 = arith.constant dense<0.000000e+00> : vector<1x128xf32>
    %8 = tpu.matmul %6, %7, %cst_5 {dimension_numbers = #tpu.dot_dimension_numbers<[1], [0], [0], [1], [0, 0, 1, 1], [], []>} : vector<1x128xbf16>, vector<128x128xbf16>, vector<1x128xf32> -> vector<1x128xf32>
    %cst_6 = arith.constant 9.765625E-4 : f32
    %9 = vector.broadcast %cst_6 : f32 to vector<1x128xf32>
    %10 = arith.mulf %8, %9 : vector<1x128xf32>
    %11 = vector.broadcast %10 : vector<1x128xf32> to vector<64x128xf32>
    %12 = arith.subf %3, %11 : vector<64x128xf32>
    %13 = arith.mulf %12, %12 : vector<64x128xf32>
    %cst_7 = arith.constant dense<0.000000e+00> : vector<128xf32>
    %14 = vector.multi_reduction <add>, %13, %cst_7 [0] : vector<64x128xf32> to vector<128xf32>
    %15 = vector.shape_cast %14 : vector<128xf32> to vector<1x128xf32>
    %16 = arith.truncf %15 : vector<1x128xf32> to vector<1x128xbf16>
    %c0_8 = arith.constant 0 : index
    %c0_9 = arith.constant 0 : index
    %17 = vector.load %arg4[%c0_8, %c0_9] : memref<128x128xbf16, #tpu.memory_space<vmem>>, vector<128x128xbf16>
    %cst_10 = arith.constant dense<0.000000e+00> : vector<1x128xf32>
    %18 = tpu.matmul %16, %17, %cst_10 {dimension_numbers = #tpu.dot_dimension_numbers<[1], [0], [0], [1], [0, 0, 1, 1], [], []>} : vector<1x128xbf16>, vector<128x128xbf16>, vector<1x128xf32> -> vector<1x128xf32>
    %cst_11 = arith.constant 9.765625E-4 : f32
    %19 = vector.broadcast %cst_11 : f32 to vector<1x128xf32>
    %20 = arith.mulf %18, %19 : vector<1x128xf32>
    %cst_12 = arith.constant 9.99999974E-6 : f32
    %21 = vector.broadcast %cst_12 : f32 to vector<1x128xf32>
    %22 = arith.addf %20, %21 : vector<1x128xf32>
    %23 = math.rsqrt %22 : vector<1x128xf32>
    %c0_13 = arith.constant 0 : index
    %c0_14 = arith.constant 0 : index
    %24 = vector.load %arg2[%c0_13, %c0_14] : memref<1x128xf32, #tpu.memory_space<vmem>>, vector<1x128xf32>
    %25 = arith.mulf %23, %24 : vector<1x128xf32>
    %26 = vector.broadcast %25 : vector<1x128xf32> to vector<64x128xf32>
    %27 = arith.mulf %12, %26 : vector<64x128xf32>
    %c0_15 = arith.constant 0 : index
    %c0_16 = arith.constant 0 : index
    %28 = vector.load %arg3[%c0_15, %c0_16] : memref<1x128xf32, #tpu.memory_space<vmem>>, vector<1x128xf32>
    %29 = vector.broadcast %28 : vector<1x128xf32> to vector<64x128xf32>
    %30 = arith.addf %27, %29 : vector<64x128xf32>
    %31 = arith.negf %30 : vector<64x128xf32>
    %32 = math.exp %31 : vector<64x128xf32>
    %cst_17 = arith.constant 1.000000e+00 : f32
    %33 = vector.broadcast %cst_17 : f32 to vector<64x128xf32>
    %34 = arith.addf %33, %32 : vector<64x128xf32>
    %35 = arith.divf %33, %34 : vector<64x128xf32>
    %36 = arith.mulf %30, %35 : vector<64x128xf32>
    %37 = arith.truncf %36 : vector<64x128xf32> to vector<64x128xbf16>
    %38 = vector.shape_cast %37 : vector<64x128xbf16> to vector<8x8x128xbf16>
    %cst_18 = arith.constant 0.000000e+00 : bf16
    %39 = vector.broadcast %cst_18 : bf16 to vector<1x8x384xbf16>
    %c0_19 = arith.constant 0 : index
    %c0_20 = arith.constant 0 : index
    %c0_21 = arith.constant 0 : index
    %40 = vector.load %arg8[%c0_19, %c0_20, %c0_21] : memref<10x8x384xbf16, #tpu.memory_space<vmem>>, vector<1x8x384xbf16>
    tpu.vector_store %arg8[%c0_19, %c0_20, %c0_21], %39 {strides = array<i32>} : memref<10x8x384xbf16, #tpu.memory_space<vmem>>, vector<1x8x384xbf16>,
    %c9 = arith.constant 9 : index
    %c0_22 = arith.constant 0 : index
    %c0_23 = arith.constant 0 : index
    %41 = vector.load %arg8[%c9, %c0_22, %c0_23] : memref<10x8x384xbf16, #tpu.memory_space<vmem>>, vector<1x8x384xbf16>
    tpu.vector_store %arg8[%c9, %c0_22, %c0_23], %39 {strides = array<i32>} : memref<10x8x384xbf16, #tpu.memory_space<vmem>>, vector<1x8x384xbf16>,
    %cst_24 = arith.constant 0.000000e+00 : bf16
    %42 = vector.broadcast %cst_24 : bf16 to vector<8x1x128xbf16>
    %c1 = arith.constant 1 : index
    %c0_25 = arith.constant 0 : index
    %c128 = arith.constant 128 : index
    %43 = vector.load %arg8[%c1, %c0_25, %c128] : memref<10x8x384xbf16, #tpu.memory_space<vmem>>, vector<8x8x128xbf16>
    tpu.vector_store %arg8[%c1, %c0_25, %c128], %38 {strides = array<i32>} : memref<10x8x384xbf16, #tpu.memory_space<vmem>>, vector<8x8x128xbf16>,
    %c1_26 = arith.constant 1 : index
    %c0_27 = arith.constant 0 : index
    %c0_28 = arith.constant 0 : index
    %44 = vector.load %arg8[%c1_26, %c0_27, %c0_28] : memref<10x8x384xbf16, #tpu.memory_space<vmem>>, vector<8x1x128xbf16>
    tpu.vector_store %arg8[%c1_26, %c0_27, %c0_28], %42 {strides = array<i32>} : memref<10x8x384xbf16, #tpu.memory_space<vmem>>, vector<8x1x128xbf16>,
    %45 = vector.extract_strided_slice %38 {offsets = [0, 0, 0], sizes = [8, 7, 128], strides = [1, 1, 1]} : vector<8x8x128xbf16> to vector<8x7x128xbf16>
    %c1_29 = arith.constant 1 : index
    %c1_30 = arith.constant 1 : index
    %c0_31 = arith.constant 0 : index
    %46 = vector.load %arg8[%c1_29, %c1_30, %c0_31] : memref<10x8x384xbf16, #tpu.memory_space<vmem>>, vector<8x7x128xbf16>
    tpu.vector_store %arg8[%c1_29, %c1_30, %c0_31], %45 {strides = array<i32>} : memref<10x8x384xbf16, #tpu.memory_space<vmem>>, vector<8x7x128xbf16>,
    %c1_32 = arith.constant 1 : index
    %c7 = arith.constant 7 : index
    %c256 = arith.constant 256 : index
    %47 = vector.load %arg8[%c1_32, %c7, %c256] : memref<10x8x384xbf16, #tpu.memory_space<vmem>>, vector<8x1x128xbf16>
    tpu.vector_store %arg8[%c1_32, %c7, %c256], %42 {strides = array<i32>} : memref<10x8x384xbf16, #tpu.memory_space<vmem>>, vector<8x1x128xbf16>,
    %48 = vector.extract_strided_slice %38 {offsets = [0, 1, 0], sizes = [8, 7, 128], strides = [1, 1, 1]} : vector<8x8x128xbf16> to vector<8x7x128xbf16>
    %c1_33 = arith.constant 1 : index
    %c0_34 = arith.constant 0 : index
    %c256_35 = arith.constant 256 : index
    %49 = vector.load %arg8[%c1_33, %c0_34, %c256_35] : memref<10x8x384xbf16, #tpu.memory_space<vmem>>, vector<8x7x128xbf16>
    tpu.vector_store %arg8[%c1_33, %c0_34, %c256_35], %48 {strides = array<i32>} : memref<10x8x384xbf16, #tpu.memory_space<vmem>>, vector<8x7x128xbf16>,
    %cst_36 = arith.constant 0.000000e+00 : f32
    %50 = vector.broadcast %cst_36 : f32 to vector<64x128xf32>
    %c0_37 = arith.constant 0 : index
    %c0_38 = arith.constant 0 : index
    %51 = vector.load %arg6[%c0_37, %c0_38] : memref<1x128xf32, #tpu.memory_space<vmem>>, vector<1x128xf32>
    %52 = vector.broadcast %51 : vector<1x128xf32> to vector<64x128xf32>
    %53 = arith.addf %50, %52 : vector<64x128xf32>
    %c0_39 = arith.constant 0 : index
    %c0_40 = arith.constant 0 : index
    %c0_41 = arith.constant 0 : index
    %54 = vector.load %arg8[%c0_39, %c0_40, %c0_41] : memref<10x8x384xbf16, #tpu.memory_space<vmem>>, vector<8x8x384xbf16>
    %55 = vector.shape_cast %54 : vector<8x8x384xbf16> to vector<64x384xbf16>
    %c0_42 = arith.constant 0 : index
    %c0_43 = arith.constant 0 : index
    %c0_44 = arith.constant 0 : index
    %56 = vector.load %arg5[%c0_42, %c0_43, %c0_44] : memref<3x384x128xbf16, #tpu.memory_space<vmem>>, vector<1x384x128xbf16>
    %57 = vector.shape_cast %56 : vector<1x384x128xbf16> to vector<384x128xbf16>
    %cst_45 = arith.constant dense<0.000000e+00> : vector<64x128xf32>
    %58 = tpu.matmul %55, %57, %cst_45 {dimension_numbers = #tpu.dot_dimension_numbers<[1], [0], [0], [1], [0, 0, 1, 1], [], []>} : vector<64x384xbf16>, vector<384x128xbf16>, vector<64x128xf32> -> vector<64x128xf32>
    %59 = arith.addf %53, %58 : vector<64x128xf32>
    %c1_46 = arith.constant 1 : index
    %c0_47 = arith.constant 0 : index
    %c0_48 = arith.constant 0 : index
    %60 = vector.load %arg8[%c1_46, %c0_47, %c0_48] : memref<10x8x384xbf16, #tpu.memory_space<vmem>>, vector<8x8x384xbf16>
    %61 = vector.shape_cast %60 : vector<8x8x384xbf16> to vector<64x384xbf16>
    %c1_49 = arith.constant 1 : index
    %c0_50 = arith.constant 0 : index
    %c0_51 = arith.constant 0 : index
    %62 = vector.load %arg5[%c1_49, %c0_50, %c0_51] : memref<3x384x128xbf16, #tpu.memory_space<vmem>>, vector<1x384x128xbf16>
    %63 = vector.shape_cast %62 : vector<1x384x128xbf16> to vector<384x128xbf16>
    %cst_52 = arith.constant dense<0.000000e+00> : vector<64x128xf32>
    %64 = tpu.matmul %61, %63, %cst_52 {dimension_numbers = #tpu.dot_dimension_numbers<[1], [0], [0], [1], [0, 0, 1, 1], [], []>} : vector<64x384xbf16>, vector<384x128xbf16>, vector<64x128xf32> -> vector<64x128xf32>
    %65 = arith.addf %59, %64 : vector<64x128xf32>
    %c2 = arith.constant 2 : index
    %c0_53 = arith.constant 0 : index
    %c0_54 = arith.constant 0 : index
    %66 = vector.load %arg8[%c2, %c0_53, %c0_54] : memref<10x8x384xbf16, #tpu.memory_space<vmem>>, vector<8x8x384xbf16>
    %67 = vector.shape_cast %66 : vector<8x8x384xbf16> to vector<64x384xbf16>
    %c2_55 = arith.constant 2 : index
    %c0_56 = arith.constant 0 : index
    %c0_57 = arith.constant 0 : index
    %68 = vector.load %arg5[%c2_55, %c0_56, %c0_57] : memref<3x384x128xbf16, #tpu.memory_space<vmem>>, vector<1x384x128xbf16>
    %69 = vector.shape_cast %68 : vector<1x384x128xbf16> to vector<384x128xbf16>
    %cst_58 = arith.constant dense<0.000000e+00> : vector<64x128xf32>
    %70 = tpu.matmul %67, %69, %cst_58 {dimension_numbers = #tpu.dot_dimension_numbers<[1], [0], [0], [1], [0, 0, 1, 1], [], []>} : vector<64x384xbf16>, vector<384x128xbf16>, vector<64x128xf32> -> vector<64x128xf32>
    %71 = arith.addf %65, %70 : vector<64x128xf32>
    %72 = vector.shape_cast %71 : vector<64x128xf32> to vector<8x8x128xf32>
    %73 = arith.truncf %72 : vector<8x8x128xf32> to vector<8x8x128xbf16>
    %c0_59 = arith.constant 0 : index
    %c0_60 = arith.constant 0 : index
    %c0_61 = arith.constant 0 : index
    %c0_62 = arith.constant 0 : index
    %74 = vector.load %arg7[%c0_59, %c0_60, %c0_61, %c0_62] : memref<1x8x8x128xbf16, #tpu.memory_space<vmem>>, vector<1x8x8x128xbf16>
    %75 = vector.shape_cast %74 : vector<1x8x8x128xbf16> to vector<8x8x128xbf16>
    %76 = vector.shape_cast %73 : vector<8x8x128xbf16> to vector<1x8x8x128xbf16>
    tpu.vector_store %arg7[%c0_59, %c0_60, %c0_61, %c0_62], %76 {strides = array<i32>} : memref<1x8x8x128xbf16, #tpu.memory_space<vmem>>, vector<1x8x8x128xbf16>,
    return
  }
  func.func @transform_0(%arg0: i32) -> (i32, i32, i32, i32) {
    %c0_i32 = arith.constant 0 : i32
    %c0_i32_0 = arith.constant 0 : i32
    %c0_i32_1 = arith.constant 0 : i32
    %c0_i32_2 = arith.constant 0 : i32
    return %arg0, %c0_i32, %c0_i32_0, %c0_i32_1 : i32, i32, i32, i32
  }
  func.func @transform_1(%arg0: i32) -> (i32, i32) {
    %c0_i32 = arith.constant 0 : i32
    %c0_i32_0 = arith.constant 0 : i32
    %c0_i32_1 = arith.constant 0 : i32
    return %c0_i32, %c0_i32_0 : i32, i32
  }
  func.func @transform_2(%arg0: i32) -> (i32, i32) {
    %c0_i32 = arith.constant 0 : i32
    %c0_i32_0 = arith.constant 0 : i32
    %c0_i32_1 = arith.constant 0 : i32
    return %c0_i32, %c0_i32_0 : i32, i32
  }
  func.func @transform_3(%arg0: i32) -> (i32, i32) {
    %c0_i32 = arith.constant 0 : i32
    %c0_i32_0 = arith.constant 0 : i32
    %c0_i32_1 = arith.constant 0 : i32
    return %c0_i32, %c0_i32_0 : i32, i32
  }
  func.func @transform_4(%arg0: i32) -> (i32, i32, i32) {
    %c0_i32 = arith.constant 0 : i32
    %c0_i32_0 = arith.constant 0 : i32
    %c0_i32_1 = arith.constant 0 : i32
    %c0_i32_2 = arith.constant 0 : i32
    return %c0_i32, %c0_i32_0, %c0_i32_1 : i32, i32, i32
  }
  func.func @transform_5(%arg0: i32) -> (i32, i32) {
    %c0_i32 = arith.constant 0 : i32
    %c0_i32_0 = arith.constant 0 : i32
    %c0_i32_1 = arith.constant 0 : i32
    return %c0_i32, %c0_i32_0 : i32, i32
  }
  func.func @transform_6(%arg0: i32) -> (i32, i32, i32, i32) {
    %c0_i32 = arith.constant 0 : i32
    %c0_i32_0 = arith.constant 0 : i32
    %c0_i32_1 = arith.constant 0 : i32
    %c0_i32_2 = arith.constant 0 : i32
    return %arg0, %c0_i32, %c0_i32_0, %c0_i32_1 : i32, i32, i32, i32
  }
}

module attributes {stable_mosaic.version = 11 : i64} {
  func.func @_gn_silu_conv3x3_kernel(%arg0: i32, %arg1: memref<1x8x8x128xbf16, #tpu.memory_space<vmem>>, %arg2: memref<1x128xf32, #tpu.memory_space<vmem>>, %arg3: memref<1x128xf32, #tpu.memory_space<vmem>>, %arg4: memref<128x128xbf16, #tpu.memory_space<vmem>>, %arg5: memref<3x384x128xbf16, #tpu.memory_space<vmem>>, %arg6: memref<1x128xf32, #tpu.memory_space<vmem>>, %arg7: memref<1x8x8x128xbf16, #tpu.memory_space<vmem>>, %arg8: memref<1x8x8x128xf32, #tpu.memory_space<vmem>>, %arg9: memref<10x8x384xbf16, #tpu.memory_space<vmem>>) attributes {dimension_semantics = [#tpu.dimension_semantics<parallel>], iteration_bounds = array<i64: 2>, scalar_prefetch = 0 : i64, scratch_operands = 1 : i64, tpu.core_type = #tpu.core_type<tc>, window_params = [{transform_indices = @transform_0, window_bounds = array<i64: 1, 8, 8, 128>}, {pipeline_mode = #tpu.pipeline_mode<synchronous>, transform_indices = @transform_1, window_bounds = array<i64: 1, 128>}, {pipeline_mode = #tpu.pipeline_mode<synchronous>, transform_indices = @transform_2, window_bounds = array<i64: 1, 128>}, {pipeline_mode = #tpu.pipeline_mode<synchronous>, transform_indices = @transform_3, window_bounds = array<i64: 128, 128>}, {pipeline_mode = #tpu.pipeline_mode<synchronous>, transform_indices = @transform_4, window_bounds = array<i64: 3, 384, 128>}, {pipeline_mode = #tpu.pipeline_mode<synchronous>, transform_indices = @transform_5, window_bounds = array<i64: 1, 128>}, {transform_indices = @transform_6, window_bounds = array<i64: 1, 8, 8, 128>}, {transform_indices = @transform_7, window_bounds = array<i64: 1, 8, 8, 128>}]} {
    %c0 = arith.constant 0 : index
    %c0_0 = arith.constant 0 : index
    %c0_1 = arith.constant 0 : index
    %c0_2 = arith.constant 0 : index
    %0 = vector.load %arg1[%c0, %c0_0, %c0_1, %c0_2] : memref<1x8x8x128xbf16, #tpu.memory_space<vmem>>, vector<1x8x8x128xbf16>
    %1 = vector.shape_cast %0 : vector<1x8x8x128xbf16> to vector<8x8x128xbf16>
    %2 = arith.extf %1 : vector<8x8x128xbf16> to vector<8x8x128xf32>
    %3 = vector.shape_cast %2 : vector<8x8x128xf32> to vector<64x128xf32>
    %cst = arith.constant dense<0.000000e+00> : vector<128xf32>
    %4 = vector.multi_reduction <add>, %3, %cst [0] : vector<64x128xf32> to vector<128xf32>
    %5 = vector.shape_cast %4 : vector<128xf32> to vector<1x128xf32>
    %6 = arith.truncf %5 : vector<1x128xf32> to vector<1x128xbf16>
    %c0_3 = arith.constant 0 : index
    %c0_4 = arith.constant 0 : index
    %7 = vector.load %arg4[%c0_3, %c0_4] : memref<128x128xbf16, #tpu.memory_space<vmem>>, vector<128x128xbf16>
    %cst_5 = arith.constant dense<0.000000e+00> : vector<1x128xf32>
    %8 = tpu.matmul %6, %7, %cst_5 {dimension_numbers = #tpu.dot_dimension_numbers<[1], [0], [0], [1], [0, 0, 1, 1], [], []>} : vector<1x128xbf16>, vector<128x128xbf16>, vector<1x128xf32> -> vector<1x128xf32>
    %cst_6 = arith.constant 9.765625E-4 : f32
    %9 = vector.broadcast %cst_6 : f32 to vector<1x128xf32>
    %10 = arith.mulf %8, %9 : vector<1x128xf32>
    %11 = vector.broadcast %10 : vector<1x128xf32> to vector<64x128xf32>
    %12 = arith.subf %3, %11 : vector<64x128xf32>
    %13 = arith.mulf %12, %12 : vector<64x128xf32>
    %cst_7 = arith.constant dense<0.000000e+00> : vector<128xf32>
    %14 = vector.multi_reduction <add>, %13, %cst_7 [0] : vector<64x128xf32> to vector<128xf32>
    %15 = vector.shape_cast %14 : vector<128xf32> to vector<1x128xf32>
    %16 = arith.truncf %15 : vector<1x128xf32> to vector<1x128xbf16>
    %c0_8 = arith.constant 0 : index
    %c0_9 = arith.constant 0 : index
    %17 = vector.load %arg4[%c0_8, %c0_9] : memref<128x128xbf16, #tpu.memory_space<vmem>>, vector<128x128xbf16>
    %cst_10 = arith.constant dense<0.000000e+00> : vector<1x128xf32>
    %18 = tpu.matmul %16, %17, %cst_10 {dimension_numbers = #tpu.dot_dimension_numbers<[1], [0], [0], [1], [0, 0, 1, 1], [], []>} : vector<1x128xbf16>, vector<128x128xbf16>, vector<1x128xf32> -> vector<1x128xf32>
    %cst_11 = arith.constant 9.765625E-4 : f32
    %19 = vector.broadcast %cst_11 : f32 to vector<1x128xf32>
    %20 = arith.mulf %18, %19 : vector<1x128xf32>
    %cst_12 = arith.constant 9.99999974E-6 : f32
    %21 = vector.broadcast %cst_12 : f32 to vector<1x128xf32>
    %22 = arith.addf %20, %21 : vector<1x128xf32>
    %23 = math.rsqrt %22 : vector<1x128xf32>
    %c0_13 = arith.constant 0 : index
    %c0_14 = arith.constant 0 : index
    %24 = vector.load %arg2[%c0_13, %c0_14] : memref<1x128xf32, #tpu.memory_space<vmem>>, vector<1x128xf32>
    %25 = arith.mulf %23, %24 : vector<1x128xf32>
    %26 = vector.broadcast %25 : vector<1x128xf32> to vector<64x128xf32>
    %27 = arith.mulf %12, %26 : vector<64x128xf32>
    %c0_15 = arith.constant 0 : index
    %c0_16 = arith.constant 0 : index
    %28 = vector.load %arg3[%c0_15, %c0_16] : memref<1x128xf32, #tpu.memory_space<vmem>>, vector<1x128xf32>
    %29 = vector.broadcast %28 : vector<1x128xf32> to vector<64x128xf32>
    %30 = arith.addf %27, %29 : vector<64x128xf32>
    %31 = arith.negf %30 : vector<64x128xf32>
    %32 = math.exp %31 : vector<64x128xf32>
    %cst_17 = arith.constant 1.000000e+00 : f32
    %33 = vector.broadcast %cst_17 : f32 to vector<64x128xf32>
    %34 = arith.addf %33, %32 : vector<64x128xf32>
    %35 = arith.divf %33, %34 : vector<64x128xf32>
    %36 = arith.mulf %30, %35 : vector<64x128xf32>
    %37 = arith.truncf %36 : vector<64x128xf32> to vector<64x128xbf16>
    %38 = vector.shape_cast %37 : vector<64x128xbf16> to vector<8x8x128xbf16>
    %cst_18 = arith.constant 0.000000e+00 : bf16
    %39 = vector.broadcast %cst_18 : bf16 to vector<1x8x384xbf16>
    %c0_19 = arith.constant 0 : index
    %c0_20 = arith.constant 0 : index
    %c0_21 = arith.constant 0 : index
    %40 = vector.load %arg9[%c0_19, %c0_20, %c0_21] : memref<10x8x384xbf16, #tpu.memory_space<vmem>>, vector<1x8x384xbf16>
    tpu.vector_store %arg9[%c0_19, %c0_20, %c0_21], %39 {strides = array<i32>} : memref<10x8x384xbf16, #tpu.memory_space<vmem>>, vector<1x8x384xbf16>,
    %c9 = arith.constant 9 : index
    %c0_22 = arith.constant 0 : index
    %c0_23 = arith.constant 0 : index
    %41 = vector.load %arg9[%c9, %c0_22, %c0_23] : memref<10x8x384xbf16, #tpu.memory_space<vmem>>, vector<1x8x384xbf16>
    tpu.vector_store %arg9[%c9, %c0_22, %c0_23], %39 {strides = array<i32>} : memref<10x8x384xbf16, #tpu.memory_space<vmem>>, vector<1x8x384xbf16>,
    %cst_24 = arith.constant 0.000000e+00 : bf16
    %42 = vector.broadcast %cst_24 : bf16 to vector<8x1x128xbf16>
    %c1 = arith.constant 1 : index
    %c0_25 = arith.constant 0 : index
    %c128 = arith.constant 128 : index
    %43 = vector.load %arg9[%c1, %c0_25, %c128] : memref<10x8x384xbf16, #tpu.memory_space<vmem>>, vector<8x8x128xbf16>
    tpu.vector_store %arg9[%c1, %c0_25, %c128], %38 {strides = array<i32>} : memref<10x8x384xbf16, #tpu.memory_space<vmem>>, vector<8x8x128xbf16>,
    %c1_26 = arith.constant 1 : index
    %c0_27 = arith.constant 0 : index
    %c0_28 = arith.constant 0 : index
    %44 = vector.load %arg9[%c1_26, %c0_27, %c0_28] : memref<10x8x384xbf16, #tpu.memory_space<vmem>>, vector<8x1x128xbf16>
    tpu.vector_store %arg9[%c1_26, %c0_27, %c0_28], %42 {strides = array<i32>} : memref<10x8x384xbf16, #tpu.memory_space<vmem>>, vector<8x1x128xbf16>,
    %45 = vector.extract_strided_slice %38 {offsets = [0, 0, 0], sizes = [8, 7, 128], strides = [1, 1, 1]} : vector<8x8x128xbf16> to vector<8x7x128xbf16>
    %c1_29 = arith.constant 1 : index
    %c1_30 = arith.constant 1 : index
    %c0_31 = arith.constant 0 : index
    %46 = vector.load %arg9[%c1_29, %c1_30, %c0_31] : memref<10x8x384xbf16, #tpu.memory_space<vmem>>, vector<8x7x128xbf16>
    tpu.vector_store %arg9[%c1_29, %c1_30, %c0_31], %45 {strides = array<i32>} : memref<10x8x384xbf16, #tpu.memory_space<vmem>>, vector<8x7x128xbf16>,
    %c1_32 = arith.constant 1 : index
    %c7 = arith.constant 7 : index
    %c256 = arith.constant 256 : index
    %47 = vector.load %arg9[%c1_32, %c7, %c256] : memref<10x8x384xbf16, #tpu.memory_space<vmem>>, vector<8x1x128xbf16>
    tpu.vector_store %arg9[%c1_32, %c7, %c256], %42 {strides = array<i32>} : memref<10x8x384xbf16, #tpu.memory_space<vmem>>, vector<8x1x128xbf16>,
    %48 = vector.extract_strided_slice %38 {offsets = [0, 1, 0], sizes = [8, 7, 128], strides = [1, 1, 1]} : vector<8x8x128xbf16> to vector<8x7x128xbf16>
    %c1_33 = arith.constant 1 : index
    %c0_34 = arith.constant 0 : index
    %c256_35 = arith.constant 256 : index
    %49 = vector.load %arg9[%c1_33, %c0_34, %c256_35] : memref<10x8x384xbf16, #tpu.memory_space<vmem>>, vector<8x7x128xbf16>
    tpu.vector_store %arg9[%c1_33, %c0_34, %c256_35], %48 {strides = array<i32>} : memref<10x8x384xbf16, #tpu.memory_space<vmem>>, vector<8x7x128xbf16>,
    %c0_36 = arith.constant 0 : index
    %c0_37 = arith.constant 0 : index
    %c0_38 = arith.constant 0 : index
    %c0_39 = arith.constant 0 : index
    %50 = vector.load %arg7[%c0_36, %c0_37, %c0_38, %c0_39] : memref<1x8x8x128xbf16, #tpu.memory_space<vmem>>, vector<1x8x8x128xbf16>
    %51 = vector.shape_cast %50 : vector<1x8x8x128xbf16> to vector<8x8x128xbf16>
    %52 = arith.extf %51 : vector<8x8x128xbf16> to vector<8x8x128xf32>
    %53 = vector.shape_cast %52 : vector<8x8x128xf32> to vector<64x128xf32>
    %c0_40 = arith.constant 0 : index
    %c0_41 = arith.constant 0 : index
    %54 = vector.load %arg6[%c0_40, %c0_41] : memref<1x128xf32, #tpu.memory_space<vmem>>, vector<1x128xf32>
    %55 = vector.broadcast %54 : vector<1x128xf32> to vector<64x128xf32>
    %56 = arith.addf %53, %55 : vector<64x128xf32>
    %c0_42 = arith.constant 0 : index
    %c0_43 = arith.constant 0 : index
    %c0_44 = arith.constant 0 : index
    %57 = vector.load %arg9[%c0_42, %c0_43, %c0_44] : memref<10x8x384xbf16, #tpu.memory_space<vmem>>, vector<8x8x384xbf16>
    %58 = vector.shape_cast %57 : vector<8x8x384xbf16> to vector<64x384xbf16>
    %c0_45 = arith.constant 0 : index
    %c0_46 = arith.constant 0 : index
    %c0_47 = arith.constant 0 : index
    %59 = vector.load %arg5[%c0_45, %c0_46, %c0_47] : memref<3x384x128xbf16, #tpu.memory_space<vmem>>, vector<1x384x128xbf16>
    %60 = vector.shape_cast %59 : vector<1x384x128xbf16> to vector<384x128xbf16>
    %cst_48 = arith.constant dense<0.000000e+00> : vector<64x128xf32>
    %61 = tpu.matmul %58, %60, %cst_48 {dimension_numbers = #tpu.dot_dimension_numbers<[1], [0], [0], [1], [0, 0, 1, 1], [], []>} : vector<64x384xbf16>, vector<384x128xbf16>, vector<64x128xf32> -> vector<64x128xf32>
    %62 = arith.addf %56, %61 : vector<64x128xf32>
    %c1_49 = arith.constant 1 : index
    %c0_50 = arith.constant 0 : index
    %c0_51 = arith.constant 0 : index
    %63 = vector.load %arg9[%c1_49, %c0_50, %c0_51] : memref<10x8x384xbf16, #tpu.memory_space<vmem>>, vector<8x8x384xbf16>
    %64 = vector.shape_cast %63 : vector<8x8x384xbf16> to vector<64x384xbf16>
    %c1_52 = arith.constant 1 : index
    %c0_53 = arith.constant 0 : index
    %c0_54 = arith.constant 0 : index
    %65 = vector.load %arg5[%c1_52, %c0_53, %c0_54] : memref<3x384x128xbf16, #tpu.memory_space<vmem>>, vector<1x384x128xbf16>
    %66 = vector.shape_cast %65 : vector<1x384x128xbf16> to vector<384x128xbf16>
    %cst_55 = arith.constant dense<0.000000e+00> : vector<64x128xf32>
    %67 = tpu.matmul %64, %66, %cst_55 {dimension_numbers = #tpu.dot_dimension_numbers<[1], [0], [0], [1], [0, 0, 1, 1], [], []>} : vector<64x384xbf16>, vector<384x128xbf16>, vector<64x128xf32> -> vector<64x128xf32>
    %68 = arith.addf %62, %67 : vector<64x128xf32>
    %c2 = arith.constant 2 : index
    %c0_56 = arith.constant 0 : index
    %c0_57 = arith.constant 0 : index
    %69 = vector.load %arg9[%c2, %c0_56, %c0_57] : memref<10x8x384xbf16, #tpu.memory_space<vmem>>, vector<8x8x384xbf16>
    %70 = vector.shape_cast %69 : vector<8x8x384xbf16> to vector<64x384xbf16>
    %c2_58 = arith.constant 2 : index
    %c0_59 = arith.constant 0 : index
    %c0_60 = arith.constant 0 : index
    %71 = vector.load %arg5[%c2_58, %c0_59, %c0_60] : memref<3x384x128xbf16, #tpu.memory_space<vmem>>, vector<1x384x128xbf16>
    %72 = vector.shape_cast %71 : vector<1x384x128xbf16> to vector<384x128xbf16>
    %cst_61 = arith.constant dense<0.000000e+00> : vector<64x128xf32>
    %73 = tpu.matmul %70, %72, %cst_61 {dimension_numbers = #tpu.dot_dimension_numbers<[1], [0], [0], [1], [0, 0, 1, 1], [], []>} : vector<64x384xbf16>, vector<384x128xbf16>, vector<64x128xf32> -> vector<64x128xf32>
    %74 = arith.addf %68, %73 : vector<64x128xf32>
    %75 = vector.shape_cast %74 : vector<64x128xf32> to vector<8x8x128xf32>
    %c0_62 = arith.constant 0 : index
    %c0_63 = arith.constant 0 : index
    %c0_64 = arith.constant 0 : index
    %c0_65 = arith.constant 0 : index
    %76 = vector.load %arg8[%c0_62, %c0_63, %c0_64, %c0_65] : memref<1x8x8x128xf32, #tpu.memory_space<vmem>>, vector<1x8x8x128xf32>
    %77 = vector.shape_cast %76 : vector<1x8x8x128xf32> to vector<8x8x128xf32>
    %78 = vector.shape_cast %75 : vector<8x8x128xf32> to vector<1x8x8x128xf32>
    tpu.vector_store %arg8[%c0_62, %c0_63, %c0_64, %c0_65], %78 {strides = array<i32>} : memref<1x8x8x128xf32, #tpu.memory_space<vmem>>, vector<1x8x8x128xf32>,
    return
  }
  func.func @transform_0(%arg0: i32) -> (i32, i32, i32, i32) {
    %c0_i32 = arith.constant 0 : i32
    %c0_i32_0 = arith.constant 0 : i32
    %c0_i32_1 = arith.constant 0 : i32
    %c0_i32_2 = arith.constant 0 : i32
    return %arg0, %c0_i32, %c0_i32_0, %c0_i32_1 : i32, i32, i32, i32
  }
  func.func @transform_1(%arg0: i32) -> (i32, i32) {
    %c0_i32 = arith.constant 0 : i32
    %c0_i32_0 = arith.constant 0 : i32
    %c0_i32_1 = arith.constant 0 : i32
    return %c0_i32, %c0_i32_0 : i32, i32
  }
  func.func @transform_2(%arg0: i32) -> (i32, i32) {
    %c0_i32 = arith.constant 0 : i32
    %c0_i32_0 = arith.constant 0 : i32
    %c0_i32_1 = arith.constant 0 : i32
    return %c0_i32, %c0_i32_0 : i32, i32
  }
  func.func @transform_3(%arg0: i32) -> (i32, i32) {
    %c0_i32 = arith.constant 0 : i32
    %c0_i32_0 = arith.constant 0 : i32
    %c0_i32_1 = arith.constant 0 : i32
    return %c0_i32, %c0_i32_0 : i32, i32
  }
  func.func @transform_4(%arg0: i32) -> (i32, i32, i32) {
    %c0_i32 = arith.constant 0 : i32
    %c0_i32_0 = arith.constant 0 : i32
    %c0_i32_1 = arith.constant 0 : i32
    %c0_i32_2 = arith.constant 0 : i32
    return %c0_i32, %c0_i32_0, %c0_i32_1 : i32, i32, i32
  }
  func.func @transform_5(%arg0: i32) -> (i32, i32) {
    %c0_i32 = arith.constant 0 : i32
    %c0_i32_0 = arith.constant 0 : i32
    %c0_i32_1 = arith.constant 0 : i32
    return %c0_i32, %c0_i32_0 : i32, i32
  }
  func.func @transform_6(%arg0: i32) -> (i32, i32, i32, i32) {
    %c0_i32 = arith.constant 0 : i32
    %c0_i32_0 = arith.constant 0 : i32
    %c0_i32_1 = arith.constant 0 : i32
    %c0_i32_2 = arith.constant 0 : i32
    return %arg0, %c0_i32, %c0_i32_0, %c0_i32_1 : i32, i32, i32, i32
  }
  func.func @transform_7(%arg0: i32) -> (i32, i32, i32, i32) {
    %c0_i32 = arith.constant 0 : i32
    %c0_i32_0 = arith.constant 0 : i32
    %c0_i32_1 = arith.constant 0 : i32
    %c0_i32_2 = arith.constant 0 : i32
    return %arg0, %c0_i32, %c0_i32_0, %c0_i32_1 : i32, i32, i32, i32
  }
}

</mosaic_0001>

<llo_original>
// kernel: downsample_forward.3
$region0: #{downsample_forward.3}
  #allocation0 [shape = 'u32[]', space=smem, size = 0x4, offset = 0x4, fixed_abs, tag = 'smem constant byte address 0x4 - core index']
  #allocation1 [shape = 'u32[144,128]{1,0:T(1,128)}', space=vmem, size = 0x12000, scoped, tag = 'internal scratch']
  %s0 = inlined_call_operand.vmem [shape: bf16[128,16], index: 0, kind: input, shape index: {}]
  %s1 = inlined_call_operand.vmem [shape: bf16[16,128], index: 1, kind: input, shape index: {}]
  %s2 = inlined_call_operand.hbm [shape: f32[1,128], index: 2, kind: input, shape index: {}]
  %s3 = inlined_call_operand.vmem [shape: bf16[128,128], index: 3, kind: output, shape index: {}]
  %s4 = sld [smem:[#allocation0]]
  $region26: #{downsample_forward.3} parent=0
    _
  %s6 = ssub.s32 1, %s4
  %s7 = scalar_select 0, %s6, %s4
  $region1: #{downsample_forward.3} parent=0
    #allocation2 [shape = 'u8[512]{0}', space=vmem, size = 0x400, scoped, tag = 'input window, operand 2, single buffered']
    #allocation3 [shape = 's32[1]{0}', space=sflag, size = 0x4, scoped, tag = 'scoped memory for downsample_forward.3']
    %8 = vsyncpa [#allocation3], 0
    // Predicated region
    $region2: #{downsample_forward.3} parent=1 // pred_check
      _
    $region3: #{downsample_forward.3} parent=1 // pred_check_branch
      %10 = sbr.rel (0) target = $region5
    $region4: #{downsample_forward.3} parent=1 // pred_region
      _
    $region5: #{downsample_forward.3} parent=1 // pred_fallthru
      _
    // Predicated region
    $region6: #{downsample_forward.3} parent=1 // pred_check
      _
    $region7: #{downsample_forward.3} parent=1 // pred_check_branch
      %12 = sbr.rel (0) target = $region9
    $region8: #{downsample_forward.3} parent=1 // pred_region
      _
    $region9: #{downsample_forward.3} parent=1 // pred_fallthru
      _
    // Predicated region
    $region10: #{downsample_forward.3} parent=1 // pred_check
      _
    $region11: #{downsample_forward.3} parent=1 // pred_check_branch
      %14 = sbr.rel (0) target = $region13
    $region12: #{downsample_forward.3} parent=1 // pred_region
      %s16 = ssub.s32 16, 16
      %17 = vsyncadd [#allocation3], %s16
      %s19 = sshll.u32 [#allocation2], 4
      %s20 = int_to_ptr.vmem [resolvable:$true] %s19
      %22 = dma.hbm_to_vmem [thread:$0]  %s2, 16, %s20, [#allocation3]
    $region13: #{downsample_forward.3} parent=1 // pred_fallthru
      _
    // Predicated region
    $region14: #{downsample_forward.3} parent=1 // pred_check
      _
    $region15: #{downsample_forward.3} parent=1 // pred_check_branch
      %24 = sbr.rel (0) target = $region17
    $region16: #{downsample_forward.3} parent=1 // pred_region
      %25 = dma.done [#allocation3], 16
    $region17: #{downsample_forward.3} parent=1 // pred_fallthru
      _
    %v27 = vld [vmem:[%s0] sm:$0xf]
    %v28 = vld [vmem:[%s0 + $0x4] sm:$0xf]
    %v29 = vld [vmem:[%s0 + $0x8] sm:$0xf]
    %v30 = vld [vmem:[%s0 + $0xc] sm:$0xf]
    %v31 = vld [vmem:[%s0 + $0x10] sm:$0xf]
    %v32 = vld [vmem:[%s0 + $0x14] sm:$0xf]
    %v33 = vld [vmem:[%s0 + $0x18] sm:$0xf]
    %v34 = vld [vmem:[%s0 + $0x1c] sm:$0xf]
    %v35 = vld [vmem:[%s0 + $0x20] sm:$0xf]
    %v36 = vld [vmem:[%s0 + $0x24] sm:$0xf]
    %v37 = vld [vmem:[%s0 + $0x28] sm:$0xf]
    %v38 = vld [vmem:[%s0 + $0x2c] sm:$0xf]
    %v39 = vld [vmem:[%s0 + $0x30] sm:$0xf]
    %v40 = vld [vmem:[%s0 + $0x34] sm:$0xf]
    %v41 = vld [vmem:[%s0 + $0x38] sm:$0xf]
    %v42 = vld [vmem:[%s0 + $0x3c] sm:$0xf]
    %v43 = vld [vmem:[%s1] sm:$0xf]
    %v44 = vld [vmem:[%s1 + $0x4] sm:$0xf]
    %v45 = vld [vmem:[#allocation2] sm:$0x1]
    %v47 = vlaneseq
    %v48 = vshrl.u32 %v47, 7
    %v49 = vsub.s32 0, %v48
    %v50 = vrot.slane %v45, %v49
    %v68 = vunpack.c.l.b16 %v27
    %v69 = vunpack.c.l.b16 %v28
    %v70 = vunpack.c.l.b16 %v29
    %v71 = vunpack.c.l.b16 %v30
    %v72 = vunpack.c.l.b16 %v31
    %v73 = vunpack.c.l.b16 %v32
    %v74 = vunpack.c.l.b16 %v33
    %v75 = vunpack.c.l.b16 %v34
    %v76 = vunpack.c.l.b16 %v35
    %v77 = vunpack.c.l.b16 %v36
    %v78 = vunpack.c.l.b16 %v37
    %v79 = vunpack.c.l.b16 %v38
    %v80 = vunpack.c.l.b16 %v39
    %v81 = vunpack.c.l.b16 %v40
    %v82 = vunpack.c.l.b16 %v41
    %v83 = vunpack.c.l.b16 %v42
    %v84 = vpack.c.b16 %v69, %v68
    %v85 = vpack.c.b16 %v71, %v70
    %v86 = vpack.c.b16 %v73, %v72
    %v87 = vpack.c.b16 %v75, %v74
    %v88 = vpack.c.b16 %v77, %v76
    %v89 = vpack.c.b16 %v79, %v78
    %v90 = vpack.c.b16 %v81, %v80
    %v91 = vpack.c.b16 %v83, %v82
    %v94 = vunpack.c.l.b16 %v43
    %v95 = vunpack.c.l.b16 %v44
    %v96 = vpack.c.b16 %v95, %v94
    %vm98 = vcmask 130048
    %v100 = vsel %vm98, %v84, 0
    %v103 = vsel %vm98, %v85, 0
    %v106 = vsel %vm98, %v86, 0
    %v109 = vsel %vm98, %v87, 0
    %v112 = vsel %vm98, %v88, 0
    %v115 = vsel %vm98, %v89, 0
    %v118 = vsel %vm98, %v90, 0
    %v121 = vsel %vm98, %v91, 0
    %123 = vmatprep.subr.bf16.mxu0 0
    %124 = vmatpush1.bf16.msra.mxu0 %v96
    %125 = vmatprep.subr.bf16.mxu0 0
    %126 = vmatpush1.bf16.msra.mxu0 0
    %127 = vmatprep.subr.bf16.mxu0 0
    %128 = vmatpush1.bf16.msra.mxu0 0
    %129 = vmatprep.subr.bf16.mxu0 0
    %130 = vmatpush1.bf16.msra.mxu0 0
    %131 = vmatprep.subr.bf16.mxu0 0
    %132 = vmatpush1.bf16.msra.mxu0 0
    %133 = vmatprep.subr.bf16.mxu0 0
    %134 = vmatpush1.bf16.msra.mxu0 0
    %135 = vmatprep.subr.bf16.mxu0 0
    %136 = vmatpush1.bf16.msra.mxu0 0
    %137 = vmatprep.subr.bf16.mxu0 0
    %138 = vmatpush1.bf16.msra.mxu0 0
    %139 = vmatprep.subr.bf16.mxu0 0
    %140 = vmatpush1.bf16.msra.mxu0 0
    %141 = vmatprep.subr.bf16.mxu0 0
    %142 = vmatpush1.bf16.msra.mxu0 0
    %143 = vmatprep.subr.bf16.mxu0 0
    %144 = vmatpush1.bf16.msra.mxu0 0
    %145 = vmatprep.subr.bf16.mxu0 0
    %146 = vmatpush1.bf16.msra.mxu0 0
    %147 = vmatprep.subr.bf16.mxu0 0
    %148 = vmatpush1.bf16.msra.mxu0 0
    %149 = vmatprep.subr.bf16.mxu0 0
    %150 = vmatpush1.bf16.msra.mxu0 0
    %151 = vmatprep.subr.bf16.mxu0 0
    %152 = vmatpush1.bf16.msra.mxu0 0
    %153 = vmatprep.subr.bf16.mxu0 0
    %154 = vmatpush1.bf16.msra.mxu0 0
    %155 = vmatprep.mubr.bf16.mxu0 0
    %156 = vmatmul.mubr.bf16.gmra.mrb[0].mxu0 %v100
    %v157 = vpop.f32.mrb[0].mxu0
    %v158 = vadd.f32 %v50, %v157
    %v159 = vpop.f32.mrb[0].mxu0
    %v160 = vpop.f32.mrb[0].mxu0
    %v161 = vadd.f32 %v50, %v160
    %v162 = vpop.f32.mrb[0].mxu0
    %163 = vmatprep.mubr.bf16.mxu0 0
    %164 = vmatmul.mubr.bf16.gmra.mrb[0].mxu0 %v103
    %v165 = vpop.f32.mrb[0].mxu0
    %v166 = vadd.f32 %v50, %v165
    %v167 = vpop.f32.mrb[0].mxu0
    %v168 = vpop.f32.mrb[0].mxu0
    %v169 = vadd.f32 %v50, %v168
    %v170 = vpop.f32.mrb[0].mxu0
    %171 = vmatprep.mubr.bf16.mxu0 0
    %172 = vmatmul.mubr.bf16.gmra.mrb[0].mxu0 %v106
    %v173 = vpop.f32.mrb[0].mxu0
    %v174 = vadd.f32 %v50, %v173
    %v175 = vpop.f32.mrb[0].mxu0
    %v176 = vpop.f32.mrb[0].mxu0
    %v177 = vadd.f32 %v50, %v176
    %v178 = vpop.f32.mrb[0].mxu0
    %179 = vmatprep.mubr.bf16.mxu0 0
    %180 = vmatmul.mubr.bf16.gmra.mrb[0].mxu0 %v109
    %v181 = vpop.f32.mrb[0].mxu0
    %v182 = vadd.f32 %v50, %v181
    %v183 = vpop.f32.mrb[0].mxu0
    %v184 = vpop.f32.mrb[0].mxu0
    %v185 = vadd.f32 %v50, %v184
    %v186 = vpop.f32.mrb[0].mxu0
    %187 = vmatprep.mubr.bf16.mxu0 0
    %188 = vmatmul.mubr.bf16.gmra.mrb[0].mxu0 %v112
    %v189 = vpop.f32.mrb[0].mxu0
    %v190 = vadd.f32 %v50, %v189
    %v191 = vpop.f32.mrb[0].mxu0
    %v192 = vpop.f32.mrb[0].mxu0
    %v193 = vadd.f32 %v50, %v192
    %v194 = vpop.f32.mrb[0].mxu0
    %195 = vmatprep.mubr.bf16.mxu0 0
    %196 = vmatmul.mubr.bf16.gmra.mrb[0].mxu0 %v115
    %v197 = vpop.f32.mrb[0].mxu0
    %v198 = vadd.f32 %v50, %v197
    %v199 = vpop.f32.mrb[0].mxu0
    %v200 = vpop.f32.mrb[0].mxu0
    %v201 = vadd.f32 %v50, %v200
    %v202 = vpop.f32.mrb[0].mxu0
    %203 = vmatprep.mubr.bf16.mxu0 0
    %204 = vmatmul.mubr.bf16.gmra.mrb[0].mxu0 %v118
    %v205 = vpop.f32.mrb[0].mxu0
    %v206 = vadd.f32 %v50, %v205
    %v207 = vpop.f32.mrb[0].mxu0
    %v208 = vpop.f32.mrb[0].mxu0
    %v209 = vadd.f32 %v50, %v208
    %v210 = vpop.f32.mrb[0].mxu0
    %211 = vmatprep.mubr.bf16.mxu0 0
    %212 = vmatmul.mubr.bf16.gmra.mrb[0].mxu0 %v121
    %v213 = vpop.f32.mrb[0].mxu0
    %v214 = vadd.f32 %v50, %v213
    %v215 = vpop.f32.mrb[0].mxu0
    %v216 = vpop.f32.mrb[0].mxu0
    %v217 = vadd.f32 %v50, %v216
    %v218 = vpop.f32.mrb[0].mxu0
    %219 = vdwg.mxu0
    %v220 = vpack.c.bf16 %v161, %v158
    %v221 = vpack.c.bf16 %v169, %v166
    %v222 = vpack.c.bf16 %v177, %v174
    %v223 = vpack.c.bf16 %v185, %v182
    %v224 = vpack.c.bf16 %v193, %v190
    %v225 = vpack.c.bf16 %v201, %v198
    %v226 = vpack.c.bf16 %v209, %v206
    %v227 = vpack.c.bf16 %v217, %v214
    %v236 = vunpack.c.l.b16 %v220
    %v237 = vunpack.c.h.b16 %v220
    %v238 = vunpack.c.l.b16 %v221
    %v239 = vunpack.c.h.b16 %v221
    %v240 = vunpack.c.l.b16 %v222
    %v241 = vunpack.c.h.b16 %v222
    %v242 = vunpack.c.l.b16 %v223
    %v243 = vunpack.c.h.b16 %v223
    %v244 = vunpack.c.l.b16 %v224
    %v245 = vunpack.c.h.b16 %v224
    %v246 = vunpack.c.l.b16 %v225
    %v247 = vunpack.c.h.b16 %v225
    %v248 = vunpack.c.l.b16 %v226
    %v249 = vunpack.c.h.b16 %v226
    %v250 = vunpack.c.l.b16 %v227
    %v251 = vunpack.c.h.b16 %v227
    %v252 = vpack.c.b16 %v236, %v236
    %v253 = vpack.c.b16 %v237, %v237
    %v254 = vpack.c.b16 %v238, %v238
    %v255 = vpack.c.b16 %v239, %v239
    %v256 = vpack.c.b16 %v240, %v240
    %v257 = vpack.c.b16 %v241, %v241
    %v258 = vpack.c.b16 %v242, %v242
    %v259 = vpack.c.b16 %v243, %v243
    %v260 = vpack.c.b16 %v244, %v244
    %v261 = vpack.c.b16 %v245, %v245
    %v262 = vpack.c.b16 %v246, %v246
    %v263 = vpack.c.b16 %v247, %v247
    %v264 = vpack.c.b16 %v248, %v248
    %v265 = vpack.c.b16 %v249, %v249
    %v266 = vpack.c.b16 %v250, %v250
    %v267 = vpack.c.b16 %v251, %v251
    %284 = vst [vmem:[%s3] sm:$0xf] %v252
    %285 = vst [vmem:[%s3 + $0x4] sm:$0xf] %v253
    %286 = vst [vmem:[%s3 + $0x8] sm:$0xf] %v254
    %287 = vst [vmem:[%s3 + $0xc] sm:$0xf] %v255
    %288 = vst [vmem:[%s3 + $0x10] sm:$0xf] %v256
    %289 = vst [vmem:[%s3 + $0x14] sm:$0xf] %v257
    %290 = vst [vmem:[%s3 + $0x18] sm:$0xf] %v258
    %291 = vst [vmem:[%s3 + $0x1c] sm:$0xf] %v259
    %292 = vst [vmem:[%s3 + $0x20] sm:$0xf] %v260
    %293 = vst [vmem:[%s3 + $0x24] sm:$0xf] %v261
    %294 = vst [vmem:[%s3 + $0x28] sm:$0xf] %v262
    %295 = vst [vmem:[%s3 + $0x2c] sm:$0xf] %v263
    %296 = vst [vmem:[%s3 + $0x30] sm:$0xf] %v264
    %297 = vst [vmem:[%s3 + $0x34] sm:$0xf] %v265
    %298 = vst [vmem:[%s3 + $0x38] sm:$0xf] %v266
    %299 = vst [vmem:[%s3 + $0x3c] sm:$0xf] %v267
    // Predicated region
    $region18: #{downsample_forward.3} parent=1 // pred_check
      _
    $region19: #{downsample_forward.3} parent=1 // pred_check_branch
      %301 = sbr.rel (0) target = $region21
    $region20: #{downsample_forward.3} parent=1 // pred_region
      _
    $region21: #{downsample_forward.3} parent=1 // pred_fallthru
      _
    // Predicated region
    $region22: #{downsample_forward.3} parent=1 // pred_check
      _
    $region23: #{downsample_forward.3} parent=1 // pred_check_branch
      %303 = sbr.rel (0) target = $region25
    $region24: #{downsample_forward.3} parent=1 // pred_region
      _
    $region25: #{downsample_forward.3} parent=1 // pred_fallthru
      _
    %304 = vsyncpa [#allocation3], 1

// kernel: downsample_forward.4
$region0: #{downsample_forward.4}
  #allocation0 [shape = 'u32[]', space=smem, size = 0x4, offset = 0x4, fixed_abs, tag = 'smem constant byte address 0x4 - core index']
  #allocation1 [shape = 'u32[144,128]{1,0:T(1,128)}', space=vmem, size = 0x12000, scoped, tag = 'internal scratch']
  #allocation2 [shape = 'bf16[10,8,384]{2,1,0:T(8,128)(2,1)}', space=vmem, size = 0xf000, scoped, tag = 'scratch operand']
  %s0 = inlined_call_operand.vmem [shape: bf16[2,8,8,128], index: 0, kind: input, shape index: {}]
  %s1 = inlined_call_operand.vmem [shape: f32[1,128], index: 1, kind: input, shape index: {}]
  %s2 = inlined_call_operand.vmem [shape: f32[1,128], index: 2, kind: input, shape index: {}]
  %s3 = inlined_call_operand.vmem [shape: bf16[128,128], index: 3, kind: input, shape index: {}]
  %s4 = inlined_call_operand.vmem [shape: bf16[3,384,128], index: 4, kind: input, shape index: {}]
  %s5 = inlined_call_operand.vmem [shape: f32[1,128], index: 5, kind: input, shape index: {}]
  %s6 = inlined_call_operand.vmem [shape: bf16[2,8,8,128], index: 6, kind: output, shape index: {}]
  %s7 = sld [smem:[#allocation0]]
  $region57: #{downsample_forward.4} parent=0
    _
  %s9 = ssub.s32 1, %s7
  %s10 = scalar_select 0, %s9, %s7
  loop: start=0, step=1, limit=4
  $region2: #{downsample_forward.4} parent=0 // loop_pre_header
    _
  $region3: #{downsample_forward.4} parent=0 // loop_header
    %s12 = sphi 0, %s16
    %p13 = scmp.ge.s32.totalorder %s12, 4
    %s22 = sphi 0, %s24
    %s25 = sphi 0, %s22
    %s26 = sphi 0, %s25
    %s42 = sphi 0, %s26
    %s46 = sphi 0, %s46
    %s48 = sphi 0, %s46
    %s49 = sphi 0, %s48
    %s63 = sphi 0, %s49
    %s67 = sphi 0, %s67
    %s69 = sphi 0, %s67
    %s70 = sphi 0, %s69
    %s84 = sphi 0, %s70
    %s88 = sphi 0, %s88
    %s90 = sphi 0, %s88
    %s91 = sphi 0, %s90
    %s105 = sphi 0, %s91
    %s109 = sphi 0, %s109
    %s111 = sphi 0, %s109
    %s112 = sphi 0, %s111
    %s126 = sphi 0, %s112
    %s130 = sphi 0, %s130
    %s132 = sphi 0, %s130
    %s133 = sphi 0, %s132
    %s147 = sphi 0, %s133
    %s153 = sphi 0, %s155
    %s156 = sphi 0, %s153
    %s157 = sphi 0, %s156
    %s173 = sphi 0, %s157
  $region4: #{downsample_forward.4} parent=0 // loop_header_branch
    %15 = sbr.rel (%p13) target = $region8
  $region5: #{downsample_forward.4} parent=0 // loop_body
    %s17 = ssub.s32 %s12, 1
    %s18 = ssub.s32 %s12, 2
    %s19 = sadd.s32 %s12, 1
    %s20 = ssub.s32 %s12, %s19
    %p21 = scmp.eq.s32.totalorder %s20, 0
    %s23 = sadd.s32 %s22, 1
    %s24 = scalar_select %p21, %s22, %s23
    %p27 = pneg %p21
    %p28 = scmp.eq.s32.totalorder %s12, 1
    %p29 = por %p27, %p28
    %p30 = scmp.ne.s32.totalorder %s22, %s25
    %p31 = scmp.eq.s32.totalorder %s12, 0
    %p32 = por %p30, %p31
    %p33 = scmp.ne.s32.totalorder %s22, %s25
    %p34 = scmp.eq.s32.totalorder %s17, 1
    %p35 = por %p33, %p34
    %p36 = scmp.ne.s32.totalorder %s25, %s26
    %p37 = scmp.eq.s32.totalorder %s17, 0
    %p38 = por %p36, %p37
    %p39 = scmp.ne.s32.totalorder %s25, %s26
    %p40 = scmp.eq.s32.totalorder %s18, 1
    %p41 = por %p39, %p40
    %p43 = scmp.ne.s32.totalorder %s26, %s42
    %p44 = scmp.eq.s32.totalorder %s18, 0
    %p45 = por %p43, %p44
    %s47 = sadd.s32 %s46, 1
    %p50 = scmp.eq.s32.totalorder %s12, 1
    %p51 = scmp.ne.s32.totalorder %s46, %s48
    %p52 = scmp.eq.s32.totalorder %s12, 0
    %p53 = por %p51, %p52
    %p54 = scmp.ne.s32.totalorder %s46, %s48
    %p55 = scmp.eq.s32.totalorder %s17, 1
    %p56 = por %p54, %p55
    %p57 = scmp.ne.s32.totalorder %s48, %s49
    %p58 = scmp.eq.s32.totalorder %s17, 0
    %p59 = por %p57, %p58
    %p60 = scmp.ne.s32.totalorder %s48, %s49
    %p61 = scmp.eq.s32.totalorder %s18, 1
    %p62 = por %p60, %p61
    %p64 = scmp.ne.s32.totalorder %s49, %s63
    %p65 = scmp.eq.s32.totalorder %s18, 0
    %p66 = por %p64, %p65
    %s68 = sadd.s32 %s67, 1
    %p71 = scmp.eq.s32.totalorder %s12, 1
    %p72 = scmp.ne.s32.totalorder %s67, %s69
    %p73 = scmp.eq.s32.totalorder %s12, 0
    %p74 = por %p72, %p73
    %p75 = scmp.ne.s32.totalorder %s67, %s69
    %p76 = scmp.eq.s32.totalorder %s17, 1
    %p77 = por %p75, %p76
    %p78 = scmp.ne.s32.totalorder %s69, %s70
    %p79 = scmp.eq.s32.totalorder %s17, 0
    %p80 = por %p78, %p79
    %p81 = scmp.ne.s32.totalorder %s69, %s70
    %p82 = scmp.eq.s32.totalorder %s18, 1
    %p83 = por %p81, %p82
    %p85 = scmp.ne.s32.totalorder %s70, %s84
    %p86 = scmp.eq.s32.totalorder %s18, 0
    %p87 = por %p85, %p86
    %s89 = sadd.s32 %s88, 1
    %p92 = scmp.eq.s32.totalorder %s12, 1
    %p93 = scmp.ne.s32.totalorder %s88, %s90
    %p94 = scmp.eq.s32.totalorder %s12, 0
    %p95 = por %p93, %p94
    %p96 = scmp.ne.s32.totalorder %s88, %s90
    %p97 = scmp.eq.s32.totalorder %s17, 1
    %p98 = por %p96, %p97
    %p99 = scmp.ne.s32.totalorder %s90, %s91
    %p100 = scmp.eq.s32.totalorder %s17, 0
    %p101 = por %p99, %p100
    %p102 = scmp.ne.s32.totalorder %s90, %s91
    %p103 = scmp.eq.s32.totalorder %s18, 1
    %p104 = por %p102, %p103
    %p106 = scmp.ne.s32.totalorder %s91, %s105
    %p107 = scmp.eq.s32.totalorder %s18, 0
    %p108 = por %p106, %p107
    %s110 = sadd.s32 %s109, 1
    %p113 = scmp.eq.s32.totalorder %s12, 1
    %p114 = scmp.ne.s32.totalorder %s109, %s111
    %p115 = scmp.eq.s32.totalorder %s12, 0
    %p116 = por %p114, %p115
    %p117 = scmp.ne.s32.totalorder %s109, %s111
    %p118 = scmp.eq.s32.totalorder %s17, 1
    %p119 = por %p117, %p118
    %p120 = scmp.ne.s32.totalorder %s111, %s112
    %p121 = scmp.eq.s32.totalorder %s17, 0
    %p122 = por %p120, %p121
    %p123 = scmp.ne.s32.totalorder %s111, %s112
    %p124 = scmp.eq.s32.totalorder %s18, 1
    %p125 = por %p123, %p124
    %p127 = scmp.ne.s32.totalorder %s112, %s126
    %p128 = scmp.eq.s32.totalorder %s18, 0
    %p129 = por %p127, %p128
    %s131 = sadd.s32 %s130, 1
    %p134 = scmp.eq.s32.totalorder %s12, 1
    %p135 = scmp.ne.s32.totalorder %s130, %s132
    %p136 = scmp.eq.s32.totalorder %s12, 0
    %p137 = por %p135, %p136
    %p138 = scmp.ne.s32.totalorder %s130, %s132
    %p139 = scmp.eq.s32.totalorder %s17, 1
    %p140 = por %p138, %p139
    %p141 = scmp.ne.s32.totalorder %s132, %s133
    %p142 = scmp.eq.s32.totalorder %s17, 0
    %p143 = por %p141, %p142
    %p144 = scmp.ne.s32.totalorder %s132, %s133
    %p145 = scmp.eq.s32.totalorder %s18, 1
    %p146 = por %p144, %p145
    %p148 = scmp.ne.s32.totalorder %s133, %s147
    %p149 = scmp.eq.s32.totalorder %s18, 0
    %p150 = por %p148, %p149
    %s151 = ssub.s32 %s12, %s19
    %p152 = scmp.eq.s32.totalorder %s151, 0
    %s154 = sadd.s32 %s153, 1
    %s155 = scalar_select %p152, %s153, %s154
    %p158 = pneg %p152
    %p159 = scmp.eq.s32.totalorder %s12, 1
    %p160 = por %p158, %p159
    %p161 = scmp.ne.s32.totalorder %s153, %s156
    %p162 = scmp.eq.s32.totalorder %s12, 0
    %p163 = por %p161, %p162
    %p164 = scmp.ne.s32.totalorder %s153, %s156
    %p165 = scmp.eq.s32.totalorder %s17, 1
    %p166 = por %p164, %p165
    %p167 = scmp.ne.s32.totalorder %s156, %s157
    %p168 = scmp.eq.s32.totalorder %s17, 0
    %p169 = por %p167, %p168
    %p170 = scmp.ne.s32.totalorder %s156, %s157
    %p171 = scmp.eq.s32.totalorder %s18, 1
    %p172 = por %p170, %p171
    %p174 = scmp.ne.s32.totalorder %s157, %s173
    %p175 = scmp.eq.s32.totalorder %s18, 0
    %p176 = por %p174, %p175
    %p177 = scmp.le.s32.totalorder 1, %s12
    %p178 = scmp.lt.s32.totalorder %s12, 3
    %p179 = pnand %p177, %p178
    %p180 = pneg %p179
    // Predicated region
    $region9: #{downsample_forward.4} parent=5 // pred_check
      _
    $region10: #{downsample_forward.4} parent=5 // pred_check_branch
      %182 = sbr.rel (%p179) target = $region12
    $region11: #{downsample_forward.4} parent=5 // pred_region
      %s183 = ssub.s32 %s12, 1
      // Predicated region
      $region13: #{downsample_forward.4} parent=11 // pred_check
        %p184 = pneg %p59
      $region14: #{downsample_forward.4} parent=11 // pred_check_branch
        %186 = sbr.rel (%p184) target = $region16
      $region15: #{downsample_forward.4} parent=11 // pred_region
        _
      $region16: #{downsample_forward.4} parent=11 // pred_fallthru
        _
      // Predicated region
      $region17: #{downsample_forward.4} parent=11 // pred_check
        %p187 = pneg %p80
      $region18: #{downsample_forward.4} parent=11 // pred_check_branch
        %189 = sbr.rel (%p187) target = $region20
      $region19: #{downsample_forward.4} parent=11 // pred_region
        _
      $region20: #{downsample_forward.4} parent=11 // pred_fallthru
        _
      // Predicated region
      $region21: #{downsample_forward.4} parent=11 // pred_check
        %p190 = pneg %p101
      $region22: #{downsample_forward.4} parent=11 // pred_check_branch
        %192 = sbr.rel (%p190) target = $region24
      $region23: #{downsample_forward.4} parent=11 // pred_region
        _
      $region24: #{downsample_forward.4} parent=11 // pred_fallthru
        _
      // Predicated region
      $region25: #{downsample_forward.4} parent=11 // pred_check
        %p193 = pneg %p122
      $region26: #{downsample_forward.4} parent=11 // pred_check_branch
        %195 = sbr.rel (%p193) target = $region28
      $region27: #{downsample_forward.4} parent=11 // pred_region
        _
      $region28: #{downsample_forward.4} parent=11 // pred_fallthru
        _
      // Predicated region
      $region29: #{downsample_forward.4} parent=11 // pred_check
        %p196 = pneg %p143
      $region30: #{downsample_forward.4} parent=11 // pred_check_branch
        %198 = sbr.rel (%p196) target = $region32
      $region31: #{downsample_forward.4} parent=11 // pred_region
        _
      $region32: #{downsample_forward.4} parent=11 // pred_fallthru
        _
    $region12: #{downsample_forward.4} parent=5 // pred_fallthru
      _
    %p199 = scmp.lt.s32.totalorder %s12, 2
    // Predicated region
    $region33: #{downsample_forward.4} parent=5 // pred_check
      %p200 = pneg %p199
    $region34: #{downsample_forward.4} parent=5 // pred_check_branch
      %202 = sbr.rel (%p200) target = $region36
    $region35: #{downsample_forward.4} parent=5 // pred_region
      // Predicated region
      $region37: #{downsample_forward.4} parent=35 // pred_check
        %p203 = pneg %p32
      $region38: #{downsample_forward.4} parent=35 // pred_check_branch
        %205 = sbr.rel (%p203) target = $region40
      $region39: #{downsample_forward.4} parent=35 // pred_region
        %p206 = scmp.lt.s32.totalorder %s12, 1
        %s207 = scalar_select %p206, %s12, 1
        %s208 = smul.addr %s207, 8
        %s209 = smul.addr %s208, 4
        %s210 = scalar_lea.vmem %s0, %s209
      $region40: #{downsample_forward.4} parent=35 // pred_fallthru
        _
    $region36: #{downsample_forward.4} parent=5 // pred_fallthru
      _
    %p211 = scmp.le.s32.totalorder 1, %s12
    %p212 = scmp.lt.s32.totalorder %s12, 3
    %p213 = pnand %p211, %p212
    %p214 = pneg %p213
    // Predicated region
    $region41: #{downsample_forward.4} parent=5 // pred_check
      _
    $region42: #{downsample_forward.4} parent=5 // pred_check_branch
      %216 = sbr.rel (%p213) target = $region44
    $region43: #{downsample_forward.4} parent=5 // pred_region
      %s217 = ssub.s32 %s12, 1
      %p218 = scmp.lt.s32.totalorder %s17, 1
      %s219 = scalar_select %p218, %s17, 1
      %s220 = smul.addr %s219, 8
      %s221 = smul.addr %s220, 4
      %s222 = scalar_lea.vmem %s0, %s221
      %p223 = pneg %p38
      %p224 = pneg %p35
      %p225 = pneg %p59
      %p226 = pneg %p56
      %p227 = pneg %p80
      %p228 = pneg %p77
      %p229 = pneg %p101
      %p230 = pneg %p98
      %p231 = pneg %p122
      %p232 = pneg %p119
      %p233 = pneg %p143
      %p234 = pneg %p140
      %p235 = pneg %p169
      %p236 = pneg %p166
      %p237 = scmp.lt.s32.totalorder %s17, 1
      %s238 = scalar_select %p237, %s17, 1
      %s239 = smul.addr %s238, 8
      %s240 = smul.addr %s239, 4
      %s241 = scalar_lea.vmem %s6, %s240
      %p242 = scmp.lt.s32.totalorder %s17, 1
      %s243 = scalar_select %p242, %s17, 1
      %s244 = smul.addr %s243, 8
      %s245 = smul.addr %s244, 4
      %s246 = scalar_lea.vmem %s0, %s245
      %p247 = scmp.lt.s32.totalorder %s17, 1
      %s248 = scalar_select %p247, %s17, 1
      %s249 = smul.addr %s248, 8
      %s250 = smul.addr %s249, 4
      %s251 = scalar_lea.vmem %s6, %s250
      %v253 = vld [vmem:[%s246] sm:$0xf]
      %v254 = vld [vmem:[%s246 + $0x4] sm:$0xf]
      %v255 = vld [vmem:[%s246 + $0x8] sm:$0xf]
      %v256 = vld [vmem:[%s246 + $0xc] sm:$0xf]
      %v257 = vld [vmem:[%s246 + $0x10] sm:$0xf]
      %v258 = vld [vmem:[%s246 + $0x14] sm:$0xf]
      %v259 = vld [vmem:[%s246 + $0x18] sm:$0xf]
      %v260 = vld [vmem:[%s246 + $0x1c] sm:$0xf]
      %v261 = vunpack.c.l.bf16 %v253
      %v262 = vunpack.c.l.bf16 %v254
      %v263 = vunpack.c.l.bf16 %v255
      %v264 = vunpack.c.l.bf16 %v256
      %v265 = vunpack.c.l.bf16 %v257
      %v266 = vunpack.c.l.bf16 %v258
      %v267 = vunpack.c.l.bf16 %v259
      %v268 = vunpack.c.l.bf16 %v260
      %v269 = vadd.f32 %v261, %v262
      %v270 = vadd.f32 %v269, %v263
      %v271 = vadd.f32 %v270, %v264
      %v272 = vadd.f32 %v271, %v265
      %v273 = vadd.f32 %v272, %v266
      %v274 = vadd.f32 %v273, %v267
      %v275 = vadd.f32 %v274, %v268
      %v276 = vrot.slane %v275, 4
      %v277 = vadd.f32 %v275, %v276
      %v278 = vrot.slane %v277, 2
      %v279 = vadd.f32 %v277, %v278
      %v280 = vrot.slane %v279, 1
      %v281 = vadd.f32 %v279, %v280
      %v282 = vpack.c.bf16 %v281, %v281
      %v283 = vld [vmem:[%s3] sm:$0xf]
      %v284 = vld [vmem:[%s3 + $0x4] sm:$0xf]
      %v285 = vld [vmem:[%s3 + $0x8] sm:$0xf]
      %v286 = vld [vmem:[%s3 + $0xc] sm:$0xf]
      %v287 = vld [vmem:[%s3 + $0x10] sm:$0xf]
      %v288 = vld [vmem:[%s3 + $0x14] sm:$0xf]
      %v289 = vld [vmem:[%s3 + $0x18] sm:$0xf]
      %v290 = vld [vmem:[%s3 + $0x1c] sm:$0xf]
      %v291 = vld [vmem:[%s3 + $0x20] sm:$0xf]
      %v292 = vld [vmem:[%s3 + $0x24] sm:$0xf]
      %v293 = vld [vmem:[%s3 + $0x28] sm:$0xf]
      %v294 = vld [vmem:[%s3 + $0x2c] sm:$0xf]
      %v295 = vld [vmem:[%s3 + $0x30] sm:$0xf]
      %v296 = vld [vmem:[%s3 + $0x34] sm:$0xf]
      %v297 = vld [vmem:[%s3 + $0x38] sm:$0xf]
      %v298 = vld [vmem:[%s3 + $0x3c] sm:$0xf]
      %v315 = vunpack.c.l.b16 %v283
      %v316 = vunpack.c.l.b16 %v284
      %v317 = vunpack.c.l.b16 %v285
      %v318 = vunpack.c.l.b16 %v286
      %v319 = vunpack.c.l.b16 %v287
      %v320 = vunpack.c.l.b16 %v288
      %v321 = vunpack.c.l.b16 %v289
      %v322 = vunpack.c.l.b16 %v290
      %v323 = vunpack.c.l.b16 %v291
      %v324 = vunpack.c.l.b16 %v292
      %v325 = vunpack.c.l.b16 %v293
      %v326 = vunpack.c.l.b16 %v294
      %v327 = vunpack.c.l.b16 %v295
      %v328 = vunpack.c.l.b16 %v296
      %v329 = vunpack.c.l.b16 %v297
      %v330 = vunpack.c.l.b16 %v298
      %v331 = vpack.c.b16 %v316, %v315
      %v332 = vpack.c.b16 %v318, %v317
      %v333 = vpack.c.b16 %v320, %v319
      %v334 = vpack.c.b16 %v322, %v321
      %v335 = vpack.c.b16 %v324, %v323
      %v336 = vpack.c.b16 %v326, %v325
      %v337 = vpack.c.b16 %v328, %v327
      %v338 = vpack.c.b16 %v330, %v329
      %347 = vmatprep.subr.bf16.mxu0 0
      %348 = vmatpush1.bf16.msra.mxu0 %v331
      %349 = vmatprep.subr.bf16.mxu0 0
      %350 = vmatpush1.bf16.msra.mxu0 %v332
      %351 = vmatprep.subr.bf16.mxu0 0
      %352 = vmatpush1.bf16.msra.mxu0 %v333
      %353 = vmatprep.subr.bf16.mxu0 0
      %354 = vmatpush1.bf16.msra.mxu0 %v334
      %355 = vmatprep.subr.bf16.mxu0 0
      %356 = vmatpush1.bf16.msra.mxu0 %v335
      %357 = vmatprep.subr.bf16.mxu0 0
      %358 = vmatpush1.bf16.msra.mxu0 %v336
      %359 = vmatprep.subr.bf16.mxu0 0
      %360 = vmatpush1.bf16.msra.mxu0 %v337
      %361 = vmatprep.subr.bf16.mxu0 0
      %362 = vmatpush1.bf16.msra.mxu0 %v338
      %363 = vmatprep.subr.bf16.mxu0 0
      %364 = vmatpush1.bf16.msra.mxu0 0
      %365 = vmatprep.subr.bf16.mxu0 0
      %366 = vmatpush1.bf16.msra.mxu0 0
      %367 = vmatprep.subr.bf16.mxu0 0
      %368 = vmatpush1.bf16.msra.mxu0 0
      %369 = vmatprep.subr.bf16.mxu0 0
      %370 = vmatpush1.bf16.msra.mxu0 0
      %371 = vmatprep.subr.bf16.mxu0 0
      %372 = vmatpush1.bf16.msra.mxu0 0
      %373 = vmatprep.subr.bf16.mxu0 0
      %374 = vmatpush1.bf16.msra.mxu0 0
      %375 = vmatprep.subr.bf16.mxu0 0
      %376 = vmatpush1.bf16.msra.mxu0 0
      %377 = vmatprep.subr.bf16.mxu0 0
      %378 = vmatpush1.bf16.msra.mxu0 0
      %379 = vmatprep.mubr.bf16.mxu0 0
      %380 = vmatmul.mubr.bf16.gmra.mrb[0].mxu0 %v282
      %v381 = vpop.f32.mrb[0].mxu0
      %v382 = vadd.f32 0.0, %v381
      %v383 = vpop.f32.mrb[0].mxu0
      %v384 = vpop.f32.mrb[0].mxu0
      %v385 = vpop.f32.mrb[0].mxu0
      %386 = vdwg.mxu0
      %v387 = vmul.f32 %v382, 0.0009765625
      %v388 = vlaneseq
      %v389 = vshrl.u32 %v388, 7
      %v390 = vsub.s32 0, %v389
      %v391 = vrot.slane %v387, %v390
      %v392 = vsub.f32 %v261, %v391
      %v393 = vsub.f32 %v262, %v391
      %v394 = vsub.f32 %v263, %v391
      %v395 = vsub.f32 %v264, %v391
      %v396 = vsub.f32 %v265, %v391
      %v397 = vsub.f32 %v266, %v391
      %v398 = vsub.f32 %v267, %v391
      %v399 = vsub.f32 %v268, %v391
      %v400 = vmul.f32 %v392, %v392
      %v401 = vmul.f32 %v393, %v393
      %v402 = vmul.f32 %v394, %v394
      %v403 = vmul.f32 %v395, %v395
      %v404 = vmul.f32 %v396, %v396
      %v405 = vmul.f32 %v397, %v397
      %v406 = vmul.f32 %v398, %v398
      %v407 = vmul.f32 %v399, %v399
      %v408 = vadd.f32 %v400, %v401
      %v409 = vadd.f32 %v408, %v402
      %v410 = vadd.f32 %v409, %v403
      %v411 = vadd.f32 %v410, %v404
      %v412 = vadd.f32 %v411, %v405
      %v413 = vadd.f32 %v412, %v406
      %v414 = vadd.f32 %v413, %v407
      %v415 = vrot.slane %v414, 4
      %v416 = vadd.f32 %v414, %v415
      %v417 = vrot.slane %v416, 2
      %v418 = vadd.f32 %v416, %v417
      %v419 = vrot.slane %v418, 1
      %v420 = vadd.f32 %v418, %v419
      %v421 = vpack.c.bf16 %v420, %v420
      %422 = vmatprep.subr.bf16.mxu0 0
      %423 = vmatpush1.bf16.msra.mxu0 %v331
      %424 = vmatprep.subr.bf16.mxu0 0
      %425 = vmatpush1.bf16.msra.mxu0 %v332
      %426 = vmatprep.subr.bf16.mxu0 0
      %427 = vmatpush1.bf16.msra.mxu0 %v333
      %428 = vmatprep.subr.bf16.mxu0 0
      %429 = vmatpush1.bf16.msra.mxu0 %v334
      %430 = vmatprep.subr.bf16.mxu0 0
      %431 = vmatpush1.bf16.msra.mxu0 %v335
      %432 = vmatprep.subr.bf16.mxu0 0
      %433 = vmatpush1.bf16.msra.mxu0 %v336
      %434 = vmatprep.subr.bf16.mxu0 0
      %435 = vmatpush1.bf16.msra.mxu0 %v337
      %436 = vmatprep.subr.bf16.mxu0 0
      %437 = vmatpush1.bf16.msra.mxu0 %v338
      %438 = vmatprep.subr.bf16.mxu0 0
      %439 = vmatpush1.bf16.msra.mxu0 0
      %440 = vmatprep.subr.bf16.mxu0 0
      %441 = vmatpush1.bf16.msra.mxu0 0
      %442 = vmatprep.subr.bf16.mxu0 0
      %443 = vmatpush1.bf16.msra.mxu0 0
      %444 = vmatprep.subr.bf16.mxu0 0
      %445 = vmatpush1.bf16.msra.mxu0 0
      %446 = vmatprep.subr.bf16.mxu0 0
      %447 = vmatpush1.bf16.msra.mxu0 0
      %448 = vmatprep.subr.bf16.mxu0 0
      %449 = vmatpush1.bf16.msra.mxu0 0
      %450 = vmatprep.subr.bf16.mxu0 0
      %451 = vmatpush1.bf16.msra.mxu0 0
      %452 = vmatprep.subr.bf16.mxu0 0
      %453 = vmatpush1.bf16.msra.mxu0 0
      %454 = vmatprep.mubr.bf16.mxu0 0
      %455 = vmatmul.mubr.bf16.gmra.mrb[0].mxu0 %v421
      %v456 = vpop.f32.mrb[0].mxu0
      %v457 = vadd.f32 0.0, %v456
      %v458 = vpop.f32.mrb[0].mxu0
      %v459 = vpop.f32.mrb[0].mxu0
      %v460 = vpop.f32.mrb[0].mxu0
      %461 = vdwg.mxu0
      %v462 = vmul.f32 %v457, 0.0009765625
      %v463 = vadd.f32 %v462, 1e-05
      %v464 = vrsqrt.pop %v463
      %v465 = vld [vmem:[%s1] sm:$0x1]
      %v466 = vmul.f32 %v464, %v465
      %v467 = vlaneseq
      %v468 = vshrl.u32 %v467, 7
      %v469 = vsub.s32 0, %v468
      %v470 = vrot.slane %v466, %v469
      %v471 = vmul.f32 %v392, %v470
      %v472 = vmul.f32 %v393, %v470
      %v473 = vmul.f32 %v394, %v470
      %v474 = vmul.f32 %v395, %v470
      %v475 = vmul.f32 %v396, %v470
      %v476 = vmul.f32 %v397, %v470
      %v477 = vmul.f32 %v398, %v470
      %v478 = vmul.f32 %v399, %v470
      %v479 = vld [vmem:[%s2] sm:$0x1]
      %v481 = vlaneseq
      %v482 = vshrl.u32 %v481, 7
      %v483 = vsub.s32 0, %v482
      %v484 = vrot.slane %v479, %v483
      %v486 = vadd.f32 %v471, %v484
      %v487 = vadd.f32 %v472, %v484
      %v488 = vadd.f32 %v473, %v484
      %v489 = vadd.f32 %v474, %v484
      %v490 = vadd.f32 %v475, %v484
      %v491 = vadd.f32 %v476, %v484
      %v492 = vadd.f32 %v477, %v484
      %v493 = vadd.f32 %v478, %v484
      %v494 = vxor.u32 %v486, 2147483648
      %v495 = vxor.u32 %v487, 2147483648
      %v496 = vxor.u32 %v488, 2147483648
      %v497 = vxor.u32 %v489, 2147483648
      %v498 = vxor.u32 %v490, 2147483648
      %v499 = vxor.u32 %v491, 2147483648
      %v500 = vxor.u32 %v492, 2147483648
      %v501 = vxor.u32 %v493, 2147483648
      %v502 = vmul.f32 %v494, 1.442695
      %v503 = vpow.pop %v502
      %v504 = vmul.f32 %v495, 1.442695
      %v505 = vpow.pop %v504
      %v506 = vmul.f32 %v496, 1.442695
      %v507 = vpow.pop %v506
      %v508 = vmul.f32 %v497, 1.442695
      %v509 = vpow.pop %v508
      %v510 = vmul.f32 %v498, 1.442695
      %v511 = vpow.pop %v510
      %v512 = vmul.f32 %v499, 1.442695
      %v513 = vpow.pop %v512
      %v514 = vmul.f32 %v500, 1.442695
      %v515 = vpow.pop %v514
      %v516 = vmul.f32 %v501, 1.442695
      %v517 = vpow.pop %v516
      %v518 = vadd.f32 %v503, 1.0
      %v519 = vadd.f32 %v505, 1.0
      %v520 = vadd.f32 %v507, 1.0
      %v521 = vadd.f32 %v509, 1.0
      %v522 = vadd.f32 %v511, 1.0
      %v523 = vadd.f32 %v513, 1.0
      %v524 = vadd.f32 %v515, 1.0
      %v525 = vadd.f32 %v517, 1.0
      %v526 = vrcp.pop %v518
      %v527 = vmul.f32 1.0, %v526
      %v528 = vrcp.pop %v519
      %v529 = vmul.f32 1.0, %v528
      %v530 = vrcp.pop %v520
      %v531 = vmul.f32 1.0, %v530
      %v532 = vrcp.pop %v521
      %v533 = vmul.f32 1.0, %v532
      %v534 = vrcp.pop %v522
      %v535 = vmul.f32 1.0, %v534
      %v536 = vrcp.pop %v523
      %v537 = vmul.f32 1.0, %v536
      %v538 = vrcp.pop %v524
      %v539 = vmul.f32 1.0, %v538
      %v540 = vrcp.pop %v525
      %v541 = vmul.f32 1.0, %v540
      %v542 = vmul.f32 %v486, %v527
      %v543 = vmul.f32 %v487, %v529
      %v544 = vmul.f32 %v488, %v531
      %v545 = vmul.f32 %v489, %v533
      %v546 = vmul.f32 %v490, %v535
      %v547 = vmul.f32 %v491, %v537
      %v548 = vmul.f32 %v492, %v539
      %v549 = vmul.f32 %v493, %v541
      %v550 = vpack.c.bf16 %v543, %v542
      %v551 = vpack.c.bf16 %v545, %v544
      %v552 = vpack.c.bf16 %v547, %v546
      %v553 = vpack.c.bf16 %v549, %v548
      %v558 = vunpack.c.l.b16 %v550
      %v559 = vunpack.c.h.b16 %v550
      %v560 = vunpack.c.l.b16 %v551
      %v561 = vunpack.c.h.b16 %v551
      %v562 = vunpack.c.l.b16 %v552
      %v563 = vunpack.c.h.b16 %v552
      %v564 = vunpack.c.l.b16 %v553
      %v565 = vunpack.c.h.b16 %v553
      %v566 = vpack.c.b16 %v558, %v558
      %v567 = vpack.c.b16 %v559, %v559
      %v568 = vpack.c.b16 %v560, %v560
      %v569 = vpack.c.b16 %v561, %v561
      %v570 = vpack.c.b16 %v562, %v562
      %v571 = vpack.c.b16 %v563, %v563
      %v572 = vpack.c.b16 %v564, %v564
      %v573 = vpack.c.b16 %v565, %v565
      %582 = vst [vmem:[#allocation2] sm:$0xff] 0
      %583 = vst [vmem:[#allocation2 + $0x8] sm:$0xf] 0
      %s584 = scalar_lea.vmem [#allocation2], 108
      %585 = vst [vmem:[%s584] sm:$0xff] 0
      %586 = vst [vmem:[%s584 + $0x8] sm:$0xf] 0
      %s587 = scalar_lea.vmem [#allocation2], 12
      %588 = vst [vmem:[%s587 + $0x4] sm:$0xf] %v566
      %589 = vst [vmem:[%s587 + $0x10] sm:$0xf] %v567
      %590 = vst [vmem:[%s587 + $0x1c] sm:$0xf] %v568
      %591 = vst [vmem:[%s587 + $0x28] sm:$0xf] %v569
      %592 = vst [vmem:[%s587 + $0x34] sm:$0xf] %v570
      %593 = vst [vmem:[%s587 + $0x40] sm:$0xf] %v571
      %594 = vst [vmem:[%s587 + $0x4c] sm:$0xf] %v572
      %595 = vst [vmem:[%s587 + $0x58] sm:$0xf] %v573
      %vm596 = vcmask 1040384
      %vm597 = vsmask.f32 256
      %vm598 = vmand %vm596, %vm597
      %v599 = vld [vmem:[%s587] sm:$0x1]
      %v600 = vsel %vm598, 0, %v599
      %601 = vst [vmem:[%s587] sm:$0x1] %v600
      %v602 = vld [vmem:[%s587 + $0xc] sm:$0x1]
      %v603 = vsel %vm598, 0, %v602
      %604 = vst [vmem:[%s587 + $0xc] sm:$0x1] %v603
      %v605 = vld [vmem:[%s587 + $0x18] sm:$0x1]
      %v606 = vsel %vm598, 0, %v605
      %607 = vst [vmem:[%s587 + $0x18] sm:$0x1] %v606
      %v608 = vld [vmem:[%s587 + $0x24] sm:$0x1]
      %v609 = vsel %vm598, 0, %v608
      %610 = vst [vmem:[%s587 + $0x24] sm:$0x1] %v609
      %v611 = vld [vmem:[%s587 + $0x30] sm:$0x1]
      %v612 = vsel %vm598, 0, %v611
      %613 = vst [vmem:[%s587 + $0x30] sm:$0x1] %v612
      %v614 = vld [vmem:[%s587 + $0x3c] sm:$0x1]
      %v615 = vsel %vm598, 0, %v614
      %616 = vst [vmem:[%s587 + $0x3c] sm:$0x1] %v615
      %v617 = vld [vmem:[%s587 + $0x48] sm:$0x1]
      %v618 = vsel %vm598, 0, %v617
      %619 = vst [vmem:[%s587 + $0x48] sm:$0x1] %v618
      %v620 = vld [vmem:[%s587 + $0x54] sm:$0x1]
      %v621 = vsel %vm598, 0, %v620
      %622 = vst [vmem:[%s587 + $0x54] sm:$0x1] %v621
      %v624 = vshrl.u32 %v566, 16
      %v626 = vrot.slane %v624, 7
      %v627 = vshll.u32 %v566, 16
      %v629 = vor.u32 %v626, %v627
      %v631 = vshrl.u32 %v567, 16
      %v633 = vrot.slane %v631, 7
      %v634 = vshll.u32 %v567, 16
      %v636 = vor.u32 %v633, %v634
      %v638 = vshrl.u32 %v568, 16
      %v640 = vrot.slane %v638, 7
      %v641 = vshll.u32 %v568, 16
      %v643 = vor.u32 %v640, %v641
      %v645 = vshrl.u32 %v569, 16
      %v647 = vrot.slane %v645, 7
      %v648 = vshll.u32 %v569, 16
      %v650 = vor.u32 %v647, %v648
      %v652 = vshrl.u32 %v570, 16
      %v654 = vrot.slane %v652, 7
      %v655 = vshll.u32 %v570, 16
      %v657 = vor.u32 %v654, %v655
      %v659 = vshrl.u32 %v571, 16
      %v661 = vrot.slane %v659, 7
      %v662 = vshll.u32 %v571, 16
      %v664 = vor.u32 %v661, %v662
      %v666 = vshrl.u32 %v572, 16
      %v668 = vrot.slane %v666, 7
      %v669 = vshll.u32 %v572, 16
      %v671 = vor.u32 %v668, %v669
      %v673 = vshrl.u32 %v573, 16
      %v675 = vrot.slane %v673, 7
      %v676 = vshll.u32 %v573, 16
      %v678 = vor.u32 %v675, %v676
      %vm687 = vcmask 1043456
      %vm688 = vsmask.f32 7938
      %vm689 = vmand %vm687, %vm688
      %v690 = vld [vmem:[%s587] sm:$0xf]
      %v691 = vsel %vm689, %v629, %v690
      %692 = vst [vmem:[%s587] sm:$0xf] %v691
      %v693 = vld [vmem:[%s587 + $0xc] sm:$0xf]
      %v694 = vsel %vm689, %v636, %v693
      %695 = vst [vmem:[%s587 + $0xc] sm:$0xf] %v694
      %v696 = vld [vmem:[%s587 + $0x18] sm:$0xf]
      %v697 = vsel %vm689, %v643, %v696
      %698 = vst [vmem:[%s587 + $0x18] sm:$0xf] %v697
      %v699 = vld [vmem:[%s587 + $0x24] sm:$0xf]
      %v700 = vsel %vm689, %v650, %v699
      %701 = vst [vmem:[%s587 + $0x24] sm:$0xf] %v700
      %v702 = vld [vmem:[%s587 + $0x30] sm:$0xf]
      %v703 = vsel %vm689, %v657, %v702
      %704 = vst [vmem:[%s587 + $0x30] sm:$0xf] %v703
      %v705 = vld [vmem:[%s587 + $0x3c] sm:$0xf]
      %v706 = vsel %vm689, %v664, %v705
      %707 = vst [vmem:[%s587 + $0x3c] sm:$0xf] %v706
      %v708 = vld [vmem:[%s587 + $0x48] sm:$0xf]
      %v709 = vsel %vm689, %v671, %v708
      %710 = vst [vmem:[%s587 + $0x48] sm:$0xf] %v709
      %v711 = vld [vmem:[%s587 + $0x54] sm:$0xf]
      %v712 = vsel %vm689, %v678, %v711
      %713 = vst [vmem:[%s587 + $0x54] sm:$0xf] %v712
      %vm714 = vcmask 1043459
      %vm715 = vsmask.f32 7950
      %vm716 = vmand %vm714, %vm715
      %v717 = vld [vmem:[%s587 + $0x8] sm:$0x8]
      %v718 = vsel %vm716, 0, %v717
      %719 = vst [vmem:[%s587 + $0x8] sm:$0x8] %v718
      %v720 = vld [vmem:[%s587 + $0x14] sm:$0x8]
      %v721 = vsel %vm716, 0, %v720
      %722 = vst [vmem:[%s587 + $0x14] sm:$0x8] %v721
      %v723 = vld [vmem:[%s587 + $0x20] sm:$0x8]
      %v724 = vsel %vm716, 0, %v723
      %725 = vst [vmem:[%s587 + $0x20] sm:$0x8] %v724
      %v726 = vld [vmem:[%s587 + $0x2c] sm:$0x8]
      %v727 = vsel %vm716, 0, %v726
      %728 = vst [vmem:[%s587 + $0x2c] sm:$0x8] %v727
      %v729 = vld [vmem:[%s587 + $0x38] sm:$0x8]
      %v730 = vsel %vm716, 0, %v729
      %731 = vst [vmem:[%s587 + $0x38] sm:$0x8] %v730
      %v732 = vld [vmem:[%s587 + $0x44] sm:$0x8]
      %v733 = vsel %vm716, 0, %v732
      %734 = vst [vmem:[%s587 + $0x44] sm:$0x8] %v733
      %v735 = vld [vmem:[%s587 + $0x50] sm:$0x8]
      %v736 = vsel %vm716, 0, %v735
      %737 = vst [vmem:[%s587 + $0x50] sm:$0x8] %v736
      %v738 = vld [vmem:[%s587 + $0x5c] sm:$0x8]
      %v739 = vsel %vm716, 0, %v738
      %740 = vst [vmem:[%s587 + $0x5c] sm:$0x8] %v739
      %v741 = vrot.slane %v624, 4
      %v742 = vrot.slane %v627, 5
      %v743 = vor.u32 %v741, %v742
      %v744 = vrot.slane %v743, 4
      %v745 = vrot.slane %v631, 4
      %v746 = vrot.slane %v634, 5
      %v747 = vor.u32 %v745, %v746
      %v748 = vrot.slane %v747, 4
      %v749 = vrot.slane %v638, 4
      %v750 = vrot.slane %v641, 5
      %v751 = vor.u32 %v749, %v750
      %v752 = vrot.slane %v751, 4
      %v753 = vrot.slane %v645, 4
      %v754 = vrot.slane %v648, 5
      %v755 = vor.u32 %v753, %v754
      %v756 = vrot.slane %v755, 4
      %v757 = vrot.slane %v652, 4
      %v758 = vrot.slane %v655, 5
      %v759 = vor.u32 %v757, %v758
      %v760 = vrot.slane %v759, 4
      %v761 = vrot.slane %v659, 4
      %v762 = vrot.slane %v662, 5
      %v763 = vor.u32 %v761, %v762
      %v764 = vrot.slane %v763, 4
      %v765 = vrot.slane %v666, 4
      %v766 = vrot.slane %v669, 5
      %v767 = vor.u32 %v765, %v766
      %v768 = vrot.slane %v767, 4
      %v769 = vrot.slane %v673, 4
      %v770 = vrot.slane %v676, 5
      %v771 = vor.u32 %v769, %v770
      %v772 = vrot.slane %v771, 4
      %vm781 = vsmask.f32 3328
      %vm782 = vmand %vm687, %vm781
      %v783 = vld [vmem:[%s587 + $0x8] sm:$0xf]
      %v784 = vsel %vm782, %v744, %v783
      %785 = vst [vmem:[%s587 + $0x8] sm:$0xf] %v784
      %v786 = vld [vmem:[%s587 + $0x14] sm:$0xf]
      %v787 = vsel %vm782, %v748, %v786
      %788 = vst [vmem:[%s587 + $0x14] sm:$0xf] %v787
      %v789 = vld [vmem:[%s587 + $0x20] sm:$0xf]
      %v790 = vsel %vm782, %v752, %v789
      %791 = vst [vmem:[%s587 + $0x20] sm:$0xf] %v790
      %v792 = vld [vmem:[%s587 + $0x2c] sm:$0xf]
      %v793 = vsel %vm782, %v756, %v792
      %794 = vst [vmem:[%s587 + $0x2c] sm:$0xf] %v793
      %v795 = vld [vmem:[%s587 + $0x38] sm:$0xf]
      %v796 = vsel %vm782, %v760, %v795
      %797 = vst [vmem:[%s587 + $0x38] sm:$0xf] %v796
      %v798 = vld [vmem:[%s587 + $0x44] sm:$0xf]
      %v799 = vsel %vm782, %v764, %v798
      %800 = vst [vmem:[%s587 + $0x44] sm:$0xf] %v799
      %v801 = vld [vmem:[%s587 + $0x50] sm:$0xf]
      %v802 = vsel %vm782, %v768, %v801
      %803 = vst [vmem:[%s587 + $0x50] sm:$0xf] %v802
      %v804 = vld [vmem:[%s587 + $0x5c] sm:$0xf]
      %v805 = vsel %vm782, %v772, %v804
      %806 = vst [vmem:[%s587 + $0x5c] sm:$0xf] %v805
      %v807 = vld [vmem:[%s5] sm:$0x1]
      %v809 = vlaneseq
      %v810 = vshrl.u32 %v809, 7
      %v811 = vsub.s32 0, %v810
      %v812 = vrot.slane %v807, %v811
      %v814 = vadd.f32 %v812, 0.0
      %v815 = vld [vmem:[#allocation2] sm:$0xff]
      %v816 = vld [vmem:[#allocation2 + $0x8] sm:$0xf]
      %v817 = vld [vmem:[#allocation2 + $0xc] sm:$0xff]
      %v818 = vld [vmem:[#allocation2 + $0x14] sm:$0xf]
      %v819 = vld [vmem:[#allocation2 + $0x18] sm:$0xff]
      %v820 = vld [vmem:[#allocation2 + $0x20] sm:$0xf]
      %v821 = vld [vmem:[#allocation2 + $0x24] sm:$0xff]
      %v822 = vld [vmem:[#allocation2 + $0x2c] sm:$0xf]
      %v823 = vld [vmem:[#allocation2 + $0x30] sm:$0xff]
      %v824 = vld [vmem:[#allocation2 + $0x38] sm:$0xf]
      %v825 = vld [vmem:[#allocation2 + $0x3c] sm:$0xff]
      %v826 = vld [vmem:[#allocation2 + $0x44] sm:$0xf]
      %v827 = vld [vmem:[#allocation2 + $0x48] sm:$0xff]
      %v828 = vld [vmem:[#allocation2 + $0x50] sm:$0xf]
      %v829 = vld [vmem:[#allocation2 + $0x54] sm:$0xff]
      %v830 = vld [vmem:[#allocation2 + $0x5c] sm:$0xf]
      %v831 = vld [vmem:[%s4] sm:$0xf]
      %v832 = vld [vmem:[%s4 + $0x4] sm:$0xf]
      %v833 = vld [vmem:[%s4 + $0x8] sm:$0xf]
      %v834 = vld [vmem:[%s4 + $0xc] sm:$0xf]
      %v835 = vld [vmem:[%s4 + $0x10] sm:$0xf]
      %v836 = vld [vmem:[%s4 + $0x14] sm:$0xf]
      %v837 = vld [vmem:[%s4 + $0x18] sm:$0xf]
      %v838 = vld [vmem:[%s4 + $0x1c] sm:$0xf]
      %v839 = vld [vmem:[%s4 + $0x20] sm:$0xf]
      %v840 = vld [vmem:[%s4 + $0x24] sm:$0xf]
      %v841 = vld [vmem:[%s4 + $0x28] sm:$0xf]
      %v842 = vld [vmem:[%s4 + $0x2c] sm:$0xf]
      %v843 = vld [vmem:[%s4 + $0x30] sm:$0xf]
      %v844 = vld [vmem:[%s4 + $0x34] sm:$0xf]
      %v845 = vld [vmem:[%s4 + $0x38] sm:$0xf]
      %v846 = vld [vmem:[%s4 + $0x3c] sm:$0xf]
      %v847 = vld [vmem:[%s4 + $0x40] sm:$0xf]
      %v848 = vld [vmem:[%s4 + $0x44] sm:$0xf]
      %v849 = vld [vmem:[%s4 + $0x48] sm:$0xf]
      %v850 = vld [vmem:[%s4 + $0x4c] sm:$0xf]
      %v851 = vld [vmem:[%s4 + $0x50] sm:$0xf]
      %v852 = vld [vmem:[%s4 + $0x54] sm:$0xf]
      %v853 = vld [vmem:[%s4 + $0x58] sm:$0xf]
      %v854 = vld [vmem:[%s4 + $0x5c] sm:$0xf]
      %v855 = vld [vmem:[%s4 + $0x60] sm:$0xf]
      %v856 = vld [vmem:[%s4 + $0x64] sm:$0xf]
      %v857 = vld [vmem:[%s4 + $0x68] sm:$0xf]
      %v858 = vld [vmem:[%s4 + $0x6c] sm:$0xf]
      %v859 = vld [vmem:[%s4 + $0x70] sm:$0xf]
      %v860 = vld [vmem:[%s4 + $0x74] sm:$0xf]
      %v861 = vld [vmem:[%s4 + $0x78] sm:$0xf]
      %v862 = vld [vmem:[%s4 + $0x7c] sm:$0xf]
      %v863 = vld [vmem:[%s4 + $0x80] sm:$0xf]
      %v864 = vld [vmem:[%s4 + $0x84] sm:$0xf]
      %v865 = vld [vmem:[%s4 + $0x88] sm:$0xf]
      %v866 = vld [vmem:[%s4 + $0x8c] sm:$0xf]
      %v867 = vld [vmem:[%s4 + $0x90] sm:$0xf]
      %v868 = vld [vmem:[%s4 + $0x94] sm:$0xf]
      %v869 = vld [vmem:[%s4 + $0x98] sm:$0xf]
      %v870 = vld [vmem:[%s4 + $0x9c] sm:$0xf]
      %v871 = vld [vmem:[%s4 + $0xa0] sm:$0xf]
      %v872 = vld [vmem:[%s4 + $0xa4] sm:$0xf]
      %v873 = vld [vmem:[%s4 + $0xa8] sm:$0xf]
      %v874 = vld [vmem:[%s4 + $0xac] sm:$0xf]
      %v875 = vld [vmem:[%s4 + $0xb0] sm:$0xf]
      %v876 = vld [vmem:[%s4 + $0xb4] sm:$0xf]
      %v877 = vld [vmem:[%s4 + $0xb8] sm:$0xf]
      %v878 = vld [vmem:[%s4 + $0xbc] sm:$0xf]
      %v895 = vunpack.c.l.b16 %v815
      %v896 = vunpack.c.h.b16 %v815
      %v897 = vunpack.c.l.b16 %v816
      %v898 = vunpack.c.l.b16 %v817
      %v899 = vunpack.c.h.b16 %v817
      %v900 = vunpack.c.l.b16 %v818
      %v901 = vunpack.c.l.b16 %v819
      %v902 = vunpack.c.h.b16 %v819
      %v903 = vunpack.c.l.b16 %v820
      %v904 = vunpack.c.l.b16 %v821
      %v905 = vunpack.c.h.b16 %v821
      %v906 = vunpack.c.l.b16 %v822
      %v907 = vunpack.c.l.b16 %v823
      %v908 = vunpack.c.h.b16 %v823
      %v909 = vunpack.c.l.b16 %v824
      %v910 = vunpack.c.l.b16 %v825
      %v911 = vunpack.c.h.b16 %v825
      %v912 = vunpack.c.l.b16 %v826
      %v913 = vunpack.c.l.b16 %v827
      %v914 = vunpack.c.h.b16 %v827
      %v915 = vunpack.c.l.b16 %v828
      %v916 = vunpack.c.l.b16 %v829
      %v917 = vunpack.c.h.b16 %v829
      %v918 = vunpack.c.l.b16 %v830
      %v919 = vpack.c.b16 %v898, %v895
      %v920 = vpack.c.b16 %v899, %v896
      %v921 = vpack.c.b16 %v900, %v897
      %v922 = vpack.c.b16 %v904, %v901
      %v923 = vpack.c.b16 %v905, %v902
      %v924 = vpack.c.b16 %v906, %v903
      %v925 = vpack.c.b16 %v910, %v907
      %v926 = vpack.c.b16 %v911, %v908
      %v927 = vpack.c.b16 %v912, %v909
      %v928 = vpack.c.b16 %v916, %v913
      %v929 = vpack.c.b16 %v917, %v914
      %v930 = vpack.c.b16 %v918, %v915
      %v991 = vunpack.c.l.b16 %v831
      %v992 = vunpack.c.l.b16 %v832
      %v993 = vunpack.c.l.b16 %v833
      %v994 = vunpack.c.l.b16 %v834
      %v995 = vunpack.c.l.b16 %v835
      %v996 = vunpack.c.l.b16 %v836
      %v997 = vunpack.c.l.b16 %v837
      %v998 = vunpack.c.l.b16 %v838
      %v999 = vunpack.c.l.b16 %v839
      %v1000 = vunpack.c.l.b16 %v840
      %v1001 = vunpack.c.l.b16 %v841
      %v1002 = vunpack.c.l.b16 %v842
      %v1003 = vunpack.c.l.b16 %v843
      %v1004 = vunpack.c.l.b16 %v844
      %v1005 = vunpack.c.l.b16 %v845
      %v1006 = vunpack.c.l.b16 %v846
      %v1007 = vunpack.c.l.b16 %v847
      %v1008 = vunpack.c.l.b16 %v848
      %v1009 = vunpack.c.l.b16 %v849
      %v1010 = vunpack.c.l.b16 %v850
      %v1011 = vunpack.c.l.b16 %v851
      %v1012 = vunpack.c.l.b16 %v852
      %v1013 = vunpack.c.l.b16 %v853
      %v1014 = vunpack.c.l.b16 %v854
      %v1015 = vunpack.c.l.b16 %v855
      %v1016 = vunpack.c.l.b16 %v856
      %v1017 = vunpack.c.l.b16 %v857
      %v1018 = vunpack.c.l.b16 %v858
      %v1019 = vunpack.c.l.b16 %v859
      %v1020 = vunpack.c.l.b16 %v860
      %v1021 = vunpack.c.l.b16 %v861
      %v1022 = vunpack.c.l.b16 %v862
      %v1023 = vunpack.c.l.b16 %v863
      %v1024 = vunpack.c.l.b16 %v864
      %v1025 = vunpack.c.l.b16 %v865
      %v1026 = vunpack.c.l.b16 %v866
      %v1027 = vunpack.c.l.b16 %v867
      %v1028 = vunpack.c.l.b16 %v868
      %v1029 = vunpack.c.l.b16 %v869
      %v1030 = vunpack.c.l.b16 %v870
      %v1031 = vunpack.c.l.b16 %v871
      %v1032 = vunpack.c.l.b16 %v872
      %v1033 = vunpack.c.l.b16 %v873
      %v1034 = vunpack.c.l.b16 %v874
      %v1035 = vunpack.c.l.b16 %v875
      %v1036 = vunpack.c.l.b16 %v876
      %v1037 = vunpack.c.l.b16 %v877
      %v1038 = vunpack.c.l.b16 %v878
      %v1039 = vpack.c.b16 %v992, %v991
      %v1040 = vpack.c.b16 %v994, %v993
      %v1041 = vpack.c.b16 %v996, %v995
      %v1042 = vpack.c.b16 %v998, %v997
      %v1043 = vpack.c.b16 %v1000, %v999
      %v1044 = vpack.c.b16 %v1002, %v1001
      %v1045 = vpack.c.b16 %v1004, %v1003
      %v1046 = vpack.c.b16 %v1006, %v1005
      %v1047 = vpack.c.b16 %v1008, %v1007
      %v1048 = vpack.c.b16 %v1010, %v1009
      %v1049 = vpack.c.b16 %v1012, %v1011
      %v1050 = vpack.c.b16 %v1014, %v1013
      %v1051 = vpack.c.b16 %v1016, %v1015
      %v1052 = vpack.c.b16 %v1018, %v1017
      %v1053 = vpack.c.b16 %v1020, %v1019
      %v1054 = vpack.c.b16 %v1022, %v1021
      %v1055 = vpack.c.b16 %v1024, %v1023
      %v1056 = vpack.c.b16 %v1026, %v1025
      %v1057 = vpack.c.b16 %v1028, %v1027
      %v1058 = vpack.c.b16 %v1030, %v1029
      %v1059 = vpack.c.b16 %v1032, %v1031
      %v1060 = vpack.c.b16 %v1034, %v1033
      %v1061 = vpack.c.b16 %v1036, %v1035
      %v1062 = vpack.c.b16 %v1038, %v1037
      %1087 = vmatprep.subr.bf16.mxu0 0
      %1088 = vmatpush1.bf16.msra.mxu0 %v1039
      %1089 = vmatprep.subr.bf16.mxu0 0
      %1090 = vmatpush1.bf16.msra.mxu0 %v1040
      %1091 = vmatprep.subr.bf16.mxu0 0
      %1092 = vmatpush1.bf16.msra.mxu0 %v1041
      %1093 = vmatprep.subr.bf16.mxu0 0
      %1094 = vmatpush1.bf16.msra.mxu0 %v1042
      %1095 = vmatprep.subr.bf16.mxu0 0
      %1096 = vmatpush1.bf16.msra.mxu0 %v1043
      %1097 = vmatprep.subr.bf16.mxu0 0
      %1098 = vmatpush1.bf16.msra.mxu0 %v1044
      %1099 = vmatprep.subr.bf16.mxu0 0
      %1100 = vmatpush1.bf16.msra.mxu0 %v1045
      %1101 = vmatprep.subr.bf16.mxu0 0
      %1102 = vmatpush1.bf16.msra.mxu0 %v1046
      %1103 = vmatprep.subr.bf16.mxu0 0
      %1104 = vmatpush1.bf16.msra.mxu0 %v1047
      %1105 = vmatprep.subr.bf16.mxu0 0
      %1106 = vmatpush1.bf16.msra.mxu0 %v1048
      %1107 = vmatprep.subr.bf16.mxu0 0
      %1108 = vmatpush1.bf16.msra.mxu0 %v1049
      %1109 = vmatprep.subr.bf16.mxu0 0
      %1110 = vmatpush1.bf16.msra.mxu0 %v1050
      %1111 = vmatprep.subr.bf16.mxu0 0
      %1112 = vmatpush1.bf16.msra.mxu0 %v1051
      %1113 = vmatprep.subr.bf16.mxu0 0
      %1114 = vmatpush1.bf16.msra.mxu0 %v1052
      %1115 = vmatprep.subr.bf16.mxu0 0
      %1116 = vmatpush1.bf16.msra.mxu0 %v1053
      %1117 = vmatprep.subr.bf16.mxu0 0
      %1118 = vmatpush1.bf16.msra.mxu0 %v1054
      %1119 = vmatprep.mubr.bf16.mxu0 %v920
      %1120 = vmatmul.mubr.bf16.gmra.mrb[0].mxu0 %v919
      %v1121 = vpop.f32.mrb[0].mxu0
      %v1122 = vadd.f32 0.0, %v1121
      %v1123 = vpop.f32.mrb[0].mxu0
      %v1124 = vpop.f32.mrb[0].mxu0
      %v1125 = vadd.f32 0.0, %v1124
      %v1126 = vpop.f32.mrb[0].mxu0
      %1127 = vmatprep.mubr.bf16.mxu0 %v923
      %1128 = vmatmul.mubr.bf16.gmra.mrb[0].mxu0 %v922
      %v1129 = vpop.f32.mrb[0].mxu0
      %v1130 = vadd.f32 0.0, %v1129
      %v1131 = vpop.f32.mrb[0].mxu0
      %v1132 = vpop.f32.mrb[0].mxu0
      %v1133 = vadd.f32 0.0, %v1132
      %v1134 = vpop.f32.mrb[0].mxu0
      %1135 = vmatprep.mubr.bf16.mxu0 %v926
      %1136 = vmatmul.mubr.bf16.gmra.mrb[0].mxu0 %v925
      %v1137 = vpop.f32.mrb[0].mxu0
      %v1138 = vadd.f32 0.0, %v1137
      %v1139 = vpop.f32.mrb[0].mxu0
      %v1140 = vpop.f32.mrb[0].mxu0
      %v1141 = vadd.f32 0.0, %v1140
      %v1142 = vpop.f32.mrb[0].mxu0
      %1143 = vmatprep.mubr.bf16.mxu0 %v929
      %1144 = vmatmul.mubr.bf16.gmra.mrb[0].mxu0 %v928
      %v1145 = vpop.f32.mrb[0].mxu0
      %v1146 = vadd.f32 0.0, %v1145
      %v1147 = vpop.f32.mrb[0].mxu0
      %v1148 = vpop.f32.mrb[0].mxu0
      %v1149 = vadd.f32 0.0, %v1148
      %v1150 = vpop.f32.mrb[0].mxu0
      %1151 = vdwg.mxu0
      %1152 = vmatprep.subr.bf16.mxu0 0
      %1153 = vmatpush1.bf16.msra.mxu0 %v1055
      %1154 = vmatprep.subr.bf16.mxu0 0
      %1155 = vmatpush1.bf16.msra.mxu0 %v1056
      %1156 = vmatprep.subr.bf16.mxu0 0
      %1157 = vmatpush1.bf16.msra.mxu0 %v1057
      %1158 = vmatprep.subr.bf16.mxu0 0
      %1159 = vmatpush1.bf16.msra.mxu0 %v1058
      %1160 = vmatprep.subr.bf16.mxu0 0
      %1161 = vmatpush1.bf16.msra.mxu0 %v1059
      %1162 = vmatprep.subr.bf16.mxu0 0
      %1163 = vmatpush1.bf16.msra.mxu0 %v1060
      %1164 = vmatprep.subr.bf16.mxu0 0
      %1165 = vmatpush1.bf16.msra.mxu0 %v1061
      %1166 = vmatprep.subr.bf16.mxu0 0
      %1167 = vmatpush1.bf16.msra.mxu0 %v1062
      %1168 = vmatprep.subr.bf16.mxu0 0
      %1169 = vmatpush1.bf16.msra.mxu0 0
      %1170 = vmatprep.subr.bf16.mxu0 0
      %1171 = vmatpush1.bf16.msra.mxu0 0
      %1172 = vmatprep.subr.bf16.mxu0 0
      %1173 = vmatpush1.bf16.msra.mxu0 0
      %1174 = vmatprep.subr.bf16.mxu0 0
      %1175 = vmatpush1.bf16.msra.mxu0 0
      %1176 = vmatprep.subr.bf16.mxu0 0
      %1177 = vmatpush1.bf16.msra.mxu0 0
      %1178 = vmatprep.subr.bf16.mxu0 0
      %1179 = vmatpush1.bf16.msra.mxu0 0
      %1180 = vmatprep.subr.bf16.mxu0 0
      %1181 = vmatpush1.bf16.msra.mxu0 0
      %1182 = vmatprep.subr.bf16.mxu0 0
      %1183 = vmatpush1.bf16.msra.mxu0 0
      %1184 = vmatprep.mubr.bf16.mxu0 0
      %1185 = vmatmul.mubr.bf16.gmra.mrb[0].mxu0 %v921
      %v1186 = vpop.f32.mrb[0].mxu0
      %v1187 = vadd.f32 %v1122, %v1186
      %v1188 = vpop.f32.mrb[0].mxu0
      %v1189 = vpop.f32.mrb[0].mxu0
      %v1190 = vadd.f32 %v1125, %v1189
      %v1191 = vpop.f32.mrb[0].mxu0
      %1192 = vmatprep.mubr.bf16.mxu0 0
      %1193 = vmatmul.mubr.bf16.gmra.mrb[0].mxu0 %v924
      %v1194 = vpop.f32.mrb[0].mxu0
      %v1195 = vadd.f32 %v1130, %v1194
      %v1196 = vpop.f32.mrb[0].mxu0
      %v1197 = vpop.f32.mrb[0].mxu0
      %v1198 = vadd.f32 %v1133, %v1197
      %v1199 = vpop.f32.mrb[0].mxu0
      %1200 = vmatprep.mubr.bf16.mxu0 0
      %1201 = vmatmul.mubr.bf16.gmra.mrb[0].mxu0 %v927
      %v1202 = vpop.f32.mrb[0].mxu0
      %v1203 = vadd.f32 %v1138, %v1202
      %v1204 = vpop.f32.mrb[0].mxu0
      %v1205 = vpop.f32.mrb[0].mxu0
      %v1206 = vadd.f32 %v1141, %v1205
      %v1207 = vpop.f32.mrb[0].mxu0
      %1208 = vmatprep.mubr.bf16.mxu0 0
      %1209 = vmatmul.mubr.bf16.gmra.mrb[0].mxu0 %v930
      %v1210 = vpop.f32.mrb[0].mxu0
      %v1211 = vadd.f32 %v1146, %v1210
      %v1212 = vpop.f32.mrb[0].mxu0
      %v1213 = vpop.f32.mrb[0].mxu0
      %v1214 = vadd.f32 %v1149, %v1213
      %v1215 = vpop.f32.mrb[0].mxu0
      %1216 = vdwg.mxu0
      %v1217 = vadd.f32 %v814, %v1187
      %v1218 = vadd.f32 %v814, %v1190
      %v1219 = vadd.f32 %v814, %v1195
      %v1220 = vadd.f32 %v814, %v1198
      %v1221 = vadd.f32 %v814, %v1203
      %v1222 = vadd.f32 %v814, %v1206
      %v1223 = vadd.f32 %v814, %v1211
      %v1224 = vadd.f32 %v814, %v1214
      %v1225 = vld [vmem:[%s587] sm:$0xff]
      %v1226 = vld [vmem:[%s587 + $0x8] sm:$0xf]
      %v1227 = vld [vmem:[%s587 + $0xc] sm:$0xff]
      %v1228 = vld [vmem:[%s587 + $0x14] sm:$0xf]
      %v1229 = vld [vmem:[%s587 + $0x18] sm:$0xff]
      %v1230 = vld [vmem:[%s587 + $0x20] sm:$0xf]
      %v1231 = vld [vmem:[%s587 + $0x24] sm:$0xff]
      %v1232 = vld [vmem:[%s587 + $0x2c] sm:$0xf]
      %v1233 = vld [vmem:[%s587 + $0x30] sm:$0xff]
      %v1234 = vld [vmem:[%s587 + $0x38] sm:$0xf]
      %v1235 = vld [vmem:[%s587 + $0x3c] sm:$0xff]
      %v1236 = vld [vmem:[%s587 + $0x44] sm:$0xf]
      %v1237 = vld [vmem:[%s587 + $0x48] sm:$0xff]
      %v1238 = vld [vmem:[%s587 + $0x50] sm:$0xf]
      %v1239 = vld [vmem:[%s587 + $0x54] sm:$0xff]
      %v1240 = vld [vmem:[%s587 + $0x5c] sm:$0xf]
      %s1241 = scalar_lea.vmem %s4, 192
      %v1242 = vld [vmem:[%s1241] sm:$0xf]
      %v1243 = vld [vmem:[%s1241 + $0x4] sm:$0xf]
      %v1244 = vld [vmem:[%s1241 + $0x8] sm:$0xf]
      %v1245 = vld [vmem:[%s1241 + $0xc] sm:$0xf]
      %v1246 = vld [vmem:[%s1241 + $0x10] sm:$0xf]
      %v1247 = vld [vmem:[%s1241 + $0x14] sm:$0xf]
      %v1248 = vld [vmem:[%s1241 + $0x18] sm:$0xf]
      %v1249 = vld [vmem:[%s1241 + $0x1c] sm:$0xf]
      %v1250 = vld [vmem:[%s1241 + $0x20] sm:$0xf]
      %v1251 = vld [vmem:[%s1241 + $0x24] sm:$0xf]
      %v1252 = vld [vmem:[%s1241 + $0x28] sm:$0xf]
      %v1253 = vld [vmem:[%s1241 + $0x2c] sm:$0xf]
      %v1254 = vld [vmem:[%s1241 + $0x30] sm:$0xf]
      %v1255 = vld [vmem:[%s1241 + $0x34] sm:$0xf]
      %v1256 = vld [vmem:[%s1241 + $0x38] sm:$0xf]
      %v1257 = vld [vmem:[%s1241 + $0x3c] sm:$0xf]
      %v1258 = vld [vmem:[%s1241 + $0x40] sm:$0xf]
      %v1259 = vld [vmem:[%s1241 + $0x44] sm:$0xf]
      %v1260 = vld [vmem:[%s1241 + $0x48] sm:$0xf]
      %v1261 = vld [vmem:[%s1241 + $0x4c] sm:$0xf]
      %v1262 = vld [vmem:[%s1241 + $0x50] sm:$0xf]
      %v1263 = vld [vmem:[%s1241 + $0x54] sm:$0xf]
      %v1264 = vld [vmem:[%s1241 + $0x58] sm:$0xf]
      %v1265 = vld [vmem:[%s1241 + $0x5c] sm:$0xf]
      %v1266 = vld [vmem:[%s1241 + $0x60] sm:$0xf]
      %v1267 = vld [vmem:[%s1241 + $0x64] sm:$0xf]
      %v1268 = vld [vmem:[%s1241 + $0x68] sm:$0xf]
      %v1269 = vld [vmem:[%s1241 + $0x6c] sm:$0xf]
      %v1270 = vld [vmem:[%s1241 + $0x70] sm:$0xf]
      %v1271 = vld [vmem:[%s1241 + $0x74] sm:$0xf]
      %v1272 = vld [vmem:[%s1241 + $0x78] sm:$0xf]
      %v1273 = vld [vmem:[%s1241 + $0x7c] sm:$0xf]
      %v1274 = vld [vmem:[%s1241 + $0x80] sm:$0xf]
      %v1275 = vld [vmem:[%s1241 + $0x84] sm:$0xf]
      %v1276 = vld [vmem:[%s1241 + $0x88] sm:$0xf]
      %v1277 = vld [vmem:[%s1241 + $0x8c] sm:$0xf]
      %v1278 = vld [vmem:[%s1241 + $0x90] sm:$0xf]
      %v1279 = vld [vmem:[%s1241 + $0x94] sm:$0xf]
      %v1280 = vld [vmem:[%s1241 + $0x98] sm:$0xf]
      %v1281 = vld [vmem:[%s1241 + $0x9c] sm:$0xf]
      %v1282 = vld [vmem:[%s1241 + $0xa0] sm:$0xf]
      %v1283 = vld [vmem:[%s1241 + $0xa4] sm:$0xf]
      %v1284 = vld [vmem:[%s1241 + $0xa8] sm:$0xf]
      %v1285 = vld [vmem:[%s1241 + $0xac] sm:$0xf]
      %v1286 = vld [vmem:[%s1241 + $0xb0] sm:$0xf]
      %v1287 = vld [vmem:[%s1241 + $0xb4] sm:$0xf]
      %v1288 = vld [vmem:[%s1241 + $0xb8] sm:$0xf]
      %v1289 = vld [vmem:[%s1241 + $0xbc] sm:$0xf]
      %v1306 = vunpack.c.l.b16 %v1225
      %v1307 = vunpack.c.h.b16 %v1225
      %v1308 = vunpack.c.l.b16 %v1226
      %v1309 = vunpack.c.l.b16 %v1227
      %v1310 = vunpack.c.h.b16 %v1227
      %v1311 = vunpack.c.l.b16 %v1228
      %v1312 = vunpack.c.l.b16 %v1229
      %v1313 = vunpack.c.h.b16 %v1229
      %v1314 = vunpack.c.l.b16 %v1230
      %v1315 = vunpack.c.l.b16 %v1231
      %v1316 = vunpack.c.h.b16 %v1231
      %v1317 = vunpack.c.l.b16 %v1232
      %v1318 = vunpack.c.l.b16 %v1233
      %v1319 = vunpack.c.h.b16 %v1233
      %v1320 = vunpack.c.l.b16 %v1234
      %v1321 = vunpack.c.l.b16 %v1235
      %v1322 = vunpack.c.h.b16 %v1235
      %v1323 = vunpack.c.l.b16 %v1236
      %v1324 = vunpack.c.l.b16 %v1237
      %v1325 = vunpack.c.h.b16 %v1237
      %v1326 = vunpack.c.l.b16 %v1238
      %v1327 = vunpack.c.l.b16 %v1239
      %v1328 = vunpack.c.h.b16 %v1239
      %v1329 = vunpack.c.l.b16 %v1240
      %v1330 = vpack.c.b16 %v1309, %v1306
      %v1331 = vpack.c.b16 %v1310, %v1307
      %v1332 = vpack.c.b16 %v1311, %v1308
      %v1333 = vpack.c.b16 %v1315, %v1312
      %v1334 = vpack.c.b16 %v1316, %v1313
      %v1335 = vpack.c.b16 %v1317, %v1314
      %v1336 = vpack.c.b16 %v1321, %v1318
      %v1337 = vpack.c.b16 %v1322, %v1319
      %v1338 = vpack.c.b16 %v1323, %v1320
      %v1339 = vpack.c.b16 %v1327, %v1324
      %v1340 = vpack.c.b16 %v1328, %v1325
      %v1341 = vpack.c.b16 %v1329, %v1326
      %v1402 = vunpack.c.l.b16 %v1242
      %v1403 = vunpack.c.l.b16 %v1243
      %v1404 = vunpack.c.l.b16 %v1244
      %v1405 = vunpack.c.l.b16 %v1245
      %v1406 = vunpack.c.l.b16 %v1246
      %v1407 = vunpack.c.l.b16 %v1247
      %v1408 = vunpack.c.l.b16 %v1248
      %v1409 = vunpack.c.l.b16 %v1249
      %v1410 = vunpack.c.l.b16 %v1250
      %v1411 = vunpack.c.l.b16 %v1251
      %v1412 = vunpack.c.l.b16 %v1252
      %v1413 = vunpack.c.l.b16 %v1253
      %v1414 = vunpack.c.l.b16 %v1254
      %v1415 = vunpack.c.l.b16 %v1255
      %v1416 = vunpack.c.l.b16 %v1256
      %v1417 = vunpack.c.l.b16 %v1257
      %v1418 = vunpack.c.l.b16 %v1258
      %v1419 = vunpack.c.l.b16 %v1259
      %v1420 = vunpack.c.l.b16 %v1260
      %v1421 = vunpack.c.l.b16 %v1261
      %v1422 = vunpack.c.l.b16 %v1262
      %v1423 = vunpack.c.l.b16 %v1263
      %v1424 = vunpack.c.l.b16 %v1264
      %v1425 = vunpack.c.l.b16 %v1265
      %v1426 = vunpack.c.l.b16 %v1266
      %v1427 = vunpack.c.l.b16 %v1267
      %v1428 = vunpack.c.l.b16 %v1268
      %v1429 = vunpack.c.l.b16 %v1269
      %v1430 = vunpack.c.l.b16 %v1270
      %v1431 = vunpack.c.l.b16 %v1271
      %v1432 = vunpack.c.l.b16 %v1272
      %v1433 = vunpack.c.l.b16 %v1273
      %v1434 = vunpack.c.l.b16 %v1274
      %v1435 = vunpack.c.l.b16 %v1275
      %v1436 = vunpack.c.l.b16 %v1276
      %v1437 = vunpack.c.l.b16 %v1277
      %v1438 = vunpack.c.l.b16 %v1278
      %v1439 = vunpack.c.l.b16 %v1279
      %v1440 = vunpack.c.l.b16 %v1280
      %v1441 = vunpack.c.l.b16 %v1281
      %v1442 = vunpack.c.l.b16 %v1282
      %v1443 = vunpack.c.l.b16 %v1283
      %v1444 = vunpack.c.l.b16 %v1284
      %v1445 = vunpack.c.l.b16 %v1285
      %v1446 = vunpack.c.l.b16 %v1286
      %v1447 = vunpack.c.l.b16 %v1287
      %v1448 = vunpack.c.l.b16 %v1288
      %v1449 = vunpack.c.l.b16 %v1289
      %v1450 = vpack.c.b16 %v1403, %v1402
      %v1451 = vpack.c.b16 %v1405, %v1404
      %v1452 = vpack.c.b16 %v1407, %v1406
      %v1453 = vpack.c.b16 %v1409, %v1408
      %v1454 = vpack.c.b16 %v1411, %v1410
      %v1455 = vpack.c.b16 %v1413, %v1412
      %v1456 = vpack.c.b16 %v1415, %v1414
      %v1457 = vpack.c.b16 %v1417, %v1416
      %v1458 = vpack.c.b16 %v1419, %v1418
      %v1459 = vpack.c.b16 %v1421, %v1420
      %v1460 = vpack.c.b16 %v1423, %v1422
      %v1461 = vpack.c.b16 %v1425, %v1424
      %v1462 = vpack.c.b16 %v1427, %v1426
      %v1463 = vpack.c.b16 %v1429, %v1428
      %v1464 = vpack.c.b16 %v1431, %v1430
      %v1465 = vpack.c.b16 %v1433, %v1432
      %v1466 = vpack.c.b16 %v1435, %v1434
      %v1467 = vpack.c.b16 %v1437, %v1436
      %v1468 = vpack.c.b16 %v1439, %v1438
      %v1469 = vpack.c.b16 %v1441, %v1440
      %v1470 = vpack.c.b16 %v1443, %v1442
      %v1471 = vpack.c.b16 %v1445, %v1444
      %v1472 = vpack.c.b16 %v1447, %v1446
      %v1473 = vpack.c.b16 %v1449, %v1448
      %1498 = vmatprep.subr.bf16.mxu0 0
      %1499 = vmatpush1.bf16.msra.mxu0 %v1450
      %1500 = vmatprep.subr.bf16.mxu0 0
      %1501 = vmatpush1.bf16.msra.mxu0 %v1451
      %1502 = vmatprep.subr.bf16.mxu0 0
      %1503 = vmatpush1.bf16.msra.mxu0 %v1452
      %1504 = vmatprep.subr.bf16.mxu0 0
      %1505 = vmatpush1.bf16.msra.mxu0 %v1453
      %1506 = vmatprep.subr.bf16.mxu0 0
      %1507 = vmatpush1.bf16.msra.mxu0 %v1454
      %1508 = vmatprep.subr.bf16.mxu0 0
      %1509 = vmatpush1.bf16.msra.mxu0 %v1455
      %1510 = vmatprep.subr.bf16.mxu0 0
      %1511 = vmatpush1.bf16.msra.mxu0 %v1456
      %1512 = vmatprep.subr.bf16.mxu0 0
      %1513 = vmatpush1.bf16.msra.mxu0 %v1457
      %1514 = vmatprep.subr.bf16.mxu0 0
      %1515 = vmatpush1.bf16.msra.mxu0 %v1458
      %1516 = vmatprep.subr.bf16.mxu0 0
      %1517 = vmatpush1.bf16.msra.mxu0 %v1459
      %1518 = vmatprep.subr.bf16.mxu0 0
      %1519 = vmatpush1.bf16.msra.mxu0 %v1460
      %1520 = vmatprep.subr.bf16.mxu0 0
      %1521 = vmatpush1.bf16.msra.mxu0 %v1461
      %1522 = vmatprep.subr.bf16.mxu0 0
      %1523 = vmatpush1.bf16.msra.mxu0 %v1462
      %1524 = vmatprep.subr.bf16.mxu0 0
      %1525 = vmatpush1.bf16.msra.mxu0 %v1463
      %1526 = vmatprep.subr.bf16.mxu0 0
      %1527 = vmatpush1.bf16.msra.mxu0 %v1464
      %1528 = vmatprep.subr.bf16.mxu0 0
      %1529 = vmatpush1.bf16.msra.mxu0 %v1465
      %1530 = vmatprep.mubr.bf16.mxu0 %v1331
      %1531 = vmatmul.mubr.bf16.gmra.mrb[0].mxu0 %v1330
      %v1532 = vpop.f32.mrb[0].mxu0
      %v1533 = vadd.f32 0.0, %v1532
      %v1534 = vpop.f32.mrb[0].mxu0
      %v1535 = vpop.f32.mrb[0].mxu0
      %v1536 = vadd.f32 0.0, %v1535
      %v1537 = vpop.f32.mrb[0].mxu0
      %1538 = vmatprep.mubr.bf16.mxu0 %v1334
      %1539 = vmatmul.mubr.bf16.gmra.mrb[0].mxu0 %v1333
      %v1540 = vpop.f32.mrb[0].mxu0
      %v1541 = vadd.f32 0.0, %v1540
      %v1542 = vpop.f32.mrb[0].mxu0
      %v1543 = vpop.f32.mrb[0].mxu0
      %v1544 = vadd.f32 0.0, %v1543
      %v1545 = vpop.f32.mrb[0].mxu0
      %1546 = vmatprep.mubr.bf16.mxu0 %v1337
      %1547 = vmatmul.mubr.bf16.gmra.mrb[0].mxu0 %v1336
      %v1548 = vpop.f32.mrb[0].mxu0
      %v1549 = vadd.f32 0.0, %v1548
      %v1550 = vpop.f32.mrb[0].mxu0
      %v1551 = vpop.f32.mrb[0].mxu0
      %v1552 = vadd.f32 0.0, %v1551
      %v1553 = vpop.f32.mrb[0].mxu0
      %1554 = vmatprep.mubr.bf16.mxu0 %v1340
      %1555 = vmatmul.mubr.bf16.gmra.mrb[0].mxu0 %v1339
      %v1556 = vpop.f32.mrb[0].mxu0
      %v1557 = vadd.f32 0.0, %v1556
      %v1558 = vpop.f32.mrb[0].mxu0
      %v1559 = vpop.f32.mrb[0].mxu0
      %v1560 = vadd.f32 0.0, %v1559
      %v1561 = vpop.f32.mrb[0].mxu0
      %1562 = vdwg.mxu0
      %1563 = vmatprep.subr.bf16.mxu0 0
      %1564 = vmatpush1.bf16.msra.mxu0 %v1466
      %1565 = vmatprep.subr.bf16.mxu0 0
      %1566 = vmatpush1.bf16.msra.mxu0 %v1467
      %1567 = vmatprep.subr.bf16.mxu0 0
      %1568 = vmatpush1.bf16.msra.mxu0 %v1468
      %1569 = vmatprep.subr.bf16.mxu0 0
      %1570 = vmatpush1.bf16.msra.mxu0 %v1469
      %1571 = vmatprep.subr.bf16.mxu0 0
      %1572 = vmatpush1.bf16.msra.mxu0 %v1470
      %1573 = vmatprep.subr.bf16.mxu0 0
      %1574 = vmatpush1.bf16.msra.mxu0 %v1471
      %1575 = vmatprep.subr.bf16.mxu0 0
      %1576 = vmatpush1.bf16.msra.mxu0 %v1472
      %1577 = vmatprep.subr.bf16.mxu0 0
      %1578 = vmatpush1.bf16.msra.mxu0 %v1473
      %1579 = vmatprep.subr.bf16.mxu0 0
      %1580 = vmatpush1.bf16.msra.mxu0 0
      %1581 = vmatprep.subr.bf16.mxu0 0
      %1582 = vmatpush1.bf16.msra.mxu0 0
      %1583 = vmatprep.subr.bf16.mxu0 0
      %1584 = vmatpush1.bf16.msra.mxu0 0
      %1585 = vmatprep.subr.bf16.mxu0 0
      %1586 = vmatpush1.bf16.msra.mxu0 0
      %1587 = vmatprep.subr.bf16.mxu0 0
      %1588 = vmatpush1.bf16.msra.mxu0 0
      %1589 = vmatprep.subr.bf16.mxu0 0
      %1590 = vmatpush1.bf16.msra.mxu0 0
      %1591 = vmatprep.subr.bf16.mxu0 0
      %1592 = vmatpush1.bf16.msra.mxu0 0
      %1593 = vmatprep.subr.bf16.mxu0 0
      %1594 = vmatpush1.bf16.msra.mxu0 0
      %1595 = vmatprep.mubr.bf16.mxu0 0
      %1596 = vmatmul.mubr.bf16.gmra.mrb[0].mxu0 %v1332
      %v1597 = vpop.f32.mrb[0].mxu0
      %v1598 = vadd.f32 %v1533, %v1597
      %v1599 = vpop.f32.mrb[0].mxu0
      %v1600 = vpop.f32.mrb[0].mxu0
      %v1601 = vadd.f32 %v1536, %v1600
      %v1602 = vpop.f32.mrb[0].mxu0
      %1603 = vmatprep.mubr.bf16.mxu0 0
      %1604 = vmatmul.mubr.bf16.gmra.mrb[0].mxu0 %v1335
      %v1605 = vpop.f32.mrb[0].mxu0
      %v1606 = vadd.f32 %v1541, %v1605
      %v1607 = vpop.f32.mrb[0].mxu0
      %v1608 = vpop.f32.mrb[0].mxu0
      %v1609 = vadd.f32 %v1544, %v1608
      %v1610 = vpop.f32.mrb[0].mxu0
      %1611 = vmatprep.mubr.bf16.mxu0 0
      %1612 = vmatmul.mubr.bf16.gmra.mrb[0].mxu0 %v1338
      %v1613 = vpop.f32.mrb[0].mxu0
      %v1614 = vadd.f32 %v1549, %v1613
      %v1615 = vpop.f32.mrb[0].mxu0
      %v1616 = vpop.f32.mrb[0].mxu0
      %v1617 = vadd.f32 %v1552, %v1616
      %v1618 = vpop.f32.mrb[0].mxu0
      %1619 = vmatprep.mubr.bf16.mxu0 0
      %1620 = vmatmul.mubr.bf16.gmra.mrb[0].mxu0 %v1341
      %v1621 = vpop.f32.mrb[0].mxu0
      %v1622 = vadd.f32 %v1557, %v1621
      %v1623 = vpop.f32.mrb[0].mxu0
      %v1624 = vpop.f32.mrb[0].mxu0
      %v1625 = vadd.f32 %v1560, %v1624
      %v1626 = vpop.f32.mrb[0].mxu0
      %1627 = vdwg.mxu0
      %v1628 = vadd.f32 %v1217, %v1598
      %v1629 = vadd.f32 %v1218, %v1601
      %v1630 = vadd.f32 %v1219, %v1606
      %v1631 = vadd.f32 %v1220, %v1609
      %v1632 = vadd.f32 %v1221, %v1614
      %v1633 = vadd.f32 %v1222, %v1617
      %v1634 = vadd.f32 %v1223, %v1622
      %v1635 = vadd.f32 %v1224, %v1625
      %s1636 = scalar_lea.vmem [#allocation2], 24
      %v1637 = vld [vmem:[%s1636] sm:$0xff]
      %v1638 = vld [vmem:[%s1636 + $0x8] sm:$0xf]
      %v1639 = vld [vmem:[%s1636 + $0xc] sm:$0xff]
      %v1640 = vld [vmem:[%s1636 + $0x14] sm:$0xf]
      %v1641 = vld [vmem:[%s1636 + $0x18] sm:$0xff]
      %v1642 = vld [vmem:[%s1636 + $0x20] sm:$0xf]
      %v1643 = vld [vmem:[%s1636 + $0x24] sm:$0xff]
      %v1644 = vld [vmem:[%s1636 + $0x2c] sm:$0xf]
      %v1645 = vld [vmem:[%s1636 + $0x30] sm:$0xff]
      %v1646 = vld [vmem:[%s1636 + $0x38] sm:$0xf]
      %v1647 = vld [vmem:[%s1636 + $0x3c] sm:$0xff]
      %v1648 = vld [vmem:[%s1636 + $0x44] sm:$0xf]
      %v1649 = vld [vmem:[%s1636 + $0x48] sm:$0xff]
      %v1650 = vld [vmem:[%s1636 + $0x50] sm:$0xf]
      %v1651 = vld [vmem:[%s1636 + $0x54] sm:$0xff]
      %v1652 = vld [vmem:[%s1636 + $0x5c] sm:$0xf]
      %s1653 = scalar_lea.vmem %s4, 384
      %v1654 = vld [vmem:[%s1653] sm:$0xf]
      %v1655 = vld [vmem:[%s1653 + $0x4] sm:$0xf]
      %v1656 = vld [vmem:[%s1653 + $0x8] sm:$0xf]
      %v1657 = vld [vmem:[%s1653 + $0xc] sm:$0xf]
      %v1658 = vld [vmem:[%s1653 + $0x10] sm:$0xf]
      %v1659 = vld [vmem:[%s1653 + $0x14] sm:$0xf]
      %v1660 = vld [vmem:[%s1653 + $0x18] sm:$0xf]
      %v1661 = vld [vmem:[%s1653 + $0x1c] sm:$0xf]
      %v1662 = vld [vmem:[%s1653 + $0x20] sm:$0xf]
      %v1663 = vld [vmem:[%s1653 + $0x24] sm:$0xf]
      %v1664 = vld [vmem:[%s1653 + $0x28] sm:$0xf]
      %v1665 = vld [vmem:[%s1653 + $0x2c] sm:$0xf]
      %v1666 = vld [vmem:[%s1653 + $0x30] sm:$0xf]
      %v1667 = vld [vmem:[%s1653 + $0x34] sm:$0xf]
      %v1668 = vld [vmem:[%s1653 + $0x38] sm:$0xf]
      %v1669 = vld [vmem:[%s1653 + $0x3c] sm:$0xf]
      %v1670 = vld [vmem:[%s1653 + $0x40] sm:$0xf]
      %v1671 = vld [vmem:[%s1653 + $0x44] sm:$0xf]
      %v1672 = vld [vmem:[%s1653 + $0x48] sm:$0xf]
      %v1673 = vld [vmem:[%s1653 + $0x4c] sm:$0xf]
      %v1674 = vld [vmem:[%s1653 + $0x50] sm:$0xf]
      %v1675 = vld [vmem:[%s1653 + $0x54] sm:$0xf]
      %v1676 = vld [vmem:[%s1653 + $0x58] sm:$0xf]
      %v1677 = vld [vmem:[%s1653 + $0x5c] sm:$0xf]
      %v1678 = vld [vmem:[%s1653 + $0x60] sm:$0xf]
      %v1679 = vld [vmem:[%s1653 + $0x64] sm:$0xf]
      %v1680 = vld [vmem:[%s1653 + $0x68] sm:$0xf]
      %v1681 = vld [vmem:[%s1653 + $0x6c] sm:$0xf]
      %v1682 = vld [vmem:[%s1653 + $0x70] sm:$0xf]
      %v1683 = vld [vmem:[%s1653 + $0x74] sm:$0xf]
      %v1684 = vld [vmem:[%s1653 + $0x78] sm:$0xf]
      %v1685 = vld [vmem:[%s1653 + $0x7c] sm:$0xf]
      %v1686 = vld [vmem:[%s1653 + $0x80] sm:$0xf]
      %v1687 = vld [vmem:[%s1653 + $0x84] sm:$0xf]
      %v1688 = vld [vmem:[%s1653 + $0x88] sm:$0xf]
      %v1689 = vld [vmem:[%s1653 + $0x8c] sm:$0xf]
      %v1690 = vld [vmem:[%s1653 + $0x90] sm:$0xf]
      %v1691 = vld [vmem:[%s1653 + $0x94] sm:$0xf]
      %v1692 = vld [vmem:[%s1653 + $0x98] sm:$0xf]
      %v1693 = vld [vmem:[%s1653 + $0x9c] sm:$0xf]
      %v1694 = vld [vmem:[%s1653 + $0xa0] sm:$0xf]
      %v1695 = vld [vmem:[%s1653 + $0xa4] sm:$0xf]
      %v1696 = vld [vmem:[%s1653 + $0xa8] sm:$0xf]
      %v1697 = vld [vmem:[%s1653 + $0xac] sm:$0xf]
      %v1698 = vld [vmem:[%s1653 + $0xb0] sm:$0xf]
      %v1699 = vld [vmem:[%s1653 + $0xb4] sm:$0xf]
      %v1700 = vld [vmem:[%s1653 + $0xb8] sm:$0xf]
      %v1701 = vld [vmem:[%s1653 + $0xbc] sm:$0xf]
      %v1718 = vunpack.c.l.b16 %v1637
      %v1719 = vunpack.c.h.b16 %v1637
      %v1720 = vunpack.c.l.b16 %v1638
      %v1721 = vunpack.c.l.b16 %v1639
      %v1722 = vunpack.c.h.b16 %v1639
      %v1723 = vunpack.c.l.b16 %v1640
      %v1724 = vunpack.c.l.b16 %v1641
      %v1725 = vunpack.c.h.b16 %v1641
      %v1726 = vunpack.c.l.b16 %v1642
      %v1727 = vunpack.c.l.b16 %v1643
      %v1728 = vunpack.c.h.b16 %v1643
      %v1729 = vunpack.c.l.b16 %v1644
      %v1730 = vunpack.c.l.b16 %v1645
      %v1731 = vunpack.c.h.b16 %v1645
      %v1732 = vunpack.c.l.b16 %v1646
      %v1733 = vunpack.c.l.b16 %v1647
      %v1734 = vunpack.c.h.b16 %v1647
      %v1735 = vunpack.c.l.b16 %v1648
      %v1736 = vunpack.c.l.b16 %v1649
      %v1737 = vunpack.c.h.b16 %v1649
      %v1738 = vunpack.c.l.b16 %v1650
      %v1739 = vunpack.c.l.b16 %v1651
      %v1740 = vunpack.c.h.b16 %v1651
      %v1741 = vunpack.c.l.b16 %v1652
      %v1742 = vpack.c.b16 %v1721, %v1718
      %v1743 = vpack.c.b16 %v1722, %v1719
      %v1744 = vpack.c.b16 %v1723, %v1720
      %v1745 = vpack.c.b16 %v1727, %v1724
      %v1746 = vpack.c.b16 %v1728, %v1725
      %v1747 = vpack.c.b16 %v1729, %v1726
      %v1748 = vpack.c.b16 %v1733, %v1730
      %v1749 = vpack.c.b16 %v1734, %v1731
      %v1750 = vpack.c.b16 %v1735, %v1732
      %v1751 = vpack.c.b16 %v1739, %v1736
      %v1752 = vpack.c.b16 %v1740, %v1737
      %v1753 = vpack.c.b16 %v1741, %v1738
      %v1814 = vunpack.c.l.b16 %v1654
      %v1815 = vunpack.c.l.b16 %v1655
      %v1816 = vunpack.c.l.b16 %v1656
      %v1817 = vunpack.c.l.b16 %v1657
      %v1818 = vunpack.c.l.b16 %v1658
      %v1819 = vunpack.c.l.b16 %v1659
      %v1820 = vunpack.c.l.b16 %v1660
      %v1821 = vunpack.c.l.b16 %v1661
      %v1822 = vunpack.c.l.b16 %v1662
      %v1823 = vunpack.c.l.b16 %v1663
      %v1824 = vunpack.c.l.b16 %v1664
      %v1825 = vunpack.c.l.b16 %v1665
      %v1826 = vunpack.c.l.b16 %v1666
      %v1827 = vunpack.c.l.b16 %v1667
      %v1828 = vunpack.c.l.b16 %v1668
      %v1829 = vunpack.c.l.b16 %v1669
      %v1830 = vunpack.c.l.b16 %v1670
      %v1831 = vunpack.c.l.b16 %v1671
      %v1832 = vunpack.c.l.b16 %v1672
      %v1833 = vunpack.c.l.b16 %v1673
      %v1834 = vunpack.c.l.b16 %v1674
      %v1835 = vunpack.c.l.b16 %v1675
      %v1836 = vunpack.c.l.b16 %v1676
      %v1837 = vunpack.c.l.b16 %v1677
      %v1838 = vunpack.c.l.b16 %v1678
      %v1839 = vunpack.c.l.b16 %v1679
      %v1840 = vunpack.c.l.b16 %v1680
      %v1841 = vunpack.c.l.b16 %v1681
      %v1842 = vunpack.c.l.b16 %v1682
      %v1843 = vunpack.c.l.b16 %v1683
      %v1844 = vunpack.c.l.b16 %v1684
      %v1845 = vunpack.c.l.b16 %v1685
      %v1846 = vunpack.c.l.b16 %v1686
      %v1847 = vunpack.c.l.b16 %v1687
      %v1848 = vunpack.c.l.b16 %v1688
      %v1849 = vunpack.c.l.b16 %v1689
      %v1850 = vunpack.c.l.b16 %v1690
      %v1851 = vunpack.c.l.b16 %v1691
      %v1852 = vunpack.c.l.b16 %v1692
      %v1853 = vunpack.c.l.b16 %v1693
      %v1854 = vunpack.c.l.b16 %v1694
      %v1855 = vunpack.c.l.b16 %v1695
      %v1856 = vunpack.c.l.b16 %v1696
      %v1857 = vunpack.c.l.b16 %v1697
      %v1858 = vunpack.c.l.b16 %v1698
      %v1859 = vunpack.c.l.b16 %v1699
      %v1860 = vunpack.c.l.b16 %v1700
      %v1861 = vunpack.c.l.b16 %v1701
      %v1862 = vpack.c.b16 %v1815, %v1814
      %v1863 = vpack.c.b16 %v1817, %v1816
      %v1864 = vpack.c.b16 %v1819, %v1818
      %v1865 = vpack.c.b16 %v1821, %v1820
      %v1866 = vpack.c.b16 %v1823, %v1822
      %v1867 = vpack.c.b16 %v1825, %v1824
      %v1868 = vpack.c.b16 %v1827, %v1826
      %v1869 = vpack.c.b16 %v1829, %v1828
      %v1870 = vpack.c.b16 %v1831, %v1830
      %v1871 = vpack.c.b16 %v1833, %v1832
      %v1872 = vpack.c.b16 %v1835, %v1834
      %v1873 = vpack.c.b16 %v1837, %v1836
      %v1874 = vpack.c.b16 %v1839, %v1838
      %v1875 = vpack.c.b16 %v1841, %v1840
      %v1876 = vpack.c.b16 %v1843, %v1842
      %v1877 = vpack.c.b16 %v1845, %v1844
      %v1878 = vpack.c.b16 %v1847, %v1846
      %v1879 = vpack.c.b16 %v1849, %v1848
      %v1880 = vpack.c.b16 %v1851, %v1850
      %v1881 = vpack.c.b16 %v1853, %v1852
      %v1882 = vpack.c.b16 %v1855, %v1854
      %v1883 = vpack.c.b16 %v1857, %v1856
      %v1884 = vpack.c.b16 %v1859, %v1858
      %v1885 = vpack.c.b16 %v1861, %v1860
      %1910 = vmatprep.subr.bf16.mxu0 0
      %1911 = vmatpush1.bf16.msra.mxu0 %v1862
      %1912 = vmatprep.subr.bf16.mxu0 0
      %1913 = vmatpush1.bf16.msra.mxu0 %v1863
      %1914 = vmatprep.subr.bf16.mxu0 0
      %1915 = vmatpush1.bf16.msra.mxu0 %v1864
      %1916 = vmatprep.subr.bf16.mxu0 0
      %1917 = vmatpush1.bf16.msra.mxu0 %v1865
      %1918 = vmatprep.subr.bf16.mxu0 0
      %1919 = vmatpush1.bf16.msra.mxu0 %v1866
      %1920 = vmatprep.subr.bf16.mxu0 0
      %1921 = vmatpush1.bf16.msra.mxu0 %v1867
      %1922 = vmatprep.subr.bf16.mxu0 0
      %1923 = vmatpush1.bf16.msra.mxu0 %v1868
      %1924 = vmatprep.subr.bf16.mxu0 0
      %1925 = vmatpush1.bf16.msra.mxu0 %v1869
      %1926 = vmatprep.subr.bf16.mxu0 0
      %1927 = vmatpush1.bf16.msra.mxu0 %v1870
      %1928 = vmatprep.subr.bf16.mxu0 0
      %1929 = vmatpush1.bf16.msra.mxu0 %v1871
      %1930 = vmatprep.subr.bf16.mxu0 0
      %1931 = vmatpush1.bf16.msra.mxu0 %v1872
      %1932 = vmatprep.subr.bf16.mxu0 0
      %1933 = vmatpush1.bf16.msra.mxu0 %v1873
      %1934 = vmatprep.subr.bf16.mxu0 0
      %1935 = vmatpush1.bf16.msra.mxu0 %v1874
      %1936 = vmatprep.subr.bf16.mxu0 0
      %1937 = vmatpush1.bf16.msra.mxu0 %v1875
      %1938 = vmatprep.subr.bf16.mxu0 0
      %1939 = vmatpush1.bf16.msra.mxu0 %v1876
      %1940 = vmatprep.subr.bf16.mxu0 0
      %1941 = vmatpush1.bf16.msra.mxu0 %v1877
      %1942 = vmatprep.mubr.bf16.mxu0 %v1743
      %1943 = vmatmul.mubr.bf16.gmra.mrb[0].mxu0 %v1742
      %v1944 = vpop.f32.mrb[0].mxu0
      %v1945 = vadd.f32 0.0, %v1944
      %v1946 = vpop.f32.mrb[0].mxu0
      %v1947 = vpop.f32.mrb[0].mxu0
      %v1948 = vadd.f32 0.0, %v1947
      %v1949 = vpop.f32.mrb[0].mxu0
      %1950 = vmatprep.mubr.bf16.mxu0 %v1746
      %1951 = vmatmul.mubr.bf16.gmra.mrb[0].mxu0 %v1745
      %v1952 = vpop.f32.mrb[0].mxu0
      %v1953 = vadd.f32 0.0, %v1952
      %v1954 = vpop.f32.mrb[0].mxu0
      %v1955 = vpop.f32.mrb[0].mxu0
      %v1956 = vadd.f32 0.0, %v1955
      %v1957 = vpop.f32.mrb[0].mxu0
      %1958 = vmatprep.mubr.bf16.mxu0 %v1749
      %1959 = vmatmul.mubr.bf16.gmra.mrb[0].mxu0 %v1748
      %v1960 = vpop.f32.mrb[0].mxu0
      %v1961 = vadd.f32 0.0, %v1960
      %v1962 = vpop.f32.mrb[0].mxu0
      %v1963 = vpop.f32.mrb[0].mxu0
      %v1964 = vadd.f32 0.0, %v1963
      %v1965 = vpop.f32.mrb[0].mxu0
      %1966 = vmatprep.mubr.bf16.mxu0 %v1752
      %1967 = vmatmul.mubr.bf16.gmra.mrb[0].mxu0 %v1751
      %v1968 = vpop.f32.mrb[0].mxu0
      %v1969 = vadd.f32 0.0, %v1968
      %v1970 = vpop.f32.mrb[0].mxu0
      %v1971 = vpop.f32.mrb[0].mxu0
      %v1972 = vadd.f32 0.0, %v1971
      %v1973 = vpop.f32.mrb[0].mxu0
      %1974 = vdwg.mxu0
      %1975 = vmatprep.subr.bf16.mxu0 0
      %1976 = vmatpush1.bf16.msra.mxu0 %v1878
      %1977 = vmatprep.subr.bf16.mxu0 0
      %1978 = vmatpush1.bf16.msra.mxu0 %v1879
      %1979 = vmatprep.subr.bf16.mxu0 0
      %1980 = vmatpush1.bf16.msra.mxu0 %v1880
      %1981 = vmatprep.subr.bf16.mxu0 0
      %1982 = vmatpush1.bf16.msra.mxu0 %v1881
      %1983 = vmatprep.subr.bf16.mxu0 0
      %1984 = vmatpush1.bf16.msra.mxu0 %v1882
      %1985 = vmatprep.subr.bf16.mxu0 0
      %1986 = vmatpush1.bf16.msra.mxu0 %v1883
      %1987 = vmatprep.subr.bf16.mxu0 0
      %1988 = vmatpush1.bf16.msra.mxu0 %v1884
      %1989 = vmatprep.subr.bf16.mxu0 0
      %1990 = vmatpush1.bf16.msra.mxu0 %v1885
      %1991 = vmatprep.subr.bf16.mxu0 0
      %1992 = vmatpush1.bf16.msra.mxu0 0
      %1993 = vmatprep.subr.bf16.mxu0 0
      %1994 = vmatpush1.bf16.msra.mxu0 0
      %1995 = vmatprep.subr.bf16.mxu0 0
      %1996 = vmatpush1.bf16.msra.mxu0 0
      %1997 = vmatprep.subr.bf16.mxu0 0
      %1998 = vmatpush1.bf16.msra.mxu0 0
      %1999 = vmatprep.subr.bf16.mxu0 0
      %2000 = vmatpush1.bf16.msra.mxu0 0
      %2001 = vmatprep.subr.bf16.mxu0 0
      %2002 = vmatpush1.bf16.msra.mxu0 0
      %2003 = vmatprep.subr.bf16.mxu0 0
      %2004 = vmatpush1.bf16.msra.mxu0 0
      %2005 = vmatprep.subr.bf16.mxu0 0
      %2006 = vmatpush1.bf16.msra.mxu0 0
      %2007 = vmatprep.mubr.bf16.mxu0 0
      %2008 = vmatmul.mubr.bf16.gmra.mrb[0].mxu0 %v1744
      %v2009 = vpop.f32.mrb[0].mxu0
      %v2010 = vadd.f32 %v1945, %v2009
      %v2011 = vpop.f32.mrb[0].mxu0
      %v2012 = vpop.f32.mrb[0].mxu0
      %v2013 = vadd.f32 %v1948, %v2012
      %v2014 = vpop.f32.mrb[0].mxu0
      %2015 = vmatprep.mubr.bf16.mxu0 0
      %2016 = vmatmul.mubr.bf16.gmra.mrb[0].mxu0 %v1747
      %v2017 = vpop.f32.mrb[0].mxu0
      %v2018 = vadd.f32 %v1953, %v2017
      %v2019 = vpop.f32.mrb[0].mxu0
      %v2020 = vpop.f32.mrb[0].mxu0
      %v2021 = vadd.f32 %v1956, %v2020
      %v2022 = vpop.f32.mrb[0].mxu0
      %2023 = vmatprep.mubr.bf16.mxu0 0
      %2024 = vmatmul.mubr.bf16.gmra.mrb[0].mxu0 %v1750
      %v2025 = vpop.f32.mrb[0].mxu0
      %v2026 = vadd.f32 %v1961, %v2025
      %v2027 = vpop.f32.mrb[0].mxu0
      %v2028 = vpop.f32.mrb[0].mxu0
      %v2029 = vadd.f32 %v1964, %v2028
      %v2030 = vpop.f32.mrb[0].mxu0
      %2031 = vmatprep.mubr.bf16.mxu0 0
      %2032 = vmatmul.mubr.bf16.gmra.mrb[0].mxu0 %v1753
      %v2033 = vpop.f32.mrb[0].mxu0
      %v2034 = vadd.f32 %v1969, %v2033
      %v2035 = vpop.f32.mrb[0].mxu0
      %v2036 = vpop.f32.mrb[0].mxu0
      %v2037 = vadd.f32 %v1972, %v2036
      %v2038 = vpop.f32.mrb[0].mxu0
      %2039 = vdwg.mxu0
      %v2040 = vadd.f32 %v1628, %v2010
      %v2041 = vadd.f32 %v1629, %v2013
      %v2042 = vadd.f32 %v1630, %v2018
      %v2043 = vadd.f32 %v1631, %v2021
      %v2044 = vadd.f32 %v1632, %v2026
      %v2045 = vadd.f32 %v1633, %v2029
      %v2046 = vadd.f32 %v1634, %v2034
      %v2047 = vadd.f32 %v1635, %v2037
      %v2048 = vpack.c.bf16 %v2040, %v2040
      %v2049 = vpack.c.bf16 %v2041, %v2041
      %v2050 = vpack.c.bf16 %v2042, %v2042
      %v2051 = vpack.c.bf16 %v2043, %v2043
      %v2052 = vpack.c.bf16 %v2044, %v2044
      %v2053 = vpack.c.bf16 %v2045, %v2045
      %v2054 = vpack.c.bf16 %v2046, %v2046
      %v2055 = vpack.c.bf16 %v2047, %v2047
      %2056 = vst [vmem:[%s251] sm:$0xf] %v2048
      %2057 = vst [vmem:[%s251 + $0x4] sm:$0xf] %v2049
      %2058 = vst [vmem:[%s251 + $0x8] sm:$0xf] %v2050
      %2059 = vst [vmem:[%s251 + $0xc] sm:$0xf] %v2051
      %2060 = vst [vmem:[%s251 + $0x10] sm:$0xf] %v2052
      %2061 = vst [vmem:[%s251 + $0x14] sm:$0xf] %v2053
      %2062 = vst [vmem:[%s251 + $0x18] sm:$0xf] %v2054
      %2063 = vst [vmem:[%s251 + $0x1c] sm:$0xf] %v2055
      %p2064 = scmp.lt.s32.totalorder %s17, 1
      %s2065 = scalar_select %p2064, %s17, 1
      %s2066 = smul.addr %s2065, 8
      %s2067 = smul.addr %s2066, 4
      %s2068 = scalar_lea.vmem %s6, %s2067
      // Predicated region
      $region45: #{downsample_forward.4} parent=43 // pred_check
        %p2069 = pneg %p166
      $region46: #{downsample_forward.4} parent=43 // pred_check_branch
        %2071 = sbr.rel (%p2069) target = $region48
      $region47: #{downsample_forward.4} parent=43 // pred_region
        _
      $region48: #{downsample_forward.4} parent=43 // pred_fallthru
        _
    $region44: #{downsample_forward.4} parent=5 // pred_fallthru
      _
    %p2072 = scmp.le.s32.totalorder 2, %s12
    // Predicated region
    $region49: #{downsample_forward.4} parent=5 // pred_check
      %p2073 = pneg %p2072
    $region50: #{downsample_forward.4} parent=5 // pred_check_branch
      %2075 = sbr.rel (%p2073) target = $region52
    $region51: #{downsample_forward.4} parent=5 // pred_region
      %s2076 = ssub.s32 %s12, 2
      // Predicated region
      $region53: #{downsample_forward.4} parent=51 // pred_check
        %p2077 = pneg %p172
      $region54: #{downsample_forward.4} parent=51 // pred_check_branch
        %2079 = sbr.rel (%p2077) target = $region56
      $region55: #{downsample_forward.4} parent=51 // pred_region
        %p2080 = scmp.lt.s32.totalorder %s18, 1
        %s2081 = scalar_select %p2080, %s18, 1
        %s2082 = smul.addr %s2081, 8
        %s2083 = smul.addr %s2082, 4
        %s2084 = scalar_lea.vmem %s6, %s2083
      $region56: #{downsample_forward.4} parent=51 // pred_fallthru
        _
    $region52: #{downsample_forward.4} parent=5 // pred_fallthru
      _
  $region6: #{downsample_forward.4} parent=0 // loop_footer
    %s16 = sadd.s32 1, %s12
  $region7: #{downsample_forward.4} parent=0 // loop_footer_branch
    %11 = sbr.rel target = $region3
  $region8: #{downsample_forward.4} parent=0 // loop_exit
    _

// kernel: downsample_forward.5
$region0: #{downsample_forward.5}
  #allocation0 [shape = 'u32[]', space=smem, size = 0x4, offset = 0x4, fixed_abs, tag = 'smem constant byte address 0x4 - core index']
  #allocation1 [shape = 'u32[144,128]{1,0:T(1,128)}', space=vmem, size = 0x12000, scoped, tag = 'internal scratch']
  #allocation2 [shape = 'bf16[10,8,384]{2,1,0:T(8,128)(2,1)}', space=vmem, size = 0xf000, scoped, tag = 'scratch operand']
  %s0 = inlined_call_operand.vmem [shape: bf16[2,8,8,128], index: 0, kind: input, shape index: {}]
  %s1 = inlined_call_operand.vmem [shape: f32[1,128], index: 1, kind: input, shape index: {}]
  %s2 = inlined_call_operand.vmem [shape: f32[1,128], index: 2, kind: input, shape index: {}]
  %s3 = inlined_call_operand.vmem [shape: bf16[128,128], index: 3, kind: input, shape index: {}]
  %s4 = inlined_call_operand.vmem [shape: bf16[3,384,128], index: 4, kind: input, shape index: {}]
  %s5 = inlined_call_operand.vmem [shape: f32[1,128], index: 5, kind: input, shape index: {}]
  %s6 = inlined_call_operand.vmem [shape: bf16[2,8,8,128], index: 6, kind: input, shape index: {}]
  %s7 = inlined_call_operand.hbm [shape: f32[2,8,8,128], index: 7, kind: output, shape index: {}]
  %s8 = sld [smem:[#allocation0]]
  $region61: #{downsample_forward.5} parent=0
    _
  %s10 = ssub.s32 1, %s8
  %s11 = scalar_select 0, %s10, %s8
  $region1: #{downsample_forward.5} parent=0
    #allocation3 [shape = 'u8[65536]{0}', space=vmem, size = 0x10000, scoped, tag = 'output window, operand 0']
    #allocation4 [shape = 's32[2]{0}', space=sflag, size = 0x8, scoped, tag = 'scoped memory for downsample_forward.5']
    %12 = vsyncpa [#allocation4], 0
    %s13 = scalar_lea.sflag [#allocation4], 1
    %14 = vsyncpa %s13, 0
    loop: start=0, step=1, limit=4
    $region2: #{downsample_forward.5} parent=1 // loop_pre_header
      _
    $region3: #{downsample_forward.5} parent=1 // loop_header
      %s16 = sphi 0, %s20
      %p17 = scmp.ge.s32.totalorder %s16, 4
      %s26 = sphi 0, %s28
      %s29 = sphi 0, %s26
      %s30 = sphi 0, %s29
      %s46 = sphi 0, %s30
      %s50 = sphi 0, %s50
      %s52 = sphi 0, %s50
      %s53 = sphi 0, %s52
      %s67 = sphi 0, %s53
      %s71 = sphi 0, %s71
      %s73 = sphi 0, %s71
      %s74 = sphi 0, %s73
      %s88 = sphi 0, %s74
      %s92 = sphi 0, %s92
      %s94 = sphi 0, %s92
      %s95 = sphi 0, %s94
      %s109 = sphi 0, %s95
      %s113 = sphi 0, %s113
      %s115 = sphi 0, %s113
      %s116 = sphi 0, %s115
      %s130 = sphi 0, %s116
      %s134 = sphi 0, %s134
      %s136 = sphi 0, %s134
      %s137 = sphi 0, %s136
      %s151 = sphi 0, %s137
      %s157 = sphi 0, %s159
      %s160 = sphi 0, %s157
      %s161 = sphi 0, %s160
      %s177 = sphi 0, %s161
      %s183 = sphi 0, %s185
      %s186 = sphi 0, %s183
      %s187 = sphi 0, %s186
      %s203 = sphi 0, %s187
    $region4: #{downsample_forward.5} parent=1 // loop_header_branch
      %19 = sbr.rel (%p17) target = $region8
    $region5: #{downsample_forward.5} parent=1 // loop_body
      %s21 = ssub.s32 %s16, 1
      %s22 = ssub.s32 %s16, 2
      %s23 = sadd.s32 %s16, 1
      %s24 = ssub.s32 %s16, %s23
      %p25 = scmp.eq.s32.totalorder %s24, 0
      %s27 = sadd.s32 %s26, 1
      %s28 = scalar_select %p25, %s26, %s27
      %p31 = pneg %p25
      %p32 = scmp.eq.s32.totalorder %s16, 1
      %p33 = por %p31, %p32
      %p34 = scmp.ne.s32.totalorder %s26, %s29
      %p35 = scmp.eq.s32.totalorder %s16, 0
      %p36 = por %p34, %p35
      %p37 = scmp.ne.s32.totalorder %s26, %s29
      %p38 = scmp.eq.s32.totalorder %s21, 1
      %p39 = por %p37, %p38
      %p40 = scmp.ne.s32.totalorder %s29, %s30
      %p41 = scmp.eq.s32.totalorder %s21, 0
      %p42 = por %p40, %p41
      %p43 = scmp.ne.s32.totalorder %s29, %s30
      %p44 = scmp.eq.s32.totalorder %s22, 1
      %p45 = por %p43, %p44
      %p47 = scmp.ne.s32.totalorder %s30, %s46
      %p48 = scmp.eq.s32.totalorder %s22, 0
      %p49 = por %p47, %p48
      %s51 = sadd.s32 %s50, 1
      %p54 = scmp.eq.s32.totalorder %s16, 1
      %p55 = scmp.ne.s32.totalorder %s50, %s52
      %p56 = scmp.eq.s32.totalorder %s16, 0
      %p57 = por %p55, %p56
      %p58 = scmp.ne.s32.totalorder %s50, %s52
      %p59 = scmp.eq.s32.totalorder %s21, 1
      %p60 = por %p58, %p59
      %p61 = scmp.ne.s32.totalorder %s52, %s53
      %p62 = scmp.eq.s32.totalorder %s21, 0
      %p63 = por %p61, %p62
      %p64 = scmp.ne.s32.totalorder %s52, %s53
      %p65 = scmp.eq.s32.totalorder %s22, 1
      %p66 = por %p64, %p65
      %p68 = scmp.ne.s32.totalorder %s53, %s67
      %p69 = scmp.eq.s32.totalorder %s22, 0
      %p70 = por %p68, %p69
      %s72 = sadd.s32 %s71, 1
      %p75 = scmp.eq.s32.totalorder %s16, 1
      %p76 = scmp.ne.s32.totalorder %s71, %s73
      %p77 = scmp.eq.s32.totalorder %s16, 0
      %p78 = por %p76, %p77
      %p79 = scmp.ne.s32.totalorder %s71, %s73
      %p80 = scmp.eq.s32.totalorder %s21, 1
      %p81 = por %p79, %p80
      %p82 = scmp.ne.s32.totalorder %s73, %s74
      %p83 = scmp.eq.s32.totalorder %s21, 0
      %p84 = por %p82, %p83
      %p85 = scmp.ne.s32.totalorder %s73, %s74
      %p86 = scmp.eq.s32.totalorder %s22, 1
      %p87 = por %p85, %p86
      %p89 = scmp.ne.s32.totalorder %s74, %s88
      %p90 = scmp.eq.s32.totalorder %s22, 0
      %p91 = por %p89, %p90
      %s93 = sadd.s32 %s92, 1
      %p96 = scmp.eq.s32.totalorder %s16, 1
      %p97 = scmp.ne.s32.totalorder %s92, %s94
      %p98 = scmp.eq.s32.totalorder %s16, 0
      %p99 = por %p97, %p98
      %p100 = scmp.ne.s32.totalorder %s92, %s94
      %p101 = scmp.eq.s32.totalorder %s21, 1
      %p102 = por %p100, %p101
      %p103 = scmp.ne.s32.totalorder %s94, %s95
      %p104 = scmp.eq.s32.totalorder %s21, 0
      %p105 = por %p103, %p104
      %p106 = scmp.ne.s32.totalorder %s94, %s95
      %p107 = scmp.eq.s32.totalorder %s22, 1
      %p108 = por %p106, %p107
      %p110 = scmp.ne.s32.totalorder %s95, %s109
      %p111 = scmp.eq.s32.totalorder %s22, 0
      %p112 = por %p110, %p111
      %s114 = sadd.s32 %s113, 1
      %p117 = scmp.eq.s32.totalorder %s16, 1
      %p118 = scmp.ne.s32.totalorder %s113, %s115
      %p119 = scmp.eq.s32.totalorder %s16, 0
      %p120 = por %p118, %p119
      %p121 = scmp.ne.s32.totalorder %s113, %s115
      %p122 = scmp.eq.s32.totalorder %s21, 1
      %p123 = por %p121, %p122
      %p124 = scmp.ne.s32.totalorder %s115, %s116
      %p125 = scmp.eq.s32.totalorder %s21, 0
      %p126 = por %p124, %p125
      %p127 = scmp.ne.s32.totalorder %s115, %s116
      %p128 = scmp.eq.s32.totalorder %s22, 1
      %p129 = por %p127, %p128
      %p131 = scmp.ne.s32.totalorder %s116, %s130
      %p132 = scmp.eq.s32.totalorder %s22, 0
      %p133 = por %p131, %p132
      %s135 = sadd.s32 %s134, 1
      %p138 = scmp.eq.s32.totalorder %s16, 1
      %p139 = scmp.ne.s32.totalorder %s134, %s136
      %p140 = scmp.eq.s32.totalorder %s16, 0
      %p141 = por %p139, %p140
      %p142 = scmp.ne.s32.totalorder %s134, %s136
      %p143 = scmp.eq.s32.totalorder %s21, 1
      %p144 = por %p142, %p143
      %p145 = scmp.ne.s32.totalorder %s136, %s137
      %p146 = scmp.eq.s32.totalorder %s21, 0
      %p147 = por %p145, %p146
      %p148 = scmp.ne.s32.totalorder %s136, %s137
      %p149 = scmp.eq.s32.totalorder %s22, 1
      %p150 = por %p148, %p149
      %p152 = scmp.ne.s32.totalorder %s137, %s151
      %p153 = scmp.eq.s32.totalorder %s22, 0
      %p154 = por %p152, %p153
      %s155 = ssub.s32 %s16, %s23
      %p156 = scmp.eq.s32.totalorder %s155, 0
      %s158 = sadd.s32 %s157, 1
      %s159 = scalar_select %p156, %s157, %s158
      %p162 = pneg %p156
      %p163 = scmp.eq.s32.totalorder %s16, 1
      %p164 = por %p162, %p163
      %p165 = scmp.ne.s32.totalorder %s157, %s160
      %p166 = scmp.eq.s32.totalorder %s16, 0
      %p167 = por %p165, %p166
      %p168 = scmp.ne.s32.totalorder %s157, %s160
      %p169 = scmp.eq.s32.totalorder %s21, 1
      %p170 = por %p168, %p169
      %p171 = scmp.ne.s32.totalorder %s160, %s161
      %p172 = scmp.eq.s32.totalorder %s21, 0
      %p173 = por %p171, %p172
      %p174 = scmp.ne.s32.totalorder %s160, %s161
      %p175 = scmp.eq.s32.totalorder %s22, 1
      %p176 = por %p174, %p175
      %p178 = scmp.ne.s32.totalorder %s161, %s177
      %p179 = scmp.eq.s32.totalorder %s22, 0
      %p180 = por %p178, %p179
      %s181 = ssub.s32 %s16, %s23
      %p182 = scmp.eq.s32.totalorder %s181, 0
      %s184 = sadd.s32 %s183, 1
      %s185 = scalar_select %p182, %s183, %s184
      %p188 = pneg %p182
      %p189 = scmp.eq.s32.totalorder %s16, 1
      %p190 = por %p188, %p189
      %p191 = scmp.ne.s32.totalorder %s183, %s186
      %p192 = scmp.eq.s32.totalorder %s16, 0
      %p193 = por %p191, %p192
      %p194 = scmp.ne.s32.totalorder %s183, %s186
      %p195 = scmp.eq.s32.totalorder %s21, 1
      %p196 = por %p194, %p195
      %p197 = scmp.ne.s32.totalorder %s186, %s187
      %p198 = scmp.eq.s32.totalorder %s21, 0
      %p199 = por %p197, %p198
      %p200 = scmp.ne.s32.totalorder %s186, %s187
      %p201 = scmp.eq.s32.totalorder %s22, 1
      %p202 = por %p200, %p201
      %p204 = scmp.ne.s32.totalorder %s187, %s203
      %p205 = scmp.eq.s32.totalorder %s22, 0
      %p206 = por %p204, %p205
      %p207 = scmp.le.s32.totalorder 1, %s16
      %p208 = scmp.lt.s32.totalorder %s16, 3
      %p209 = pnand %p207, %p208
      %p210 = pneg %p209
      // Predicated region
      $region9: #{downsample_forward.5} parent=5 // pred_check
        _
      $region10: #{downsample_forward.5} parent=5 // pred_check_branch
        %212 = sbr.rel (%p209) target = $region12
      $region11: #{downsample_forward.5} parent=5 // pred_region
        %s213 = ssub.s32 %s16, 1
        // Predicated region
        $region13: #{downsample_forward.5} parent=11 // pred_check
          %p214 = pneg %p63
        $region14: #{downsample_forward.5} parent=11 // pred_check_branch
          %216 = sbr.rel (%p214) target = $region16
        $region15: #{downsample_forward.5} parent=11 // pred_region
          _
        $region16: #{downsample_forward.5} parent=11 // pred_fallthru
          _
        // Predicated region
        $region17: #{downsample_forward.5} parent=11 // pred_check
          %p217 = pneg %p84
        $region18: #{downsample_forward.5} parent=11 // pred_check_branch
          %219 = sbr.rel (%p217) target = $region20
        $region19: #{downsample_forward.5} parent=11 // pred_region
          _
        $region20: #{downsample_forward.5} parent=11 // pred_fallthru
          _
        // Predicated region
        $region21: #{downsample_forward.5} parent=11 // pred_check
          %p220 = pneg %p105
        $region22: #{downsample_forward.5} parent=11 // pred_check_branch
          %222 = sbr.rel (%p220) target = $region24
        $region23: #{downsample_forward.5} parent=11 // pred_region
          _
        $region24: #{downsample_forward.5} parent=11 // pred_fallthru
          _
        // Predicated region
        $region25: #{downsample_forward.5} parent=11 // pred_check
          %p223 = pneg %p126
        $region26: #{downsample_forward.5} parent=11 // pred_check_branch
          %225 = sbr.rel (%p223) target = $region28
        $region27: #{downsample_forward.5} parent=11 // pred_region
          _
        $region28: #{downsample_forward.5} parent=11 // pred_fallthru
          _
        // Predicated region
        $region29: #{downsample_forward.5} parent=11 // pred_check
          %p226 = pneg %p147
        $region30: #{downsample_forward.5} parent=11 // pred_check_branch
          %228 = sbr.rel (%p226) target = $region32
        $region31: #{downsample_forward.5} parent=11 // pred_region
          _
        $region32: #{downsample_forward.5} parent=11 // pred_fallthru
          _
      $region12: #{downsample_forward.5} parent=5 // pred_fallthru
        _
      %p229 = scmp.lt.s32.totalorder %s16, 2
      // Predicated region
      $region33: #{downsample_forward.5} parent=5 // pred_check
        %p230 = pneg %p229
      $region34: #{downsample_forward.5} parent=5 // pred_check_branch
        %232 = sbr.rel (%p230) target = $region36
      $region35: #{downsample_forward.5} parent=5 // pred_region
        // Predicated region
        $region37: #{downsample_forward.5} parent=35 // pred_check
          %p233 = pneg %p36
        $region38: #{downsample_forward.5} parent=35 // pred_check_branch
          %235 = sbr.rel (%p233) target = $region40
        $region39: #{downsample_forward.5} parent=35 // pred_region
          %p236 = scmp.lt.s32.totalorder %s16, 1
          %s237 = scalar_select %p236, %s16, 1
          %s238 = smul.addr %s237, 8
          %s239 = smul.addr %s238, 4
          %s240 = scalar_lea.vmem %s0, %s239
        $region40: #{downsample_forward.5} parent=35 // pred_fallthru
          _
        // Predicated region
        $region41: #{downsample_forward.5} parent=35 // pred_check
          %p241 = pneg %p167
        $region42: #{downsample_forward.5} parent=35 // pred_check_branch
          %243 = sbr.rel (%p241) target = $region44
        $region43: #{downsample_forward.5} parent=35 // pred_region
          %p244 = scmp.lt.s32.totalorder %s16, 1
          %s245 = scalar_select %p244, %s16, 1
          %s246 = smul.addr %s245, 8
          %s247 = smul.addr %s246, 4
          %s248 = scalar_lea.vmem %s6, %s247
        $region44: #{downsample_forward.5} parent=35 // pred_fallthru
          _
      $region36: #{downsample_forward.5} parent=5 // pred_fallthru
        _
      %p249 = scmp.le.s32.totalorder 1, %s16
      %p250 = scmp.lt.s32.totalorder %s16, 3
      %p251 = pnand %p249, %p250
      %p252 = pneg %p251
      // Predicated region
      $region45: #{downsample_forward.5} parent=5 // pred_check
        _
      $region46: #{downsample_forward.5} parent=5 // pred_check_branch
        %254 = sbr.rel (%p251) target = $region48
      $region47: #{downsample_forward.5} parent=5 // pred_region
        %s255 = ssub.s32 %s16, 1
        %p256 = scmp.lt.s32.totalorder %s21, 1
        %s257 = scalar_select %p256, %s21, 1
        %s258 = smul.addr %s257, 8
        %s259 = smul.addr %s258, 4
        %s260 = scalar_lea.vmem %s0, %s259
        %p261 = pneg %p42
        %p262 = pneg %p39
        %p263 = pneg %p63
        %p264 = pneg %p60
        %p265 = pneg %p84
        %p266 = pneg %p81
        %p267 = pneg %p105
        %p268 = pneg %p102
        %p269 = pneg %p126
        %p270 = pneg %p123
        %p271 = pneg %p147
        %p272 = pneg %p144
        %p273 = scmp.lt.s32.totalorder %s21, 1
        %s274 = scalar_select %p273, %s21, 1
        %s275 = smul.addr %s274, 8
        %s276 = smul.addr %s275, 4
        %s277 = scalar_lea.vmem %s6, %s276
        %p278 = pneg %p173
        %p279 = pneg %p170
        %p280 = pneg %p199
        %p281 = pneg %p196
        %s282 = sand.u32 %s186, 1
        %s283 = scalar_lea.sflag [#allocation4], %s282
        %s284 = sand.u32 %s186, 1
        %s285 = smul.addr %s284, 64
        %s286 = scalar_lea.vmem [#allocation3], %s285
        %p287 = scmp.lt.s32.totalorder %s21, 1
        %s288 = scalar_select %p287, %s21, 1
        %s289 = smul.addr %s288, 8
        %s290 = smul.addr %s289, 4
        %s291 = scalar_lea.vmem %s0, %s290
        %p292 = scmp.lt.s32.totalorder %s21, 1
        %s293 = scalar_select %p292, %s21, 1
        %s294 = smul.addr %s293, 8
        %s295 = smul.addr %s294, 4
        %s296 = scalar_lea.vmem %s6, %s295
        %v298 = vld [vmem:[%s291] sm:$0xf]
        %v299 = vld [vmem:[%s291 + $0x4] sm:$0xf]
        %v300 = vld [vmem:[%s291 + $0x8] sm:$0xf]
        %v301 = vld [vmem:[%s291 + $0xc] sm:$0xf]
        %v302 = vld [vmem:[%s291 + $0x10] sm:$0xf]
        %v303 = vld [vmem:[%s291 + $0x14] sm:$0xf]
        %v304 = vld [vmem:[%s291 + $0x18] sm:$0xf]
        %v305 = vld [vmem:[%s291 + $0x1c] sm:$0xf]
        %v306 = vunpack.c.l.bf16 %v298
        %v307 = vunpack.c.l.bf16 %v299
        %v308 = vunpack.c.l.bf16 %v300
        %v309 = vunpack.c.l.bf16 %v301
        %v310 = vunpack.c.l.bf16 %v302
        %v311 = vunpack.c.l.bf16 %v303
        %v312 = vunpack.c.l.bf16 %v304
        %v313 = vunpack.c.l.bf16 %v305
        %v314 = vadd.f32 %v306, %v307
        %v315 = vadd.f32 %v314, %v308
        %v316 = vadd.f32 %v315, %v309
        %v317 = vadd.f32 %v316, %v310
        %v318 = vadd.f32 %v317, %v311
        %v319 = vadd.f32 %v318, %v312
        %v320 = vadd.f32 %v319, %v313
        %v321 = vrot.slane %v320, 4
        %v322 = vadd.f32 %v320, %v321
        %v323 = vrot.slane %v322, 2
        %v324 = vadd.f32 %v322, %v323
        %v325 = vrot.slane %v324, 1
        %v326 = vadd.f32 %v324, %v325
        %v327 = vpack.c.bf16 %v326, %v326
        %v328 = vld [vmem:[%s3] sm:$0xf]
        %v329 = vld [vmem:[%s3 + $0x4] sm:$0xf]
        %v330 = vld [vmem:[%s3 + $0x8] sm:$0xf]
        %v331 = vld [vmem:[%s3 + $0xc] sm:$0xf]
        %v332 = vld [vmem:[%s3 + $0x10] sm:$0xf]
        %v333 = vld [vmem:[%s3 + $0x14] sm:$0xf]
        %v334 = vld [vmem:[%s3 + $0x18] sm:$0xf]
        %v335 = vld [vmem:[%s3 + $0x1c] sm:$0xf]
        %v336 = vld [vmem:[%s3 + $0x20] sm:$0xf]
        %v337 = vld [vmem:[%s3 + $0x24] sm:$0xf]
        %v338 = vld [vmem:[%s3 + $0x28] sm:$0xf]
        %v339 = vld [vmem:[%s3 + $0x2c] sm:$0xf]
        %v340 = vld [vmem:[%s3 + $0x30] sm:$0xf]
        %v341 = vld [vmem:[%s3 + $0x34] sm:$0xf]
        %v342 = vld [vmem:[%s3 + $0x38] sm:$0xf]
        %v343 = vld [vmem:[%s3 + $0x3c] sm:$0xf]
        %v360 = vunpack.c.l.b16 %v328
        %v361 = vunpack.c.l.b16 %v329
        %v362 = vunpack.c.l.b16 %v330
        %v363 = vunpack.c.l.b16 %v331
        %v364 = vunpack.c.l.b16 %v332
        %v365 = vunpack.c.l.b16 %v333
        %v366 = vunpack.c.l.b16 %v334
        %v367 = vunpack.c.l.b16 %v335
        %v368 = vunpack.c.l.b16 %v336
        %v369 = vunpack.c.l.b16 %v337
        %v370 = vunpack.c.l.b16 %v338
        %v371 = vunpack.c.l.b16 %v339
        %v372 = vunpack.c.l.b16 %v340
        %v373 = vunpack.c.l.b16 %v341
        %v374 = vunpack.c.l.b16 %v342
        %v375 = vunpack.c.l.b16 %v343
        %v376 = vpack.c.b16 %v361, %v360
        %v377 = vpack.c.b16 %v363, %v362
        %v378 = vpack.c.b16 %v365, %v364
        %v379 = vpack.c.b16 %v367, %v366
        %v380 = vpack.c.b16 %v369, %v368
        %v381 = vpack.c.b16 %v371, %v370
        %v382 = vpack.c.b16 %v373, %v372
        %v383 = vpack.c.b16 %v375, %v374
        %392 = vmatprep.subr.bf16.mxu0 0
        %393 = vmatpush1.bf16.msra.mxu0 %v376
        %394 = vmatprep.subr.bf16.mxu0 0
        %395 = vmatpush1.bf16.msra.mxu0 %v377
        %396 = vmatprep.subr.bf16.mxu0 0
        %397 = vmatpush1.bf16.msra.mxu0 %v378
        %398 = vmatprep.subr.bf16.mxu0 0
        %399 = vmatpush1.bf16.msra.mxu0 %v379
        %400 = vmatprep.subr.bf16.mxu0 0
        %401 = vmatpush1.bf16.msra.mxu0 %v380
        %402 = vmatprep.subr.bf16.mxu0 0
        %403 = vmatpush1.bf16.msra.mxu0 %v381
        %404 = vmatprep.subr.bf16.mxu0 0
        %405 = vmatpush1.bf16.msra.mxu0 %v382
        %406 = vmatprep.subr.bf16.mxu0 0
        %407 = vmatpush1.bf16.msra.mxu0 %v383
        %408 = vmatprep.subr.bf16.mxu0 0
        %409 = vmatpush1.bf16.msra.mxu0 0
        %410 = vmatprep.subr.bf16.mxu0 0
        %411 = vmatpush1.bf16.msra.mxu0 0
        %412 = vmatprep.subr.bf16.mxu0 0
        %413 = vmatpush1.bf16.msra.mxu0 0
        %414 = vmatprep.subr.bf16.mxu0 0
        %415 = vmatpush1.bf16.msra.mxu0 0
        %416 = vmatprep.subr.bf16.mxu0 0
        %417 = vmatpush1.bf16.msra.mxu0 0
        %418 = vmatprep.subr.bf16.mxu0 0
        %419 = vmatpush1.bf16.msra.mxu0 0
        %420 = vmatprep.subr.bf16.mxu0 0
        %421 = vmatpush1.bf16.msra.mxu0 0
        %422 = vmatprep.subr.bf16.mxu0 0
        %423 = vmatpush1.bf16.msra.mxu0 0
        %424 = vmatprep.mubr.bf16.mxu0 0
        %425 = vmatmul.mubr.bf16.gmra.mrb[0].mxu0 %v327
        %v426 = vpop.f32.mrb[0].mxu0
        %v427 = vadd.f32 0.0, %v426
        %v428 = vpop.f32.mrb[0].mxu0
        %v429 = vpop.f32.mrb[0].mxu0
        %v430 = vpop.f32.mrb[0].mxu0
        %431 = vdwg.mxu0
        %v432 = vmul.f32 %v427, 0.0009765625
        %v433 = vlaneseq
        %v434 = vshrl.u32 %v433, 7
        %v435 = vsub.s32 0, %v434
        %v436 = vrot.slane %v432, %v435
        %v437 = vsub.f32 %v306, %v436
        %v438 = vsub.f32 %v307, %v436
        %v439 = vsub.f32 %v308, %v436
        %v440 = vsub.f32 %v309, %v436
        %v441 = vsub.f32 %v310, %v436
        %v442 = vsub.f32 %v311, %v436
        %v443 = vsub.f32 %v312, %v436
        %v444 = vsub.f32 %v313, %v436
        %v445 = vmul.f32 %v437, %v437
        %v446 = vmul.f32 %v438, %v438
        %v447 = vmul.f32 %v439, %v439
        %v448 = vmul.f32 %v440, %v440
        %v449 = vmul.f32 %v441, %v441
        %v450 = vmul.f32 %v442, %v442
        %v451 = vmul.f32 %v443, %v443
        %v452 = vmul.f32 %v444, %v444
        %v453 = vadd.f32 %v445, %v446
        %v454 = vadd.f32 %v453, %v447
        %v455 = vadd.f32 %v454, %v448
        %v456 = vadd.f32 %v455, %v449
        %v457 = vadd.f32 %v456, %v450
        %v458 = vadd.f32 %v457, %v451
        %v459 = vadd.f32 %v458, %v452
        %v460 = vrot.slane %v459, 4
        %v461 = vadd.f32 %v459, %v460
        %v462 = vrot.slane %v461, 2
        %v463 = vadd.f32 %v461, %v462
        %v464 = vrot.slane %v463, 1
        %v465 = vadd.f32 %v463, %v464
        %v466 = vpack.c.bf16 %v465, %v465
        %467 = vmatprep.subr.bf16.mxu0 0
        %468 = vmatpush1.bf16.msra.mxu0 %v376
        %469 = vmatprep.subr.bf16.mxu0 0
        %470 = vmatpush1.bf16.msra.mxu0 %v377
        %471 = vmatprep.subr.bf16.mxu0 0
        %472 = vmatpush1.bf16.msra.mxu0 %v378
        %473 = vmatprep.subr.bf16.mxu0 0
        %474 = vmatpush1.bf16.msra.mxu0 %v379
        %475 = vmatprep.subr.bf16.mxu0 0
        %476 = vmatpush1.bf16.msra.mxu0 %v380
        %477 = vmatprep.subr.bf16.mxu0 0
        %478 = vmatpush1.bf16.msra.mxu0 %v381
        %479 = vmatprep.subr.bf16.mxu0 0
        %480 = vmatpush1.bf16.msra.mxu0 %v382
        %481 = vmatprep.subr.bf16.mxu0 0
        %482 = vmatpush1.bf16.msra.mxu0 %v383
        %483 = vmatprep.subr.bf16.mxu0 0
        %484 = vmatpush1.bf16.msra.mxu0 0
        %485 = vmatprep.subr.bf16.mxu0 0
        %486 = vmatpush1.bf16.msra.mxu0 0
        %487 = vmatprep.subr.bf16.mxu0 0
        %488 = vmatpush1.bf16.msra.mxu0 0
        %489 = vmatprep.subr.bf16.mxu0 0
        %490 = vmatpush1.bf16.msra.mxu0 0
        %491 = vmatprep.subr.bf16.mxu0 0
        %492 = vmatpush1.bf16.msra.mxu0 0
        %493 = vmatprep.subr.bf16.mxu0 0
        %494 = vmatpush1.bf16.msra.mxu0 0
        %495 = vmatprep.subr.bf16.mxu0 0
        %496 = vmatpush1.bf16.msra.mxu0 0
        %497 = vmatprep.subr.bf16.mxu0 0
        %498 = vmatpush1.bf16.msra.mxu0 0
        %499 = vmatprep.mubr.bf16.mxu0 0
        %500 = vmatmul.mubr.bf16.gmra.mrb[0].mxu0 %v466
        %v501 = vpop.f32.mrb[0].mxu0
        %v502 = vadd.f32 0.0, %v501
        %v503 = vpop.f32.mrb[0].mxu0
        %v504 = vpop.f32.mrb[0].mxu0
        %v505 = vpop.f32.mrb[0].mxu0
        %506 = vdwg.mxu0
        %v507 = vmul.f32 %v502, 0.0009765625
        %v508 = vadd.f32 %v507, 1e-05
        %v509 = vrsqrt.pop %v508
        %v510 = vld [vmem:[%s1] sm:$0x1]
        %v511 = vmul.f32 %v509, %v510
        %v512 = vlaneseq
        %v513 = vshrl.u32 %v512, 7
        %v514 = vsub.s32 0, %v513
        %v515 = vrot.slane %v511, %v514
        %v516 = vmul.f32 %v437, %v515
        %v517 = vmul.f32 %v438, %v515
        %v518 = vmul.f32 %v439, %v515
        %v519 = vmul.f32 %v440, %v515
        %v520 = vmul.f32 %v441, %v515
        %v521 = vmul.f32 %v442, %v515
        %v522 = vmul.f32 %v443, %v515
        %v523 = vmul.f32 %v444, %v515
        %v524 = vld [vmem:[%s2] sm:$0x1]
        %v526 = vlaneseq
        %v527 = vshrl.u32 %v526, 7
        %v528 = vsub.s32 0, %v527
        %v529 = vrot.slane %v524, %v528
        %v531 = vadd.f32 %v516, %v529
        %v532 = vadd.f32 %v517, %v529
        %v533 = vadd.f32 %v518, %v529
        %v534 = vadd.f32 %v519, %v529
        %v535 = vadd.f32 %v520, %v529
        %v536 = vadd.f32 %v521, %v529
        %v537 = vadd.f32 %v522, %v529
        %v538 = vadd.f32 %v523, %v529
        %v539 = vxor.u32 %v531, 2147483648
        %v540 = vxor.u32 %v532, 2147483648
        %v541 = vxor.u32 %v533, 2147483648
        %v542 = vxor.u32 %v534, 2147483648
        %v543 = vxor.u32 %v535, 2147483648
        %v544 = vxor.u32 %v536, 2147483648
        %v545 = vxor.u32 %v537, 2147483648
        %v546 = vxor.u32 %v538, 2147483648
        %v547 = vmul.f32 %v539, 1.442695
        %v548 = vpow.pop %v547
        %v549 = vmul.f32 %v540, 1.442695
        %v550 = vpow.pop %v549
        %v551 = vmul.f32 %v541, 1.442695
        %v552 = vpow.pop %v551
        %v553 = vmul.f32 %v542, 1.442695
        %v554 = vpow.pop %v553
        %v555 = vmul.f32 %v543, 1.442695
        %v556 = vpow.pop %v555
        %v557 = vmul.f32 %v544, 1.442695
        %v558 = vpow.pop %v557
        %v559 = vmul.f32 %v545, 1.442695
        %v560 = vpow.pop %v559
        %v561 = vmul.f32 %v546, 1.442695
        %v562 = vpow.pop %v561
        %v563 = vadd.f32 %v548, 1.0
        %v564 = vadd.f32 %v550, 1.0
        %v565 = vadd.f32 %v552, 1.0
        %v566 = vadd.f32 %v554, 1.0
        %v567 = vadd.f32 %v556, 1.0
        %v568 = vadd.f32 %v558, 1.0
        %v569 = vadd.f32 %v560, 1.0
        %v570 = vadd.f32 %v562, 1.0
        %v571 = vrcp.pop %v563
        %v572 = vmul.f32 1.0, %v571
        %v573 = vrcp.pop %v564
        %v574 = vmul.f32 1.0, %v573
        %v575 = vrcp.pop %v565
        %v576 = vmul.f32 1.0, %v575
        %v577 = vrcp.pop %v566
        %v578 = vmul.f32 1.0, %v577
        %v579 = vrcp.pop %v567
        %v580 = vmul.f32 1.0, %v579
        %v581 = vrcp.pop %v568
        %v582 = vmul.f32 1.0, %v581
        %v583 = vrcp.pop %v569
        %v584 = vmul.f32 1.0, %v583
        %v585 = vrcp.pop %v570
        %v586 = vmul.f32 1.0, %v585
        %v587 = vmul.f32 %v531, %v572
        %v588 = vmul.f32 %v532, %v574
        %v589 = vmul.f32 %v533, %v576
        %v590 = vmul.f32 %v534, %v578
        %v591 = vmul.f32 %v535, %v580
        %v592 = vmul.f32 %v536, %v582
        %v593 = vmul.f32 %v537, %v584
        %v594 = vmul.f32 %v538, %v586
        %v595 = vpack.c.bf16 %v588, %v587
        %v596 = vpack.c.bf16 %v590, %v589
        %v597 = vpack.c.bf16 %v592, %v591
        %v598 = vpack.c.bf16 %v594, %v593
        %v603 = vunpack.c.l.b16 %v595
        %v604 = vunpack.c.h.b16 %v595
        %v605 = vunpack.c.l.b16 %v596
        %v606 = vunpack.c.h.b16 %v596
        %v607 = vunpack.c.l.b16 %v597
        %v608 = vunpack.c.h.b16 %v597
        %v609 = vunpack.c.l.b16 %v598
        %v610 = vunpack.c.h.b16 %v598
        %v611 = vpack.c.b16 %v603, %v603
        %v612 = vpack.c.b16 %v604, %v604
        %v613 = vpack.c.b16 %v605, %v605
        %v614 = vpack.c.b16 %v606, %v606
        %v615 = vpack.c.b16 %v607, %v607
        %v616 = vpack.c.b16 %v608, %v608
        %v617 = vpack.c.b16 %v609, %v609
        %v618 = vpack.c.b16 %v610, %v610
        %627 = vst [vmem:[#allocation2] sm:$0xff] 0
        %628 = vst [vmem:[#allocation2 + $0x8] sm:$0xf] 0
        %s629 = scalar_lea.vmem [#allocation2], 108
        %630 = vst [vmem:[%s629] sm:$0xff] 0
        %631 = vst [vmem:[%s629 + $0x8] sm:$0xf] 0
        %s632 = scalar_lea.vmem [#allocation2], 12
        %633 = vst [vmem:[%s632 + $0x4] sm:$0xf] %v611
        %634 = vst [vmem:[%s632 + $0x10] sm:$0xf] %v612
        %635 = vst [vmem:[%s632 + $0x1c] sm:$0xf] %v613
        %636 = vst [vmem:[%s632 + $0x28] sm:$0xf] %v614
        %637 = vst [vmem:[%s632 + $0x34] sm:$0xf] %v615
        %638 = vst [vmem:[%s632 + $0x40] sm:$0xf] %v616
        %639 = vst [vmem:[%s632 + $0x4c] sm:$0xf] %v617
        %640 = vst [vmem:[%s632 + $0x58] sm:$0xf] %v618
        %vm641 = vcmask 1040384
        %vm642 = vsmask.f32 256
        %vm643 = vmand %vm641, %vm642
        %v644 = vld [vmem:[%s632] sm:$0x1]
        %v645 = vsel %vm643, 0, %v644
        %646 = vst [vmem:[%s632] sm:$0x1] %v645
        %v647 = vld [vmem:[%s632 + $0xc] sm:$0x1]
        %v648 = vsel %vm643, 0, %v647
        %649 = vst [vmem:[%s632 + $0xc] sm:$0x1] %v648
        %v650 = vld [vmem:[%s632 + $0x18] sm:$0x1]
        %v651 = vsel %vm643, 0, %v650
        %652 = vst [vmem:[%s632 + $0x18] sm:$0x1] %v651
        %v653 = vld [vmem:[%s632 + $0x24] sm:$0x1]
        %v654 = vsel %vm643, 0, %v653
        %655 = vst [vmem:[%s632 + $0x24] sm:$0x1] %v654
        %v656 = vld [vmem:[%s632 + $0x30] sm:$0x1]
        %v657 = vsel %vm643, 0, %v656
        %658 = vst [vmem:[%s632 + $0x30] sm:$0x1] %v657
        %v659 = vld [vmem:[%s632 + $0x3c] sm:$0x1]
        %v660 = vsel %vm643, 0, %v659
        %661 = vst [vmem:[%s632 + $0x3c] sm:$0x1] %v660
        %v662 = vld [vmem:[%s632 + $0x48] sm:$0x1]
        %v663 = vsel %vm643, 0, %v662
        %664 = vst [vmem:[%s632 + $0x48] sm:$0x1] %v663
        %v665 = vld [vmem:[%s632 + $0x54] sm:$0x1]
        %v666 = vsel %vm643, 0, %v665
        %667 = vst [vmem:[%s632 + $0x54] sm:$0x1] %v666
        %v669 = vshrl.u32 %v611, 16
        %v671 = vrot.slane %v669, 7
        %v672 = vshll.u32 %v611, 16
        %v674 = vor.u32 %v671, %v672
        %v676 = vshrl.u32 %v612, 16
        %v678 = vrot.slane %v676, 7
        %v679 = vshll.u32 %v612, 16
        %v681 = vor.u32 %v678, %v679
        %v683 = vshrl.u32 %v613, 16
        %v685 = vrot.slane %v683, 7
        %v686 = vshll.u32 %v613, 16
        %v688 = vor.u32 %v685, %v686
        %v690 = vshrl.u32 %v614, 16
        %v692 = vrot.slane %v690, 7
        %v693 = vshll.u32 %v614, 16
        %v695 = vor.u32 %v692, %v693
        %v697 = vshrl.u32 %v615, 16
        %v699 = vrot.slane %v697, 7
        %v700 = vshll.u32 %v615, 16
        %v702 = vor.u32 %v699, %v700
        %v704 = vshrl.u32 %v616, 16
        %v706 = vrot.slane %v704, 7
        %v707 = vshll.u32 %v616, 16
        %v709 = vor.u32 %v706, %v707
        %v711 = vshrl.u32 %v617, 16
        %v713 = vrot.slane %v711, 7
        %v714 = vshll.u32 %v617, 16
        %v716 = vor.u32 %v713, %v714
        %v718 = vshrl.u32 %v618, 16
        %v720 = vrot.slane %v718, 7
        %v721 = vshll.u32 %v618, 16
        %v723 = vor.u32 %v720, %v721
        %vm732 = vcmask 1043456
        %vm733 = vsmask.f32 7938
        %vm734 = vmand %vm732, %vm733
        %v735 = vld [vmem:[%s632] sm:$0xf]
        %v736 = vsel %vm734, %v674, %v735
        %737 = vst [vmem:[%s632] sm:$0xf] %v736
        %v738 = vld [vmem:[%s632 + $0xc] sm:$0xf]
        %v739 = vsel %vm734, %v681, %v738
        %740 = vst [vmem:[%s632 + $0xc] sm:$0xf] %v739
        %v741 = vld [vmem:[%s632 + $0x18] sm:$0xf]
        %v742 = vsel %vm734, %v688, %v741
        %743 = vst [vmem:[%s632 + $0x18] sm:$0xf] %v742
        %v744 = vld [vmem:[%s632 + $0x24] sm:$0xf]
        %v745 = vsel %vm734, %v695, %v744
        %746 = vst [vmem:[%s632 + $0x24] sm:$0xf] %v745
        %v747 = vld [vmem:[%s632 + $0x30] sm:$0xf]
        %v748 = vsel %vm734, %v702, %v747
        %749 = vst [vmem:[%s632 + $0x30] sm:$0xf] %v748
        %v750 = vld [vmem:[%s632 + $0x3c] sm:$0xf]
        %v751 = vsel %vm734, %v709, %v750
        %752 = vst [vmem:[%s632 + $0x3c] sm:$0xf] %v751
        %v753 = vld [vmem:[%s632 + $0x48] sm:$0xf]
        %v754 = vsel %vm734, %v716, %v753
        %755 = vst [vmem:[%s632 + $0x48] sm:$0xf] %v754
        %v756 = vld [vmem:[%s632 + $0x54] sm:$0xf]
        %v757 = vsel %vm734, %v723, %v756
        %758 = vst [vmem:[%s632 + $0x54] sm:$0xf] %v757
        %vm759 = vcmask 1043459
        %vm760 = vsmask.f32 7950
        %vm761 = vmand %vm759, %vm760
        %v762 = vld [vmem:[%s632 + $0x8] sm:$0x8]
        %v763 = vsel %vm761, 0, %v762
        %764 = vst [vmem:[%s632 + $0x8] sm:$0x8] %v763
        %v765 = vld [vmem:[%s632 + $0x14] sm:$0x8]
        %v766 = vsel %vm761, 0, %v765
        %767 = vst [vmem:[%s632 + $0x14] sm:$0x8] %v766
        %v768 = vld [vmem:[%s632 + $0x20] sm:$0x8]
        %v769 = vsel %vm761, 0, %v768
        %770 = vst [vmem:[%s632 + $0x20] sm:$0x8] %v769
        %v771 = vld [vmem:[%s632 + $0x2c] sm:$0x8]
        %v772 = vsel %vm761, 0, %v771
        %773 = vst [vmem:[%s632 + $0x2c] sm:$0x8] %v772
        %v774 = vld [vmem:[%s632 + $0x38] sm:$0x8]
        %v775 = vsel %vm761, 0, %v774
        %776 = vst [vmem:[%s632 + $0x38] sm:$0x8] %v775
        %v777 = vld [vmem:[%s632 + $0x44] sm:$0x8]
        %v778 = vsel %vm761, 0, %v777
        %779 = vst [vmem:[%s632 + $0x44] sm:$0x8] %v778
        %v780 = vld [vmem:[%s632 + $0x50] sm:$0x8]
        %v781 = vsel %vm761, 0, %v780
        %782 = vst [vmem:[%s632 + $0x50] sm:$0x8] %v781
        %v783 = vld [vmem:[%s632 + $0x5c] sm:$0x8]
        %v784 = vsel %vm761, 0, %v783
        %785 = vst [vmem:[%s632 + $0x5c] sm:$0x8] %v784
        %v786 = vrot.slane %v669, 4
        %v787 = vrot.slane %v672, 5
        %v788 = vor.u32 %v786, %v787
        %v789 = vrot.slane %v788, 4
        %v790 = vrot.slane %v676, 4
        %v791 = vrot.slane %v679, 5
        %v792 = vor.u32 %v790, %v791
        %v793 = vrot.slane %v792, 4
        %v794 = vrot.slane %v683, 4
        %v795 = vrot.slane %v686, 5
        %v796 = vor.u32 %v794, %v795
        %v797 = vrot.slane %v796, 4
        %v798 = vrot.slane %v690, 4
        %v799 = vrot.slane %v693, 5
        %v800 = vor.u32 %v798, %v799
        %v801 = vrot.slane %v800, 4
        %v802 = vrot.slane %v697, 4
        %v803 = vrot.slane %v700, 5
        %v804 = vor.u32 %v802, %v803
        %v805 = vrot.slane %v804, 4
        %v806 = vrot.slane %v704, 4
        %v807 = vrot.slane %v707, 5
        %v808 = vor.u32 %v806, %v807
        %v809 = vrot.slane %v808, 4
        %v810 = vrot.slane %v711, 4
        %v811 = vrot.slane %v714, 5
        %v812 = vor.u32 %v810, %v811
        %v813 = vrot.slane %v812, 4
        %v814 = vrot.slane %v718, 4
        %v815 = vrot.slane %v721, 5
        %v816 = vor.u32 %v814, %v815
        %v817 = vrot.slane %v816, 4
        %vm826 = vsmask.f32 3328
        %vm827 = vmand %vm732, %vm826
        %v828 = vld [vmem:[%s632 + $0x8] sm:$0xf]
        %v829 = vsel %vm827, %v789, %v828
        %830 = vst [vmem:[%s632 + $0x8] sm:$0xf] %v829
        %v831 = vld [vmem:[%s632 + $0x14] sm:$0xf]
        %v832 = vsel %vm827, %v793, %v831
        %833 = vst [vmem:[%s632 + $0x14] sm:$0xf] %v832
        %v834 = vld [vmem:[%s632 + $0x20] sm:$0xf]
        %v835 = vsel %vm827, %v797, %v834
        %836 = vst [vmem:[%s632 + $0x20] sm:$0xf] %v835
        %v837 = vld [vmem:[%s632 + $0x2c] sm:$0xf]
        %v838 = vsel %vm827, %v801, %v837
        %839 = vst [vmem:[%s632 + $0x2c] sm:$0xf] %v838
        %v840 = vld [vmem:[%s632 + $0x38] sm:$0xf]
        %v841 = vsel %vm827, %v805, %v840
        %842 = vst [vmem:[%s632 + $0x38] sm:$0xf] %v841
        %v843 = vld [vmem:[%s632 + $0x44] sm:$0xf]
        %v844 = vsel %vm827, %v809, %v843
        %845 = vst [vmem:[%s632 + $0x44] sm:$0xf] %v844
        %v846 = vld [vmem:[%s632 + $0x50] sm:$0xf]
        %v847 = vsel %vm827, %v813, %v846
        %848 = vst [vmem:[%s632 + $0x50] sm:$0xf] %v847
        %v849 = vld [vmem:[%s632 + $0x5c] sm:$0xf]
        %v850 = vsel %vm827, %v817, %v849
        %851 = vst [vmem:[%s632 + $0x5c] sm:$0xf] %v850
        %v852 = vld [vmem:[%s296] sm:$0xf]
        %v853 = vld [vmem:[%s296 + $0x4] sm:$0xf]
        %v854 = vld [vmem:[%s296 + $0x8] sm:$0xf]
        %v855 = vld [vmem:[%s296 + $0xc] sm:$0xf]
        %v856 = vld [vmem:[%s296 + $0x10] sm:$0xf]
        %v857 = vld [vmem:[%s296 + $0x14] sm:$0xf]
        %v858 = vld [vmem:[%s296 + $0x18] sm:$0xf]
        %v859 = vld [vmem:[%s296 + $0x1c] sm:$0xf]
        %v860 = vunpack.c.l.bf16 %v852
        %v861 = vunpack.c.l.bf16 %v853
        %v862 = vunpack.c.l.bf16 %v854
        %v863 = vunpack.c.l.bf16 %v855
        %v864 = vunpack.c.l.bf16 %v856
        %v865 = vunpack.c.l.bf16 %v857
        %v866 = vunpack.c.l.bf16 %v858
        %v867 = vunpack.c.l.bf16 %v859
        %v868 = vld [vmem:[%s5] sm:$0x1]
        %v870 = vlaneseq
        %v871 = vshrl.u32 %v870, 7
        %v872 = vsub.s32 0, %v871
        %v873 = vrot.slane %v868, %v872
        %v875 = vadd.f32 %v860, %v873
        %v876 = vadd.f32 %v861, %v873
        %v877 = vadd.f32 %v862, %v873
        %v878 = vadd.f32 %v863, %v873
        %v879 = vadd.f32 %v864, %v873
        %v880 = vadd.f32 %v865, %v873
        %v881 = vadd.f32 %v866, %v873
        %v882 = vadd.f32 %v867, %v873
        %v883 = vld [vmem:[#allocation2] sm:$0xff]
        %v884 = vld [vmem:[#allocation2 + $0x8] sm:$0xf]
        %v885 = vld [vmem:[#allocation2 + $0xc] sm:$0xff]
        %v886 = vld [vmem:[#allocation2 + $0x14] sm:$0xf]
        %v887 = vld [vmem:[#allocation2 + $0x18] sm:$0xff]
        %v888 = vld [vmem:[#allocation2 + $0x20] sm:$0xf]
        %v889 = vld [vmem:[#allocation2 + $0x24] sm:$0xff]
        %v890 = vld [vmem:[#allocation2 + $0x2c] sm:$0xf]
        %v891 = vld [vmem:[#allocation2 + $0x30] sm:$0xff]
        %v892 = vld [vmem:[#allocation2 + $0x38] sm:$0xf]
        %v893 = vld [vmem:[#allocation2 + $0x3c] sm:$0xff]
        %v894 = vld [vmem:[#allocation2 + $0x44] sm:$0xf]
        %v895 = vld [vmem:[#allocation2 + $0x48] sm:$0xff]
        %v896 = vld [vmem:[#allocation2 + $0x50] sm:$0xf]
        %v897 = vld [vmem:[#allocation2 + $0x54] sm:$0xff]
        %v898 = vld [vmem:[#allocation2 + $0x5c] sm:$0xf]
        %v899 = vld [vmem:[%s4] sm:$0xf]
        %v900 = vld [vmem:[%s4 + $0x4] sm:$0xf]
        %v901 = vld [vmem:[%s4 + $0x8] sm:$0xf]
        %v902 = vld [vmem:[%s4 + $0xc] sm:$0xf]
        %v903 = vld [vmem:[%s4 + $0x10] sm:$0xf]
        %v904 = vld [vmem:[%s4 + $0x14] sm:$0xf]
        %v905 = vld [vmem:[%s4 + $0x18] sm:$0xf]
        %v906 = vld [vmem:[%s4 + $0x1c] sm:$0xf]
        %v907 = vld [vmem:[%s4 + $0x20] sm:$0xf]
        %v908 = vld [vmem:[%s4 + $0x24] sm:$0xf]
        %v909 = vld [vmem:[%s4 + $0x28] sm:$0xf]
        %v910 = vld [vmem:[%s4 + $0x2c] sm:$0xf]
        %v911 = vld [vmem:[%s4 + $0x30] sm:$0xf]
        %v912 = vld [vmem:[%s4 + $0x34] sm:$0xf]
        %v913 = vld [vmem:[%s4 + $0x38] sm:$0xf]
        %v914 = vld [vmem:[%s4 + $0x3c] sm:$0xf]
        %v915 = vld [vmem:[%s4 + $0x40] sm:$0xf]
        %v916 = vld [vmem:[%s4 + $0x44] sm:$0xf]
        %v917 = vld [vmem:[%s4 + $0x48] sm:$0xf]
        %v918 = vld [vmem:[%s4 + $0x4c] sm:$0xf]
        %v919 = vld [vmem:[%s4 + $0x50] sm:$0xf]
        %v920 = vld [vmem:[%s4 + $0x54] sm:$0xf]
        %v921 = vld [vmem:[%s4 + $0x58] sm:$0xf]
        %v922 = vld [vmem:[%s4 + $0x5c] sm:$0xf]
        %v923 = vld [vmem:[%s4 + $0x60] sm:$0xf]
        %v924 = vld [vmem:[%s4 + $0x64] sm:$0xf]
        %v925 = vld [vmem:[%s4 + $0x68] sm:$0xf]
        %v926 = vld [vmem:[%s4 + $0x6c] sm:$0xf]
        %v927 = vld [vmem:[%s4 + $0x70] sm:$0xf]
        %v928 = vld [vmem:[%s4 + $0x74] sm:$0xf]
        %v929 = vld [vmem:[%s4 + $0x78] sm:$0xf]
        %v930 = vld [vmem:[%s4 + $0x7c] sm:$0xf]
        %v931 = vld [vmem:[%s4 + $0x80] sm:$0xf]
        %v932 = vld [vmem:[%s4 + $0x84] sm:$0xf]
        %v933 = vld [vmem:[%s4 + $0x88] sm:$0xf]
        %v934 = vld [vmem:[%s4 + $0x8c] sm:$0xf]
        %v935 = vld [vmem:[%s4 + $0x90] sm:$0xf]
        %v936 = vld [vmem:[%s4 + $0x94] sm:$0xf]
        %v937 = vld [vmem:[%s4 + $0x98] sm:$0xf]
        %v938 = vld [vmem:[%s4 + $0x9c] sm:$0xf]
        %v939 = vld [vmem:[%s4 + $0xa0] sm:$0xf]
        %v940 = vld [vmem:[%s4 + $0xa4] sm:$0xf]
        %v941 = vld [vmem:[%s4 + $0xa8] sm:$0xf]
        %v942 = vld [vmem:[%s4 + $0xac] sm:$0xf]
        %v943 = vld [vmem:[%s4 + $0xb0] sm:$0xf]
        %v944 = vld [vmem:[%s4 + $0xb4] sm:$0xf]
        %v945 = vld [vmem:[%s4 + $0xb8] sm:$0xf]
        %v946 = vld [vmem:[%s4 + $0xbc] sm:$0xf]
        %v963 = vunpack.c.l.b16 %v883
        %v964 = vunpack.c.h.b16 %v883
        %v965 = vunpack.c.l.b16 %v884
        %v966 = vunpack.c.l.b16 %v885
        %v967 = vunpack.c.h.b16 %v885
        %v968 = vunpack.c.l.b16 %v886
        %v969 = vunpack.c.l.b16 %v887
        %v970 = vunpack.c.h.b16 %v887
        %v971 = vunpack.c.l.b16 %v888
        %v972 = vunpack.c.l.b16 %v889
        %v973 = vunpack.c.h.b16 %v889
        %v974 = vunpack.c.l.b16 %v890
        %v975 = vunpack.c.l.b16 %v891
        %v976 = vunpack.c.h.b16 %v891
        %v977 = vunpack.c.l.b16 %v892
        %v978 = vunpack.c.l.b16 %v893
        %v979 = vunpack.c.h.b16 %v893
        %v980 = vunpack.c.l.b16 %v894
        %v981 = vunpack.c.l.b16 %v895
        %v982 = vunpack.c.h.b16 %v895
        %v983 = vunpack.c.l.b16 %v896
        %v984 = vunpack.c.l.b16 %v897
        %v985 = vunpack.c.h.b16 %v897
        %v986 = vunpack.c.l.b16 %v898
        %v987 = vpack.c.b16 %v966, %v963
        %v988 = vpack.c.b16 %v967, %v964
        %v989 = vpack.c.b16 %v968, %v965
        %v990 = vpack.c.b16 %v972, %v969
        %v991 = vpack.c.b16 %v973, %v970
        %v992 = vpack.c.b16 %v974, %v971
        %v993 = vpack.c.b16 %v978, %v975
        %v994 = vpack.c.b16 %v979, %v976
        %v995 = vpack.c.b16 %v980, %v977
        %v996 = vpack.c.b16 %v984, %v981
        %v997 = vpack.c.b16 %v985, %v982
        %v998 = vpack.c.b16 %v986, %v983
        %v1059 = vunpack.c.l.b16 %v899
        %v1060 = vunpack.c.l.b16 %v900
        %v1061 = vunpack.c.l.b16 %v901
        %v1062 = vunpack.c.l.b16 %v902
        %v1063 = vunpack.c.l.b16 %v903
        %v1064 = vunpack.c.l.b16 %v904
        %v1065 = vunpack.c.l.b16 %v905
        %v1066 = vunpack.c.l.b16 %v906
        %v1067 = vunpack.c.l.b16 %v907
        %v1068 = vunpack.c.l.b16 %v908
        %v1069 = vunpack.c.l.b16 %v909
        %v1070 = vunpack.c.l.b16 %v910
        %v1071 = vunpack.c.l.b16 %v911
        %v1072 = vunpack.c.l.b16 %v912
        %v1073 = vunpack.c.l.b16 %v913
        %v1074 = vunpack.c.l.b16 %v914
        %v1075 = vunpack.c.l.b16 %v915
        %v1076 = vunpack.c.l.b16 %v916
        %v1077 = vunpack.c.l.b16 %v917
        %v1078 = vunpack.c.l.b16 %v918
        %v1079 = vunpack.c.l.b16 %v919
        %v1080 = vunpack.c.l.b16 %v920
        %v1081 = vunpack.c.l.b16 %v921
        %v1082 = vunpack.c.l.b16 %v922
        %v1083 = vunpack.c.l.b16 %v923
        %v1084 = vunpack.c.l.b16 %v924
        %v1085 = vunpack.c.l.b16 %v925
        %v1086 = vunpack.c.l.b16 %v926
        %v1087 = vunpack.c.l.b16 %v927
        %v1088 = vunpack.c.l.b16 %v928
        %v1089 = vunpack.c.l.b16 %v929
        %v1090 = vunpack.c.l.b16 %v930
        %v1091 = vunpack.c.l.b16 %v931
        %v1092 = vunpack.c.l.b16 %v932
        %v1093 = vunpack.c.l.b16 %v933
        %v1094 = vunpack.c.l.b16 %v934
        %v1095 = vunpack.c.l.b16 %v935
        %v1096 = vunpack.c.l.b16 %v936
        %v1097 = vunpack.c.l.b16 %v937
        %v1098 = vunpack.c.l.b16 %v938
        %v1099 = vunpack.c.l.b16 %v939
        %v1100 = vunpack.c.l.b16 %v940
        %v1101 = vunpack.c.l.b16 %v941
        %v1102 = vunpack.c.l.b16 %v942
        %v1103 = vunpack.c.l.b16 %v943
        %v1104 = vunpack.c.l.b16 %v944
        %v1105 = vunpack.c.l.b16 %v945
        %v1106 = vunpack.c.l.b16 %v946
        %v1107 = vpack.c.b16 %v1060, %v1059
        %v1108 = vpack.c.b16 %v1062, %v1061
        %v1109 = vpack.c.b16 %v1064, %v1063
        %v1110 = vpack.c.b16 %v1066, %v1065
        %v1111 = vpack.c.b16 %v1068, %v1067
        %v1112 = vpack.c.b16 %v1070, %v1069
        %v1113 = vpack.c.b16 %v1072, %v1071
        %v1114 = vpack.c.b16 %v1074, %v1073
        %v1115 = vpack.c.b16 %v1076, %v1075
        %v1116 = vpack.c.b16 %v1078, %v1077
        %v1117 = vpack.c.b16 %v1080, %v1079
        %v1118 = vpack.c.b16 %v1082, %v1081
        %v1119 = vpack.c.b16 %v1084, %v1083
        %v1120 = vpack.c.b16 %v1086, %v1085
        %v1121 = vpack.c.b16 %v1088, %v1087
        %v1122 = vpack.c.b16 %v1090, %v1089
        %v1123 = vpack.c.b16 %v1092, %v1091
        %v1124 = vpack.c.b16 %v1094, %v1093
        %v1125 = vpack.c.b16 %v1096, %v1095
        %v1126 = vpack.c.b16 %v1098, %v1097
        %v1127 = vpack.c.b16 %v1100, %v1099
        %v1128 = vpack.c.b16 %v1102, %v1101
        %v1129 = vpack.c.b16 %v1104, %v1103
        %v1130 = vpack.c.b16 %v1106, %v1105
        %1155 = vmatprep.subr.bf16.mxu0 0
        %1156 = vmatpush1.bf16.msra.mxu0 %v1107
        %1157 = vmatprep.subr.bf16.mxu0 0
        %1158 = vmatpush1.bf16.msra.mxu0 %v1108
        %1159 = vmatprep.subr.bf16.mxu0 0
        %1160 = vmatpush1.bf16.msra.mxu0 %v1109
        %1161 = vmatprep.subr.bf16.mxu0 0
        %1162 = vmatpush1.bf16.msra.mxu0 %v1110
        %1163 = vmatprep.subr.bf16.mxu0 0
        %1164 = vmatpush1.bf16.msra.mxu0 %v1111
        %1165 = vmatprep.subr.bf16.mxu0 0
        %1166 = vmatpush1.bf16.msra.mxu0 %v1112
        %1167 = vmatprep.subr.bf16.mxu0 0
        %1168 = vmatpush1.bf16.msra.mxu0 %v1113
        %1169 = vmatprep.subr.bf16.mxu0 0
        %1170 = vmatpush1.bf16.msra.mxu0 %v1114
        %1171 = vmatprep.subr.bf16.mxu0 0
        %1172 = vmatpush1.bf16.msra.mxu0 %v1115
        %1173 = vmatprep.subr.bf16.mxu0 0
        %1174 = vmatpush1.bf16.msra.mxu0 %v1116
        %1175 = vmatprep.subr.bf16.mxu0 0
        %1176 = vmatpush1.bf16.msra.mxu0 %v1117
        %1177 = vmatprep.subr.bf16.mxu0 0
        %1178 = vmatpush1.bf16.msra.mxu0 %v1118
        %1179 = vmatprep.subr.bf16.mxu0 0
        %1180 = vmatpush1.bf16.msra.mxu0 %v1119
        %1181 = vmatprep.subr.bf16.mxu0 0
        %1182 = vmatpush1.bf16.msra.mxu0 %v1120
        %1183 = vmatprep.subr.bf16.mxu0 0
        %1184 = vmatpush1.bf16.msra.mxu0 %v1121
        %1185 = vmatprep.subr.bf16.mxu0 0
        %1186 = vmatpush1.bf16.msra.mxu0 %v1122
        %1187 = vmatprep.mubr.bf16.mxu0 %v988
        %1188 = vmatmul.mubr.bf16.gmra.mrb[0].mxu0 %v987
        %v1189 = vpop.f32.mrb[0].mxu0
        %v1190 = vadd.f32 0.0, %v1189
        %v1191 = vpop.f32.mrb[0].mxu0
        %v1192 = vpop.f32.mrb[0].mxu0
        %v1193 = vadd.f32 0.0, %v1192
        %v1194 = vpop.f32.mrb[0].mxu0
        %1195 = vmatprep.mubr.bf16.mxu0 %v991
        %1196 = vmatmul.mubr.bf16.gmra.mrb[0].mxu0 %v990
        %v1197 = vpop.f32.mrb[0].mxu0
        %v1198 = vadd.f32 0.0, %v1197
        %v1199 = vpop.f32.mrb[0].mxu0
        %v1200 = vpop.f32.mrb[0].mxu0
        %v1201 = vadd.f32 0.0, %v1200
        %v1202 = vpop.f32.mrb[0].mxu0
        %1203 = vmatprep.mubr.bf16.mxu0 %v994
        %1204 = vmatmul.mubr.bf16.gmra.mrb[0].mxu0 %v993
        %v1205 = vpop.f32.mrb[0].mxu0
        %v1206 = vadd.f32 0.0, %v1205
        %v1207 = vpop.f32.mrb[0].mxu0
        %v1208 = vpop.f32.mrb[0].mxu0
        %v1209 = vadd.f32 0.0, %v1208
        %v1210 = vpop.f32.mrb[0].mxu0
        %1211 = vmatprep.mubr.bf16.mxu0 %v997
        %1212 = vmatmul.mubr.bf16.gmra.mrb[0].mxu0 %v996
        %v1213 = vpop.f32.mrb[0].mxu0
        %v1214 = vadd.f32 0.0, %v1213
        %v1215 = vpop.f32.mrb[0].mxu0
        %v1216 = vpop.f32.mrb[0].mxu0
        %v1217 = vadd.f32 0.0, %v1216
        %v1218 = vpop.f32.mrb[0].mxu0
        %1219 = vdwg.mxu0
        %1220 = vmatprep.subr.bf16.mxu0 0
        %1221 = vmatpush1.bf16.msra.mxu0 %v1123
        %1222 = vmatprep.subr.bf16.mxu0 0
        %1223 = vmatpush1.bf16.msra.mxu0 %v1124
        %1224 = vmatprep.subr.bf16.mxu0 0
        %1225 = vmatpush1.bf16.msra.mxu0 %v1125
        %1226 = vmatprep.subr.bf16.mxu0 0
        %1227 = vmatpush1.bf16.msra.mxu0 %v1126
        %1228 = vmatprep.subr.bf16.mxu0 0
        %1229 = vmatpush1.bf16.msra.mxu0 %v1127
        %1230 = vmatprep.subr.bf16.mxu0 0
        %1231 = vmatpush1.bf16.msra.mxu0 %v1128
        %1232 = vmatprep.subr.bf16.mxu0 0
        %1233 = vmatpush1.bf16.msra.mxu0 %v1129
        %1234 = vmatprep.subr.bf16.mxu0 0
        %1235 = vmatpush1.bf16.msra.mxu0 %v1130
        %1236 = vmatprep.subr.bf16.mxu0 0
        %1237 = vmatpush1.bf16.msra.mxu0 0
        %1238 = vmatprep.subr.bf16.mxu0 0
        %1239 = vmatpush1.bf16.msra.mxu0 0
        %1240 = vmatprep.subr.bf16.mxu0 0
        %1241 = vmatpush1.bf16.msra.mxu0 0
        %1242 = vmatprep.subr.bf16.mxu0 0
        %1243 = vmatpush1.bf16.msra.mxu0 0
        %1244 = vmatprep.subr.bf16.mxu0 0
        %1245 = vmatpush1.bf16.msra.mxu0 0
        %1246 = vmatprep.subr.bf16.mxu0 0
        %1247 = vmatpush1.bf16.msra.mxu0 0
        %1248 = vmatprep.subr.bf16.mxu0 0
        %1249 = vmatpush1.bf16.msra.mxu0 0
        %1250 = vmatprep.subr.bf16.mxu0 0
        %1251 = vmatpush1.bf16.msra.mxu0 0
        %1252 = vmatprep.mubr.bf16.mxu0 0
        %1253 = vmatmul.mubr.bf16.gmra.mrb[0].mxu0 %v989
        %v1254 = vpop.f32.mrb[0].mxu0
        %v1255 = vadd.f32 %v1190, %v1254
        %v1256 = vpop.f32.mrb[0].mxu0
        %v1257 = vpop.f32.mrb[0].mxu0
        %v1258 = vadd.f32 %v1193, %v1257
        %v1259 = vpop.f32.mrb[0].mxu0
        %1260 = vmatprep.mubr.bf16.mxu0 0
        %1261 = vmatmul.mubr.bf16.gmra.mrb[0].mxu0 %v992
        %v1262 = vpop.f32.mrb[0].mxu0
        %v1263 = vadd.f32 %v1198, %v1262
        %v1264 = vpop.f32.mrb[0].mxu0
        %v1265 = vpop.f32.mrb[0].mxu0
        %v1266 = vadd.f32 %v1201, %v1265
        %v1267 = vpop.f32.mrb[0].mxu0
        %1268 = vmatprep.mubr.bf16.mxu0 0
        %1269 = vmatmul.mubr.bf16.gmra.mrb[0].mxu0 %v995
        %v1270 = vpop.f32.mrb[0].mxu0
        %v1271 = vadd.f32 %v1206, %v1270
        %v1272 = vpop.f32.mrb[0].mxu0
        %v1273 = vpop.f32.mrb[0].mxu0
        %v1274 = vadd.f32 %v1209, %v1273
        %v1275 = vpop.f32.mrb[0].mxu0
        %1276 = vmatprep.mubr.bf16.mxu0 0
        %1277 = vmatmul.mubr.bf16.gmra.mrb[0].mxu0 %v998
        %v1278 = vpop.f32.mrb[0].mxu0
        %v1279 = vadd.f32 %v1214, %v1278
        %v1280 = vpop.f32.mrb[0].mxu0
        %v1281 = vpop.f32.mrb[0].mxu0
        %v1282 = vadd.f32 %v1217, %v1281
        %v1283 = vpop.f32.mrb[0].mxu0
        %1284 = vdwg.mxu0
        %v1285 = vadd.f32 %v875, %v1255
        %v1286 = vadd.f32 %v876, %v1258
        %v1287 = vadd.f32 %v877, %v1263
        %v1288 = vadd.f32 %v878, %v1266
        %v1289 = vadd.f32 %v879, %v1271
        %v1290 = vadd.f32 %v880, %v1274
        %v1291 = vadd.f32 %v881, %v1279
        %v1292 = vadd.f32 %v882, %v1282
        %v1293 = vld [vmem:[%s632] sm:$0xff]
        %v1294 = vld [vmem:[%s632 + $0x8] sm:$0xf]
        %v1295 = vld [vmem:[%s632 + $0xc] sm:$0xff]
        %v1296 = vld [vmem:[%s632 + $0x14] sm:$0xf]
        %v1297 = vld [vmem:[%s632 + $0x18] sm:$0xff]
        %v1298 = vld [vmem:[%s632 + $0x20] sm:$0xf]
        %v1299 = vld [vmem:[%s632 + $0x24] sm:$0xff]
        %v1300 = vld [vmem:[%s632 + $0x2c] sm:$0xf]
        %v1301 = vld [vmem:[%s632 + $0x30] sm:$0xff]
        %v1302 = vld [vmem:[%s632 + $0x38] sm:$0xf]
        %v1303 = vld [vmem:[%s632 + $0x3c] sm:$0xff]
        %v1304 = vld [vmem:[%s632 + $0x44] sm:$0xf]
        %v1305 = vld [vmem:[%s632 + $0x48] sm:$0xff]
        %v1306 = vld [vmem:[%s632 + $0x50] sm:$0xf]
        %v1307 = vld [vmem:[%s632 + $0x54] sm:$0xff]
        %v1308 = vld [vmem:[%s632 + $0x5c] sm:$0xf]
        %s1309 = scalar_lea.vmem %s4, 192
        %v1310 = vld [vmem:[%s1309] sm:$0xf]
        %v1311 = vld [vmem:[%s1309 + $0x4] sm:$0xf]
        %v1312 = vld [vmem:[%s1309 + $0x8] sm:$0xf]
        %v1313 = vld [vmem:[%s1309 + $0xc] sm:$0xf]
        %v1314 = vld [vmem:[%s1309 + $0x10] sm:$0xf]
        %v1315 = vld [vmem:[%s1309 + $0x14] sm:$0xf]
        %v1316 = vld [vmem:[%s1309 + $0x18] sm:$0xf]
        %v1317 = vld [vmem:[%s1309 + $0x1c] sm:$0xf]
        %v1318 = vld [vmem:[%s1309 + $0x20] sm:$0xf]
        %v1319 = vld [vmem:[%s1309 + $0x24] sm:$0xf]
        %v1320 = vld [vmem:[%s1309 + $0x28] sm:$0xf]
        %v1321 = vld [vmem:[%s1309 + $0x2c] sm:$0xf]
        %v1322 = vld [vmem:[%s1309 + $0x30] sm:$0xf]
        %v1323 = vld [vmem:[%s1309 + $0x34] sm:$0xf]
        %v1324 = vld [vmem:[%s1309 + $0x38] sm:$0xf]
        %v1325 = vld [vmem:[%s1309 + $0x3c] sm:$0xf]
        %v1326 = vld [vmem:[%s1309 + $0x40] sm:$0xf]
        %v1327 = vld [vmem:[%s1309 + $0x44] sm:$0xf]
        %v1328 = vld [vmem:[%s1309 + $0x48] sm:$0xf]
        %v1329 = vld [vmem:[%s1309 + $0x4c] sm:$0xf]
        %v1330 = vld [vmem:[%s1309 + $0x50] sm:$0xf]
        %v1331 = vld [vmem:[%s1309 + $0x54] sm:$0xf]
        %v1332 = vld [vmem:[%s1309 + $0x58] sm:$0xf]
        %v1333 = vld [vmem:[%s1309 + $0x5c] sm:$0xf]
        %v1334 = vld [vmem:[%s1309 + $0x60] sm:$0xf]
        %v1335 = vld [vmem:[%s1309 + $0x64] sm:$0xf]
        %v1336 = vld [vmem:[%s1309 + $0x68] sm:$0xf]
        %v1337 = vld [vmem:[%s1309 + $0x6c] sm:$0xf]
        %v1338 = vld [vmem:[%s1309 + $0x70] sm:$0xf]
        %v1339 = vld [vmem:[%s1309 + $0x74] sm:$0xf]
        %v1340 = vld [vmem:[%s1309 + $0x78] sm:$0xf]
        %v1341 = vld [vmem:[%s1309 + $0x7c] sm:$0xf]
        %v1342 = vld [vmem:[%s1309 + $0x80] sm:$0xf]
        %v1343 = vld [vmem:[%s1309 + $0x84] sm:$0xf]
        %v1344 = vld [vmem:[%s1309 + $0x88] sm:$0xf]
        %v1345 = vld [vmem:[%s1309 + $0x8c] sm:$0xf]
        %v1346 = vld [vmem:[%s1309 + $0x90] sm:$0xf]
        %v1347 = vld [vmem:[%s1309 + $0x94] sm:$0xf]
        %v1348 = vld [vmem:[%s1309 + $0x98] sm:$0xf]
        %v1349 = vld [vmem:[%s1309 + $0x9c] sm:$0xf]
        %v1350 = vld [vmem:[%s1309 + $0xa0] sm:$0xf]
        %v1351 = vld [vmem:[%s1309 + $0xa4] sm:$0xf]
        %v1352 = vld [vmem:[%s1309 + $0xa8] sm:$0xf]
        %v1353 = vld [vmem:[%s1309 + $0xac] sm:$0xf]
        %v1354 = vld [vmem:[%s1309 + $0xb0] sm:$0xf]
        %v1355 = vld [vmem:[%s1309 + $0xb4] sm:$0xf]
        %v1356 = vld [vmem:[%s1309 + $0xb8] sm:$0xf]
        %v1357 = vld [vmem:[%s1309 + $0xbc] sm:$0xf]
        %v1374 = vunpack.c.l.b16 %v1293
        %v1375 = vunpack.c.h.b16 %v1293
        %v1376 = vunpack.c.l.b16 %v1294
        %v1377 = vunpack.c.l.b16 %v1295
        %v1378 = vunpack.c.h.b16 %v1295
        %v1379 = vunpack.c.l.b16 %v1296
        %v1380 = vunpack.c.l.b16 %v1297
        %v1381 = vunpack.c.h.b16 %v1297
        %v1382 = vunpack.c.l.b16 %v1298
        %v1383 = vunpack.c.l.b16 %v1299
        %v1384 = vunpack.c.h.b16 %v1299
        %v1385 = vunpack.c.l.b16 %v1300
        %v1386 = vunpack.c.l.b16 %v1301
        %v1387 = vunpack.c.h.b16 %v1301
        %v1388 = vunpack.c.l.b16 %v1302
        %v1389 = vunpack.c.l.b16 %v1303
        %v1390 = vunpack.c.h.b16 %v1303
        %v1391 = vunpack.c.l.b16 %v1304
        %v1392 = vunpack.c.l.b16 %v1305
        %v1393 = vunpack.c.h.b16 %v1305
        %v1394 = vunpack.c.l.b16 %v1306
        %v1395 = vunpack.c.l.b16 %v1307
        %v1396 = vunpack.c.h.b16 %v1307
        %v1397 = vunpack.c.l.b16 %v1308
        %v1398 = vpack.c.b16 %v1377, %v1374
        %v1399 = vpack.c.b16 %v1378, %v1375
        %v1400 = vpack.c.b16 %v1379, %v1376
        %v1401 = vpack.c.b16 %v1383, %v1380
        %v1402 = vpack.c.b16 %v1384, %v1381
        %v1403 = vpack.c.b16 %v1385, %v1382
        %v1404 = vpack.c.b16 %v1389, %v1386
        %v1405 = vpack.c.b16 %v1390, %v1387
        %v1406 = vpack.c.b16 %v1391, %v1388
        %v1407 = vpack.c.b16 %v1395, %v1392
        %v1408 = vpack.c.b16 %v1396, %v1393
        %v1409 = vpack.c.b16 %v1397, %v1394
        %v1470 = vunpack.c.l.b16 %v1310
        %v1471 = vunpack.c.l.b16 %v1311
        %v1472 = vunpack.c.l.b16 %v1312
        %v1473 = vunpack.c.l.b16 %v1313
        %v1474 = vunpack.c.l.b16 %v1314
        %v1475 = vunpack.c.l.b16 %v1315
        %v1476 = vunpack.c.l.b16 %v1316
        %v1477 = vunpack.c.l.b16 %v1317
        %v1478 = vunpack.c.l.b16 %v1318
        %v1479 = vunpack.c.l.b16 %v1319
        %v1480 = vunpack.c.l.b16 %v1320
        %v1481 = vunpack.c.l.b16 %v1321
        %v1482 = vunpack.c.l.b16 %v1322
        %v1483 = vunpack.c.l.b16 %v1323
        %v1484 = vunpack.c.l.b16 %v1324
        %v1485 = vunpack.c.l.b16 %v1325
        %v1486 = vunpack.c.l.b16 %v1326
        %v1487 = vunpack.c.l.b16 %v1327
        %v1488 = vunpack.c.l.b16 %v1328
        %v1489 = vunpack.c.l.b16 %v1329
        %v1490 = vunpack.c.l.b16 %v1330
        %v1491 = vunpack.c.l.b16 %v1331
        %v1492 = vunpack.c.l.b16 %v1332
        %v1493 = vunpack.c.l.b16 %v1333
        %v1494 = vunpack.c.l.b16 %v1334
        %v1495 = vunpack.c.l.b16 %v1335
        %v1496 = vunpack.c.l.b16 %v1336
        %v1497 = vunpack.c.l.b16 %v1337
        %v1498 = vunpack.c.l.b16 %v1338
        %v1499 = vunpack.c.l.b16 %v1339
        %v1500 = vunpack.c.l.b16 %v1340
        %v1501 = vunpack.c.l.b16 %v1341
        %v1502 = vunpack.c.l.b16 %v1342
        %v1503 = vunpack.c.l.b16 %v1343
        %v1504 = vunpack.c.l.b16 %v1344
        %v1505 = vunpack.c.l.b16 %v1345
        %v1506 = vunpack.c.l.b16 %v1346
        %v1507 = vunpack.c.l.b16 %v1347
        %v1508 = vunpack.c.l.b16 %v1348
        %v1509 = vunpack.c.l.b16 %v1349
        %v1510 = vunpack.c.l.b16 %v1350
        %v1511 = vunpack.c.l.b16 %v1351
        %v1512 = vunpack.c.l.b16 %v1352
        %v1513 = vunpack.c.l.b16 %v1353
        %v1514 = vunpack.c.l.b16 %v1354
        %v1515 = vunpack.c.l.b16 %v1355
        %v1516 = vunpack.c.l.b16 %v1356
        %v1517 = vunpack.c.l.b16 %v1357
        %v1518 = vpack.c.b16 %v1471, %v1470
        %v1519 = vpack.c.b16 %v1473, %v1472
        %v1520 = vpack.c.b16 %v1475, %v1474
        %v1521 = vpack.c.b16 %v1477, %v1476
        %v1522 = vpack.c.b16 %v1479, %v1478
        %v1523 = vpack.c.b16 %v1481, %v1480
        %v1524 = vpack.c.b16 %v1483, %v1482
        %v1525 = vpack.c.b16 %v1485, %v1484
        %v1526 = vpack.c.b16 %v1487, %v1486
        %v1527 = vpack.c.b16 %v1489, %v1488
        %v1528 = vpack.c.b16 %v1491, %v1490
        %v1529 = vpack.c.b16 %v1493, %v1492
        %v1530 = vpack.c.b16 %v1495, %v1494
        %v1531 = vpack.c.b16 %v1497, %v1496
        %v1532 = vpack.c.b16 %v1499, %v1498
        %v1533 = vpack.c.b16 %v1501, %v1500
        %v1534 = vpack.c.b16 %v1503, %v1502
        %v1535 = vpack.c.b16 %v1505, %v1504
        %v1536 = vpack.c.b16 %v1507, %v1506
        %v1537 = vpack.c.b16 %v1509, %v1508
        %v1538 = vpack.c.b16 %v1511, %v1510
        %v1539 = vpack.c.b16 %v1513, %v1512
        %v1540 = vpack.c.b16 %v1515, %v1514
        %v1541 = vpack.c.b16 %v1517, %v1516
        %1566 = vmatprep.subr.bf16.mxu0 0
        %1567 = vmatpush1.bf16.msra.mxu0 %v1518
        %1568 = vmatprep.subr.bf16.mxu0 0
        %1569 = vmatpush1.bf16.msra.mxu0 %v1519
        %1570 = vmatprep.subr.bf16.mxu0 0
        %1571 = vmatpush1.bf16.msra.mxu0 %v1520
        %1572 = vmatprep.subr.bf16.mxu0 0
        %1573 = vmatpush1.bf16.msra.mxu0 %v1521
        %1574 = vmatprep.subr.bf16.mxu0 0
        %1575 = vmatpush1.bf16.msra.mxu0 %v1522
        %1576 = vmatprep.subr.bf16.mxu0 0
        %1577 = vmatpush1.bf16.msra.mxu0 %v1523
        %1578 = vmatprep.subr.bf16.mxu0 0
        %1579 = vmatpush1.bf16.msra.mxu0 %v1524
        %1580 = vmatprep.subr.bf16.mxu0 0
        %1581 = vmatpush1.bf16.msra.mxu0 %v1525
        %1582 = vmatprep.subr.bf16.mxu0 0
        %1583 = vmatpush1.bf16.msra.mxu0 %v1526
        %1584 = vmatprep.subr.bf16.mxu0 0
        %1585 = vmatpush1.bf16.msra.mxu0 %v1527
        %1586 = vmatprep.subr.bf16.mxu0 0
        %1587 = vmatpush1.bf16.msra.mxu0 %v1528
        %1588 = vmatprep.subr.bf16.mxu0 0
        %1589 = vmatpush1.bf16.msra.mxu0 %v1529
        %1590 = vmatprep.subr.bf16.mxu0 0
        %1591 = vmatpush1.bf16.msra.mxu0 %v1530
        %1592 = vmatprep.subr.bf16.mxu0 0
        %1593 = vmatpush1.bf16.msra.mxu0 %v1531
        %1594 = vmatprep.subr.bf16.mxu0 0
        %1595 = vmatpush1.bf16.msra.mxu0 %v1532
        %1596 = vmatprep.subr.bf16.mxu0 0
        %1597 = vmatpush1.bf16.msra.mxu0 %v1533
        %1598 = vmatprep.mubr.bf16.mxu0 %v1399
        %1599 = vmatmul.mubr.bf16.gmra.mrb[0].mxu0 %v1398
        %v1600 = vpop.f32.mrb[0].mxu0
        %v1601 = vadd.f32 0.0, %v1600
        %v1602 = vpop.f32.mrb[0].mxu0
        %v1603 = vpop.f32.mrb[0].mxu0
        %v1604 = vadd.f32 0.0, %v1603
        %v1605 = vpop.f32.mrb[0].mxu0
        %1606 = vmatprep.mubr.bf16.mxu0 %v1402
        %1607 = vmatmul.mubr.bf16.gmra.mrb[0].mxu0 %v1401
        %v1608 = vpop.f32.mrb[0].mxu0
        %v1609 = vadd.f32 0.0, %v1608
        %v1610 = vpop.f32.mrb[0].mxu0
        %v1611 = vpop.f32.mrb[0].mxu0
        %v1612 = vadd.f32 0.0, %v1611
        %v1613 = vpop.f32.mrb[0].mxu0
        %1614 = vmatprep.mubr.bf16.mxu0 %v1405
        %1615 = vmatmul.mubr.bf16.gmra.mrb[0].mxu0 %v1404
        %v1616 = vpop.f32.mrb[0].mxu0
        %v1617 = vadd.f32 0.0, %v1616
        %v1618 = vpop.f32.mrb[0].mxu0
        %v1619 = vpop.f32.mrb[0].mxu0
        %v1620 = vadd.f32 0.0, %v1619
        %v1621 = vpop.f32.mrb[0].mxu0
        %1622 = vmatprep.mubr.bf16.mxu0 %v1408
        %1623 = vmatmul.mubr.bf16.gmra.mrb[0].mxu0 %v1407
        %v1624 = vpop.f32.mrb[0].mxu0
        %v1625 = vadd.f32 0.0, %v1624
        %v1626 = vpop.f32.mrb[0].mxu0
        %v1627 = vpop.f32.mrb[0].mxu0
        %v1628 = vadd.f32 0.0, %v1627
        %v1629 = vpop.f32.mrb[0].mxu0
        %1630 = vdwg.mxu0
        %1631 = vmatprep.subr.bf16.mxu0 0
        %1632 = vmatpush1.bf16.msra.mxu0 %v1534
        %1633 = vmatprep.subr.bf16.mxu0 0
        %1634 = vmatpush1.bf16.msra.mxu0 %v1535
        %1635 = vmatprep.subr.bf16.mxu0 0
        %1636 = vmatpush1.bf16.msra.mxu0 %v1536
        %1637 = vmatprep.subr.bf16.mxu0 0
        %1638 = vmatpush1.bf16.msra.mxu0 %v1537
        %1639 = vmatprep.subr.bf16.mxu0 0
        %1640 = vmatpush1.bf16.msra.mxu0 %v1538
        %1641 = vmatprep.subr.bf16.mxu0 0
        %1642 = vmatpush1.bf16.msra.mxu0 %v1539
        %1643 = vmatprep.subr.bf16.mxu0 0
        %1644 = vmatpush1.bf16.msra.mxu0 %v1540
        %1645 = vmatprep.subr.bf16.mxu0 0
        %1646 = vmatpush1.bf16.msra.mxu0 %v1541
        %1647 = vmatprep.subr.bf16.mxu0 0
        %1648 = vmatpush1.bf16.msra.mxu0 0
        %1649 = vmatprep.subr.bf16.mxu0 0
        %1650 = vmatpush1.bf16.msra.mxu0 0
        %1651 = vmatprep.subr.bf16.mxu0 0
        %1652 = vmatpush1.bf16.msra.mxu0 0
        %1653 = vmatprep.subr.bf16.mxu0 0
        %1654 = vmatpush1.bf16.msra.mxu0 0
        %1655 = vmatprep.subr.bf16.mxu0 0
        %1656 = vmatpush1.bf16.msra.mxu0 0
        %1657 = vmatprep.subr.bf16.mxu0 0
        %1658 = vmatpush1.bf16.msra.mxu0 0
        %1659 = vmatprep.subr.bf16.mxu0 0
        %1660 = vmatpush1.bf16.msra.mxu0 0
        %1661 = vmatprep.subr.bf16.mxu0 0
        %1662 = vmatpush1.bf16.msra.mxu0 0
        %1663 = vmatprep.mubr.bf16.mxu0 0
        %1664 = vmatmul.mubr.bf16.gmra.mrb[0].mxu0 %v1400
        %v1665 = vpop.f32.mrb[0].mxu0
        %v1666 = vadd.f32 %v1601, %v1665
        %v1667 = vpop.f32.mrb[0].mxu0
        %v1668 = vpop.f32.mrb[0].mxu0
        %v1669 = vadd.f32 %v1604, %v1668
        %v1670 = vpop.f32.mrb[0].mxu0
        %1671 = vmatprep.mubr.bf16.mxu0 0
        %1672 = vmatmul.mubr.bf16.gmra.mrb[0].mxu0 %v1403
        %v1673 = vpop.f32.mrb[0].mxu0
        %v1674 = vadd.f32 %v1609, %v1673
        %v1675 = vpop.f32.mrb[0].mxu0
        %v1676 = vpop.f32.mrb[0].mxu0
        %v1677 = vadd.f32 %v1612, %v1676
        %v1678 = vpop.f32.mrb[0].mxu0
        %1679 = vmatprep.mubr.bf16.mxu0 0
        %1680 = vmatmul.mubr.bf16.gmra.mrb[0].mxu0 %v1406
        %v1681 = vpop.f32.mrb[0].mxu0
        %v1682 = vadd.f32 %v1617, %v1681
        %v1683 = vpop.f32.mrb[0].mxu0
        %v1684 = vpop.f32.mrb[0].mxu0
        %v1685 = vadd.f32 %v1620, %v1684
        %v1686 = vpop.f32.mrb[0].mxu0
        %1687 = vmatprep.mubr.bf16.mxu0 0
        %1688 = vmatmul.mubr.bf16.gmra.mrb[0].mxu0 %v1409
        %v1689 = vpop.f32.mrb[0].mxu0
        %v1690 = vadd.f32 %v1625, %v1689
        %v1691 = vpop.f32.mrb[0].mxu0
        %v1692 = vpop.f32.mrb[0].mxu0
        %v1693 = vadd.f32 %v1628, %v1692
        %v1694 = vpop.f32.mrb[0].mxu0
        %1695 = vdwg.mxu0
        %v1696 = vadd.f32 %v1285, %v1666
        %v1697 = vadd.f32 %v1286, %v1669
        %v1698 = vadd.f32 %v1287, %v1674
        %v1699 = vadd.f32 %v1288, %v1677
        %v1700 = vadd.f32 %v1289, %v1682
        %v1701 = vadd.f32 %v1290, %v1685
        %v1702 = vadd.f32 %v1291, %v1690
        %v1703 = vadd.f32 %v1292, %v1693
        %s1704 = scalar_lea.vmem [#allocation2], 24
        %v1705 = vld [vmem:[%s1704] sm:$0xff]
        %v1706 = vld [vmem:[%s1704 + $0x8] sm:$0xf]
        %v1707 = vld [vmem:[%s1704 + $0xc] sm:$0xff]
        %v1708 = vld [vmem:[%s1704 + $0x14] sm:$0xf]
        %v1709 = vld [vmem:[%s1704 + $0x18] sm:$0xff]
        %v1710 = vld [vmem:[%s1704 + $0x20] sm:$0xf]
        %v1711 = vld [vmem:[%s1704 + $0x24] sm:$0xff]
        %v1712 = vld [vmem:[%s1704 + $0x2c] sm:$0xf]
        %v1713 = vld [vmem:[%s1704 + $0x30] sm:$0xff]
        %v1714 = vld [vmem:[%s1704 + $0x38] sm:$0xf]
        %v1715 = vld [vmem:[%s1704 + $0x3c] sm:$0xff]
        %v1716 = vld [vmem:[%s1704 + $0x44] sm:$0xf]
        %v1717 = vld [vmem:[%s1704 + $0x48] sm:$0xff]
        %v1718 = vld [vmem:[%s1704 + $0x50] sm:$0xf]
        %v1719 = vld [vmem:[%s1704 + $0x54] sm:$0xff]
        %v1720 = vld [vmem:[%s1704 + $0x5c] sm:$0xf]
        %s1721 = scalar_lea.vmem %s4, 384
        %v1722 = vld [vmem:[%s1721] sm:$0xf]
        %v1723 = vld [vmem:[%s1721 + $0x4] sm:$0xf]
        %v1724 = vld [vmem:[%s1721 + $0x8] sm:$0xf]
        %v1725 = vld [vmem:[%s1721 + $0xc] sm:$0xf]
        %v1726 = vld [vmem:[%s1721 + $0x10] sm:$0xf]
        %v1727 = vld [vmem:[%s1721 + $0x14] sm:$0xf]
        %v1728 = vld [vmem:[%s1721 + $0x18] sm:$0xf]
        %v1729 = vld [vmem:[%s1721 + $0x1c] sm:$0xf]
        %v1730 = vld [vmem:[%s1721 + $0x20] sm:$0xf]
        %v1731 = vld [vmem:[%s1721 + $0x24] sm:$0xf]
        %v1732 = vld [vmem:[%s1721 + $0x28] sm:$0xf]
        %v1733 = vld [vmem:[%s1721 + $0x2c] sm:$0xf]
        %v1734 = vld [vmem:[%s1721 + $0x30] sm:$0xf]
        %v1735 = vld [vmem:[%s1721 + $0x34] sm:$0xf]
        %v1736 = vld [vmem:[%s1721 + $0x38] sm:$0xf]
        %v1737 = vld [vmem:[%s1721 + $0x3c] sm:$0xf]
        %v1738 = vld [vmem:[%s1721 + $0x40] sm:$0xf]
        %v1739 = vld [vmem:[%s1721 + $0x44] sm:$0xf]
        %v1740 = vld [vmem:[%s1721 + $0x48] sm:$0xf]
        %v1741 = vld [vmem:[%s1721 + $0x4c] sm:$0xf]
        %v1742 = vld [vmem:[%s1721 + $0x50] sm:$0xf]
        %v1743 = vld [vmem:[%s1721 + $0x54] sm:$0xf]
        %v1744 = vld [vmem:[%s1721 + $0x58] sm:$0xf]
        %v1745 = vld [vmem:[%s1721 + $0x5c] sm:$0xf]
        %v1746 = vld [vmem:[%s1721 + $0x60] sm:$0xf]
        %v1747 = vld [vmem:[%s1721 + $0x64] sm:$0xf]
        %v1748 = vld [vmem:[%s1721 + $0x68] sm:$0xf]
        %v1749 = vld [vmem:[%s1721 + $0x6c] sm:$0xf]
        %v1750 = vld [vmem:[%s1721 + $0x70] sm:$0xf]
        %v1751 = vld [vmem:[%s1721 + $0x74] sm:$0xf]
        %v1752 = vld [vmem:[%s1721 + $0x78] sm:$0xf]
        %v1753 = vld [vmem:[%s1721 + $0x7c] sm:$0xf]
        %v1754 = vld [vmem:[%s1721 + $0x80] sm:$0xf]
        %v1755 = vld [vmem:[%s1721 + $0x84] sm:$0xf]
        %v1756 = vld [vmem:[%s1721 + $0x88] sm:$0xf]
        %v1757 = vld [vmem:[%s1721 + $0x8c] sm:$0xf]
        %v1758 = vld [vmem:[%s1721 + $0x90] sm:$0xf]
        %v1759 = vld [vmem:[%s1721 + $0x94] sm:$0xf]
        %v1760 = vld [vmem:[%s1721 + $0x98] sm:$0xf]
        %v1761 = vld [vmem:[%s1721 + $0x9c] sm:$0xf]
        %v1762 = vld [vmem:[%s1721 + $0xa0] sm:$0xf]
        %v1763 = vld [vmem:[%s1721 + $0xa4] sm:$0xf]
        %v1764 = vld [vmem:[%s1721 + $0xa8] sm:$0xf]
        %v1765 = vld [vmem:[%s1721 + $0xac] sm:$0xf]
        %v1766 = vld [vmem:[%s1721 + $0xb0] sm:$0xf]
        %v1767 = vld [vmem:[%s1721 + $0xb4] sm:$0xf]
        %v1768 = vld [vmem:[%s1721 + $0xb8] sm:$0xf]
        %v1769 = vld [vmem:[%s1721 + $0xbc] sm:$0xf]
        %v1786 = vunpack.c.l.b16 %v1705
        %v1787 = vunpack.c.h.b16 %v1705
        %v1788 = vunpack.c.l.b16 %v1706
        %v1789 = vunpack.c.l.b16 %v1707
        %v1790 = vunpack.c.h.b16 %v1707
        %v1791 = vunpack.c.l.b16 %v1708
        %v1792 = vunpack.c.l.b16 %v1709
        %v1793 = vunpack.c.h.b16 %v1709
        %v1794 = vunpack.c.l.b16 %v1710
        %v1795 = vunpack.c.l.b16 %v1711
        %v1796 = vunpack.c.h.b16 %v1711
        %v1797 = vunpack.c.l.b16 %v1712
        %v1798 = vunpack.c.l.b16 %v1713
        %v1799 = vunpack.c.h.b16 %v1713
        %v1800 = vunpack.c.l.b16 %v1714
        %v1801 = vunpack.c.l.b16 %v1715
        %v1802 = vunpack.c.h.b16 %v1715
        %v1803 = vunpack.c.l.b16 %v1716
        %v1804 = vunpack.c.l.b16 %v1717
        %v1805 = vunpack.c.h.b16 %v1717
        %v1806 = vunpack.c.l.b16 %v1718
        %v1807 = vunpack.c.l.b16 %v1719
        %v1808 = vunpack.c.h.b16 %v1719
        %v1809 = vunpack.c.l.b16 %v1720
        %v1810 = vpack.c.b16 %v1789, %v1786
        %v1811 = vpack.c.b16 %v1790, %v1787
        %v1812 = vpack.c.b16 %v1791, %v1788
        %v1813 = vpack.c.b16 %v1795, %v1792
        %v1814 = vpack.c.b16 %v1796, %v1793
        %v1815 = vpack.c.b16 %v1797, %v1794
        %v1816 = vpack.c.b16 %v1801, %v1798
        %v1817 = vpack.c.b16 %v1802, %v1799
        %v1818 = vpack.c.b16 %v1803, %v1800
        %v1819 = vpack.c.b16 %v1807, %v1804
        %v1820 = vpack.c.b16 %v1808, %v1805
        %v1821 = vpack.c.b16 %v1809, %v1806
        %v1882 = vunpack.c.l.b16 %v1722
        %v1883 = vunpack.c.l.b16 %v1723
        %v1884 = vunpack.c.l.b16 %v1724
        %v1885 = vunpack.c.l.b16 %v1725
        %v1886 = vunpack.c.l.b16 %v1726
        %v1887 = vunpack.c.l.b16 %v1727
        %v1888 = vunpack.c.l.b16 %v1728
        %v1889 = vunpack.c.l.b16 %v1729
        %v1890 = vunpack.c.l.b16 %v1730
        %v1891 = vunpack.c.l.b16 %v1731
        %v1892 = vunpack.c.l.b16 %v1732
        %v1893 = vunpack.c.l.b16 %v1733
        %v1894 = vunpack.c.l.b16 %v1734
        %v1895 = vunpack.c.l.b16 %v1735
        %v1896 = vunpack.c.l.b16 %v1736
        %v1897 = vunpack.c.l.b16 %v1737
        %v1898 = vunpack.c.l.b16 %v1738
        %v1899 = vunpack.c.l.b16 %v1739
        %v1900 = vunpack.c.l.b16 %v1740
        %v1901 = vunpack.c.l.b16 %v1741
        %v1902 = vunpack.c.l.b16 %v1742
        %v1903 = vunpack.c.l.b16 %v1743
        %v1904 = vunpack.c.l.b16 %v1744
        %v1905 = vunpack.c.l.b16 %v1745
        %v1906 = vunpack.c.l.b16 %v1746
        %v1907 = vunpack.c.l.b16 %v1747
        %v1908 = vunpack.c.l.b16 %v1748
        %v1909 = vunpack.c.l.b16 %v1749
        %v1910 = vunpack.c.l.b16 %v1750
        %v1911 = vunpack.c.l.b16 %v1751
        %v1912 = vunpack.c.l.b16 %v1752
        %v1913 = vunpack.c.l.b16 %v1753
        %v1914 = vunpack.c.l.b16 %v1754
        %v1915 = vunpack.c.l.b16 %v1755
        %v1916 = vunpack.c.l.b16 %v1756
        %v1917 = vunpack.c.l.b16 %v1757
        %v1918 = vunpack.c.l.b16 %v1758
        %v1919 = vunpack.c.l.b16 %v1759
        %v1920 = vunpack.c.l.b16 %v1760
        %v1921 = vunpack.c.l.b16 %v1761
        %v1922 = vunpack.c.l.b16 %v1762
        %v1923 = vunpack.c.l.b16 %v1763
        %v1924 = vunpack.c.l.b16 %v1764
        %v1925 = vunpack.c.l.b16 %v1765
        %v1926 = vunpack.c.l.b16 %v1766
        %v1927 = vunpack.c.l.b16 %v1767
        %v1928 = vunpack.c.l.b16 %v1768
        %v1929 = vunpack.c.l.b16 %v1769
        %v1930 = vpack.c.b16 %v1883, %v1882
        %v1931 = vpack.c.b16 %v1885, %v1884
        %v1932 = vpack.c.b16 %v1887, %v1886
        %v1933 = vpack.c.b16 %v1889, %v1888
        %v1934 = vpack.c.b16 %v1891, %v1890
        %v1935 = vpack.c.b16 %v1893, %v1892
        %v1936 = vpack.c.b16 %v1895, %v1894
        %v1937 = vpack.c.b16 %v1897, %v1896
        %v1938 = vpack.c.b16 %v1899, %v1898
        %v1939 = vpack.c.b16 %v1901, %v1900
        %v1940 = vpack.c.b16 %v1903, %v1902
        %v1941 = vpack.c.b16 %v1905, %v1904
        %v1942 = vpack.c.b16 %v1907, %v1906
        %v1943 = vpack.c.b16 %v1909, %v1908
        %v1944 = vpack.c.b16 %v1911, %v1910
        %v1945 = vpack.c.b16 %v1913, %v1912
        %v1946 = vpack.c.b16 %v1915, %v1914
        %v1947 = vpack.c.b16 %v1917, %v1916
        %v1948 = vpack.c.b16 %v1919, %v1918
        %v1949 = vpack.c.b16 %v1921, %v1920
        %v1950 = vpack.c.b16 %v1923, %v1922
        %v1951 = vpack.c.b16 %v1925, %v1924
        %v1952 = vpack.c.b16 %v1927, %v1926
        %v1953 = vpack.c.b16 %v1929, %v1928
        %1978 = vmatprep.subr.bf16.mxu0 0
        %1979 = vmatpush1.bf16.msra.mxu0 %v1930
        %1980 = vmatprep.subr.bf16.mxu0 0
        %1981 = vmatpush1.bf16.msra.mxu0 %v1931
        %1982 = vmatprep.subr.bf16.mxu0 0
        %1983 = vmatpush1.bf16.msra.mxu0 %v1932
        %1984 = vmatprep.subr.bf16.mxu0 0
        %1985 = vmatpush1.bf16.msra.mxu0 %v1933
        %1986 = vmatprep.subr.bf16.mxu0 0
        %1987 = vmatpush1.bf16.msra.mxu0 %v1934
        %1988 = vmatprep.subr.bf16.mxu0 0
        %1989 = vmatpush1.bf16.msra.mxu0 %v1935
        %1990 = vmatprep.subr.bf16.mxu0 0
        %1991 = vmatpush1.bf16.msra.mxu0 %v1936
        %1992 = vmatprep.subr.bf16.mxu0 0
        %1993 = vmatpush1.bf16.msra.mxu0 %v1937
        %1994 = vmatprep.subr.bf16.mxu0 0
        %1995 = vmatpush1.bf16.msra.mxu0 %v1938
        %1996 = vmatprep.subr.bf16.mxu0 0
        %1997 = vmatpush1.bf16.msra.mxu0 %v1939
        %1998 = vmatprep.subr.bf16.mxu0 0
        %1999 = vmatpush1.bf16.msra.mxu0 %v1940
        %2000 = vmatprep.subr.bf16.mxu0 0
        %2001 = vmatpush1.bf16.msra.mxu0 %v1941
        %2002 = vmatprep.subr.bf16.mxu0 0
        %2003 = vmatpush1.bf16.msra.mxu0 %v1942
        %2004 = vmatprep.subr.bf16.mxu0 0
        %2005 = vmatpush1.bf16.msra.mxu0 %v1943
        %2006 = vmatprep.subr.bf16.mxu0 0
        %2007 = vmatpush1.bf16.msra.mxu0 %v1944
        %2008 = vmatprep.subr.bf16.mxu0 0
        %2009 = vmatpush1.bf16.msra.mxu0 %v1945
        %2010 = vmatprep.mubr.bf16.mxu0 %v1811
        %2011 = vmatmul.mubr.bf16.gmra.mrb[0].mxu0 %v1810
        %v2012 = vpop.f32.mrb[0].mxu0
        %v2013 = vadd.f32 0.0, %v2012
        %v2014 = vpop.f32.mrb[0].mxu0
        %v2015 = vpop.f32.mrb[0].mxu0
        %v2016 = vadd.f32 0.0, %v2015
        %v2017 = vpop.f32.mrb[0].mxu0
        %2018 = vmatprep.mubr.bf16.mxu0 %v1814
        %2019 = vmatmul.mubr.bf16.gmra.mrb[0].mxu0 %v1813
        %v2020 = vpop.f32.mrb[0].mxu0
        %v2021 = vadd.f32 0.0, %v2020
        %v2022 = vpop.f32.mrb[0].mxu0
        %v2023 = vpop.f32.mrb[0].mxu0
        %v2024 = vadd.f32 0.0, %v2023
        %v2025 = vpop.f32.mrb[0].mxu0
        %2026 = vmatprep.mubr.bf16.mxu0 %v1817
        %2027 = vmatmul.mubr.bf16.gmra.mrb[0].mxu0 %v1816
        %v2028 = vpop.f32.mrb[0].mxu0
        %v2029 = vadd.f32 0.0, %v2028
        %v2030 = vpop.f32.mrb[0].mxu0
        %v2031 = vpop.f32.mrb[0].mxu0
        %v2032 = vadd.f32 0.0, %v2031
        %v2033 = vpop.f32.mrb[0].mxu0
        %2034 = vmatprep.mubr.bf16.mxu0 %v1820
        %2035 = vmatmul.mubr.bf16.gmra.mrb[0].mxu0 %v1819
        %v2036 = vpop.f32.mrb[0].mxu0
        %v2037 = vadd.f32 0.0, %v2036
        %v2038 = vpop.f32.mrb[0].mxu0
        %v2039 = vpop.f32.mrb[0].mxu0
        %v2040 = vadd.f32 0.0, %v2039
        %v2041 = vpop.f32.mrb[0].mxu0
        %2042 = vdwg.mxu0
        %2043 = vmatprep.subr.bf16.mxu0 0
        %2044 = vmatpush1.bf16.msra.mxu0 %v1946
        %2045 = vmatprep.subr.bf16.mxu0 0
        %2046 = vmatpush1.bf16.msra.mxu0 %v1947
        %2047 = vmatprep.subr.bf16.mxu0 0
        %2048 = vmatpush1.bf16.msra.mxu0 %v1948
        %2049 = vmatprep.subr.bf16.mxu0 0
        %2050 = vmatpush1.bf16.msra.mxu0 %v1949
        %2051 = vmatprep.subr.bf16.mxu0 0
        %2052 = vmatpush1.bf16.msra.mxu0 %v1950
        %2053 = vmatprep.subr.bf16.mxu0 0
        %2054 = vmatpush1.bf16.msra.mxu0 %v1951
        %2055 = vmatprep.subr.bf16.mxu0 0
        %2056 = vmatpush1.bf16.msra.mxu0 %v1952
        %2057 = vmatprep.subr.bf16.mxu0 0
        %2058 = vmatpush1.bf16.msra.mxu0 %v1953
        %2059 = vmatprep.subr.bf16.mxu0 0
        %2060 = vmatpush1.bf16.msra.mxu0 0
        %2061 = vmatprep.subr.bf16.mxu0 0
        %2062 = vmatpush1.bf16.msra.mxu0 0
        %2063 = vmatprep.subr.bf16.mxu0 0
        %2064 = vmatpush1.bf16.msra.mxu0 0
        %2065 = vmatprep.subr.bf16.mxu0 0
        %2066 = vmatpush1.bf16.msra.mxu0 0
        %2067 = vmatprep.subr.bf16.mxu0 0
        %2068 = vmatpush1.bf16.msra.mxu0 0
        %2069 = vmatprep.subr.bf16.mxu0 0
        %2070 = vmatpush1.bf16.msra.mxu0 0
        %2071 = vmatprep.subr.bf16.mxu0 0
        %2072 = vmatpush1.bf16.msra.mxu0 0
        %2073 = vmatprep.subr.bf16.mxu0 0
        %2074 = vmatpush1.bf16.msra.mxu0 0
        %2075 = vmatprep.mubr.bf16.mxu0 0
        %2076 = vmatmul.mubr.bf16.gmra.mrb[0].mxu0 %v1812
        %v2077 = vpop.f32.mrb[0].mxu0
        %v2078 = vadd.f32 %v2013, %v2077
        %v2079 = vpop.f32.mrb[0].mxu0
        %v2080 = vpop.f32.mrb[0].mxu0
        %v2081 = vadd.f32 %v2016, %v2080
        %v2082 = vpop.f32.mrb[0].mxu0
        %2083 = vmatprep.mubr.bf16.mxu0 0
        %2084 = vmatmul.mubr.bf16.gmra.mrb[0].mxu0 %v1815
        %v2085 = vpop.f32.mrb[0].mxu0
        %v2086 = vadd.f32 %v2021, %v2085
        %v2087 = vpop.f32.mrb[0].mxu0
        %v2088 = vpop.f32.mrb[0].mxu0
        %v2089 = vadd.f32 %v2024, %v2088
        %v2090 = vpop.f32.mrb[0].mxu0
        %2091 = vmatprep.mubr.bf16.mxu0 0
        %2092 = vmatmul.mubr.bf16.gmra.mrb[0].mxu0 %v1818
        %v2093 = vpop.f32.mrb[0].mxu0
        %v2094 = vadd.f32 %v2029, %v2093
        %v2095 = vpop.f32.mrb[0].mxu0
        %v2096 = vpop.f32.mrb[0].mxu0
        %v2097 = vadd.f32 %v2032, %v2096
        %v2098 = vpop.f32.mrb[0].mxu0
        %2099 = vmatprep.mubr.bf16.mxu0 0
        %2100 = vmatmul.mubr.bf16.gmra.mrb[0].mxu0 %v1821
        %v2101 = vpop.f32.mrb[0].mxu0
        %v2102 = vadd.f32 %v2037, %v2101
        %v2103 = vpop.f32.mrb[0].mxu0
        %v2104 = vpop.f32.mrb[0].mxu0
        %v2105 = vadd.f32 %v2040, %v2104
        %v2106 = vpop.f32.mrb[0].mxu0
        %2107 = vdwg.mxu0
        %v2108 = vadd.f32 %v1696, %v2078
        %v2109 = vadd.f32 %v1697, %v2081
        %v2110 = vadd.f32 %v1698, %v2086
        %v2111 = vadd.f32 %v1699, %v2089
        %v2112 = vadd.f32 %v1700, %v2094
        %v2113 = vadd.f32 %v1701, %v2097
        %v2114 = vadd.f32 %v1702, %v2102
        %v2115 = vadd.f32 %v1703, %v2105
        %2116 = vst [vmem:[%s286] sm:$0xff] %v2108
        %2117 = vst [vmem:[%s286 + $0x8] sm:$0xff] %v2109
        %2118 = vst [vmem:[%s286 + $0x10] sm:$0xff] %v2110
        %2119 = vst [vmem:[%s286 + $0x18] sm:$0xff] %v2111
        %2120 = vst [vmem:[%s286 + $0x20] sm:$0xff] %v2112
        %2121 = vst [vmem:[%s286 + $0x28] sm:$0xff] %v2113
        %2122 = vst [vmem:[%s286 + $0x30] sm:$0xff] %v2114
        %2123 = vst [vmem:[%s286 + $0x38] sm:$0xff] %v2115
        %s2124 = sand.u32 %s186, 1
        %s2125 = scalar_lea.sflag [#allocation4], %s2124
        %s2126 = sand.u32 %s186, 1
        %s2127 = smul.addr %s2126, 64
        %s2128 = scalar_lea.vmem [#allocation3], %s2127
        // Predicated region
        $region49: #{downsample_forward.5} parent=47 // pred_check
          %p2129 = pneg %p196
        $region50: #{downsample_forward.5} parent=47 // pred_check_branch
          %2131 = sbr.rel (%p2129) target = $region52
        $region51: #{downsample_forward.5} parent=47 // pred_region
          %s2133 = ssub.s32 1024, 1024
          %2134 = vsyncadd %s2125, %s2133
          %s2135 = smul.addr %s21, 8
          %s2136 = smul.addr %s2135, 128
          %s2137 = scalar_lea.hbm %s7, %s2136
          %s2138 = sshll.u32 %s2128, 4
          %s2139 = int_to_ptr.vmem [resolvable:$true] %s2138
          %2144 = dma.vmem_to_hbm [thread:$0]  %s2139, 1024, %s2137, %s2125, 128, 128, 8
        $region52: #{downsample_forward.5} parent=47 // pred_fallthru
          _
      $region48: #{downsample_forward.5} parent=5 // pred_fallthru
        _
      %p2145 = scmp.le.s32.totalorder 2, %s16
      // Predicated region
      $region53: #{downsample_forward.5} parent=5 // pred_check
        %p2146 = pneg %p2145
      $region54: #{downsample_forward.5} parent=5 // pred_check_branch
        %2148 = sbr.rel (%p2146) target = $region56
      $region55: #{downsample_forward.5} parent=5 // pred_region
        %s2149 = ssub.s32 %s16, 2
        // Predicated region
        $region57: #{downsample_forward.5} parent=55 // pred_check
          %p2150 = pneg %p202
        $region58: #{downsample_forward.5} parent=55 // pred_check_branch
          %2152 = sbr.rel (%p2150) target = $region60
        $region59: #{downsample_forward.5} parent=55 // pred_region
          %s2153 = sand.u32 %s187, 1
          %s2154 = scalar_lea.sflag [#allocation4], %s2153
          %s2155 = sand.u32 %s187, 1
          %s2156 = smul.addr %s2155, 64
          %s2157 = scalar_lea.vmem [#allocation3], %s2156
          %2158 = dma.done %s2154, 1024
        $region60: #{downsample_forward.5} parent=55 // pred_fallthru
          _
      $region56: #{downsample_forward.5} parent=5 // pred_fallthru
        _
    $region6: #{downsample_forward.5} parent=1 // loop_footer
      %s20 = sadd.s32 1, %s16
    $region7: #{downsample_forward.5} parent=1 // loop_footer_branch
      %15 = sbr.rel target = $region3
    $region8: #{downsample_forward.5} parent=1 // loop_exit
      _
    %2159 = vsyncpa [#allocation4], 1
    %s2160 = scalar_lea.sflag [#allocation4], 1
    %2161 = vsyncpa %s2160, 1

</llo_original>
